<compile_context>
chip_gen: v7x
topology: tpu7x:2x2x1
jax: 0.10.0
libtpu: 0.0.40
codegen_flags: <defaults>
</compile_context>

<pallas_src>
import functools
import math

import jax
import jax.numpy as jnp
from jax import lax
from jax.experimental import pallas as pl
from jax.experimental.pallas import tpu as pltpu

# ----------------------- module hyper-parameters (small, synthetic) -----------------------
DIM = 32            # model dim
DIM_HEAD = 16
HEADS = 2
INNER = DIM_HEAD * HEADS          # 32
NUM_LATENTS = 8
NUM_AUG_SOURCES = 4
DEPTH = 2
FF_MULT = 4
FF_INNER = DIM * FF_MULT          # 128
SCALE = DIM_HEAD ** (-0.5)
LN_EPS = 1e-5

# example input sizes
B, M, N = 2, 2, 8


# ----------------------------------- shared math helpers ----------------------------------
def _layernorm(x, g, b):
    mu = jnp.mean(x, axis=-1, keepdims=True)
    var = jnp.mean((x - mu) ** 2, axis=-1, keepdims=True)
    return (x - mu) * lax.rsqrt(var + LN_EPS) * g + b


def _gelu_exact(x):
    return 0.5 * x * (1.0 + lax.erf(x * (1.0 / math.sqrt(2.0))))


# ------------------------------------- fused Pallas kernel --------------------------------
def _fused_resampler_kernel(bm, m, n, nlat,
                            x_ref, lat_ref, emb_ref,
                            gm_ref, bmed_ref, gl_ref, bl_ref,
                            wqkv_ref, wo_ref,
                            fg_ref, fb_ref, w1_ref, w2_ref,
                            ng_ref, nb_ref,
                            out_ref,
                            kvin_scr):
    """Entire AugmentationResampler forward for all (b, m) slices in one invocation.

    Shapes (f32):
      x_ref    : (bm*n, DIM)            flattened media tokens
      lat_ref  : (nlat, DIM)            shared latents (one copy)
      emb_ref  : (NUM_AUG_SOURCES, 1, DIM)
      gm/bmed/gl/bl/fg/fb : (DEPTH, 1, DIM)     per-layer LayerNorm params
      wqkv_ref : (DEPTH, DIM, 3*INNER)  fused [q | k | v] projection
      wo_ref   : (DEPTH, INNER, DIM)
      w1_ref   : (DEPTH, DIM, FF_INNER) ; w2_ref : (DEPTH, FF_INNER, DIM)
      ng/nb    : (1, DIM)               final LayerNorm
      out_ref  : (bm*nlat, DIM)
      kvin_scr : VMEM (bm*(n+nlat), DIM) scratch for per-slice [xm_i ; lm_i]
    """
    nk = n + nlat

    # Compile-time per-head lane masks: head selection via VPU multiply instead of
    # 16-lane-offset slicing / lane concatenation (no XLU relayouts).
    lane = lax.broadcasted_iota(jnp.int32, (1, INNER), 1)
    head_masks = [
        ((lane >= h * DIM_HEAD) & (lane < (h + 1) * DIM_HEAD)).astype(jnp.float32)
        for h in range(HEADS)
    ]

    # x + time positional embedding, folded in-kernel (whole forward = one launch).
    emb_rows = jnp.concatenate(
        [jnp.broadcast_to(emb_ref[i % m], (n, DIM)) for i in range(bm)], axis=0)
    x = x_ref[...] + emb_rows                                   # (bm*n, DIM)

    # Replicate the shared latents across the (b, m) slices; the state stays resident
    # in VMEM / vregs for the whole pass (no HBM broadcast, no HBM round-trips).
    lat = jnp.concatenate([lat_ref[...]] * bm, axis=0)          # (bm*nlat, DIM)

    for layer in range(DEPTH):                                  # static unroll (DEPTH=2)
        # ------------------- PerceiverAttention (+ residual) -------------------
        xm = _layernorm(x, gm_ref[layer], bmed_ref[layer])      # (bm*n, DIM)
        lm = _layernorm(lat, gl_ref[layer], bl_ref[layer])      # (bm*nlat, DIM)

        # kv_in = per-slice [xm_i ; lm_i], assembled by aligned row stores into VMEM
        # scratch (replaces jnp.concatenate).
        for i in range(bm):
            kvin_scr[i * nk:i * nk + n, :] = xm[i * n:(i + 1) * n, :]
            kvin_scr[i * nk + n:(i + 1) * nk, :] = lm[i * nlat:(i + 1) * nlat, :]

        # One fused projection over ALL slices' rows: (bm*nk, DIM) @ (DIM, 3*INNER).
        qkv = jnp.dot(kvin_scr[...], wqkv_ref[layer],
                      preferred_element_type=jnp.float32)       # (bm*nk, 3*INNER)

        # Attention scores are per-(b, m) slice; BM=4 is statically unrolled.
        mh_rows = []
        for i in range(bm):
            blk = qkv[i * nk:(i + 1) * nk, :]                   # (nk, 3*INNER)
            q_i = blk[n:, 0:INNER] * SCALE                      # latent rows, q columns
            k_i = blk[:, INNER:2 * INNER]                       # (nk, INNER)
            v_i = blk[:, 2 * INNER:3 * INNER]                   # (nk, INNER)

            o_i = jnp.zeros((nlat, INNER), jnp.float32)
            for h in range(HEADS):
                qh = q_i * head_masks[h]                        # zero the other head's lanes
                sim = lax.dot_general(qh, k_i, (((1,), (1,)), ((), ())),
                                      preferred_element_type=jnp.float32)   # (nlat, nk)
                sim = sim - jnp.max(sim, axis=-1, keepdims=True)
                e = jnp.exp(sim)
                # Exact reciprocal on purpose: approx=True risks the 1e-4 reference
                # tolerance and its EUP saving is negligible at this size.
                p = e * pl.reciprocal(jnp.sum(e, axis=-1, keepdims=True), approx=False)
                oh = jnp.dot(p, v_i, preferred_element_type=jnp.float32)     # (nlat, INNER)
                o_i = o_i + oh * head_masks[h]                  # masked sum == head concat
            mh_rows.append(o_i)

        mh = jnp.concatenate(mh_rows, axis=0)                   # (bm*nlat, INNER)
        lat = lat + jnp.dot(mh, wo_ref[layer],
                            preferred_element_type=jnp.float32)  # residual

        # ------------------- FeedForward (+ residual), batched over all rows ----
        hff = _layernorm(lat, fg_ref[layer], fb_ref[layer])
        hff = jnp.dot(hff, w1_ref[layer], preferred_element_type=jnp.float32)  # (rows, 128)
        hff = _gelu_exact(hff)
        lat = lat + jnp.dot(hff, w2_ref[layer], preferred_element_type=jnp.float32)

    # Final LayerNorm; one contiguous slab store (wrapper reshape is free).
    out_ref[...] = _layernorm(lat, ng_ref[...], nb_ref[...])


# ------------------------------------ pallas_call wrapper ---------------------------------
@jax.jit
def augmentation_resampler(x, params):
    # x: (B, N, D) or (B, M, N, D)
    if x.ndim == 3:
        x = x[:, None]
    b, m, n, d = x.shape
    bm = b * m
    nlat = NUM_LATENTS
    nk = n + nlat

    kernel = functools.partial(_fused_resampler_kernel, bm, m, n, nlat)

    out_flat = pl.pallas_call(
        kernel,
        out_shape=jax.ShapeDtypeStruct((bm * nlat, d), jnp.float32),
        scratch_shapes=[pltpu.VMEM((bm * nk, d), jnp.float32)],
    )(
        x.reshape(bm * n, d),          # free row-major reshape
        params["latents"],
        params["time_pos_emb"],
        params["gm"], params["bm"], params["gl"], params["bl"],
        params["wqkv"], params["wo"],
        params["fg"], params["fb"], params["w1"], params["w2"],
        params["norm_g"], params["norm_b"],
    )
    return out_flat.reshape(b, m, nlat, d)   # free row-major reshape


# ---------------------------------- pure-JAX reference ------------------------------------
def reference(x, params):
    if x.ndim == 3:
        x = x[:, None]
    b, m, n, d = x.shape
    x = x + params["time_pos_emb"][:m]
    lat = jnp.broadcast_to(params["latents"], (b, m, NUM_LATENTS, d))
    for l in range(DEPTH):
        xm = _layernorm(x, params["gm"][l], params["bm"][l])
        lm = _layernorm(lat, params["gl"][l], params["bl"][l])
        kv_in = jnp.concatenate([xm, lm], axis=-2)
        wqkv = params["wqkv"][l]
        q = jnp.einsum("bmnd,de->bmne", lm, wqkv[:, :INNER])
        k = jnp.einsum("bmnd,de->bmne", kv_in, wqkv[:, INNER:2 * INNER])
        v = jnp.einsum("bmnd,de->bmne", kv_in, wqkv[:, 2 * INNER:])

        def split_heads(t):
            return t.reshape(*t.shape[:-1], HEADS, DIM_HEAD).transpose(0, 1, 3, 2, 4)

        qh, kh, vh = split_heads(q) * SCALE, split_heads(k), split_heads(v)
        sim = jnp.einsum("bmhid,bmhjd->bmhij", qh, kh)
        sim = sim - jnp.max(sim, axis=-1, keepdims=True)
        attn = jax.nn.softmax(sim, axis=-1)
        out = jnp.einsum("bmhij,bmhjd->bmhid", attn, vh)
        out = out.transpose(0, 1, 3, 2, 4).reshape(b, m, NUM_LATENTS, INNER)
        lat = jnp.einsum("bmne,ed->bmnd", out, params["wo"][l]) + lat

        h1 = _layernorm(lat, params["fg"][l], params["fb"][l])
        h1 = _gelu_exact(jnp.einsum("bmnd,de->bmne", h1, params["w1"][l]))
        lat = jnp.einsum("bmne,ed->bmnd", h1, params["w2"][l]) + lat
    return _layernorm(lat, params["norm_g"], params["norm_b"])


# ----------------------------------------- params ------------------------------------------
def init_params(key):
    ks = jax.random.split(key, 6)
    return {
        "latents": jax.random.normal(ks[0], (NUM_LATENTS, DIM), jnp.float32),
        "time_pos_emb": jax.random.normal(ks[1], (NUM_AUG_SOURCES, 1, DIM), jnp.float32),
        # per-layer LayerNorm params, stacked over depth
        "gm": jnp.ones((DEPTH, 1, DIM), jnp.float32),
        "bm": jnp.zeros((DEPTH, 1, DIM), jnp.float32),
        "gl": jnp.ones((DEPTH, 1, DIM), jnp.float32),
        "bl": jnp.zeros((DEPTH, 1, DIM), jnp.float32),
        "fg": jnp.ones((DEPTH, 1, DIM), jnp.float32),
        "fb": jnp.zeros((DEPTH, 1, DIM), jnp.float32),
        # per-layer weights, stacked over depth; wqkv columns are [q | k | v]
        "wqkv": 0.05 * jax.random.normal(ks[2], (DEPTH, DIM, 3 * INNER), jnp.float32),
        "wo": 0.05 * jax.random.normal(ks[3], (DEPTH, INNER, DIM), jnp.float32),
        "w1": 0.05 * jax.random.normal(ks[4], (DEPTH, DIM, FF_INNER), jnp.float32),
        "w2": 0.05 * jax.random.normal(ks[5], (DEPTH, FF_INNER, DIM), jnp.float32),
        # final LayerNorm
        "norm_g": jnp.ones((1, DIM), jnp.float32),
        "norm_b": jnp.zeros((1, DIM), jnp.float32),
    }


# ----------------------------------------- main --------------------------------------------
if __name__ == "__main__":
    key = jax.random.PRNGKey(0)
    k_in, k_par = jax.random.split(key)
    x = jax.random.normal(k_in, (B, M, N, DIM), jnp.float32)
    params = init_params(k_par)

    out = jax.block_until_ready(augmentation_resampler(x, params))

    ref = reference(x, params)
    assert out.shape == (B, M, NUM_LATENTS, DIM)
    assert jnp.allclose(out, ref, atol=1e-4, rtol=1e-4), (
        float(jnp.max(jnp.abs(out - ref)))
    )
    print("KERNEL_OK")
</pallas_src>

<mosaic_0001>
module attributes {stable_mosaic.version = 11 : i64} {
  func.func @_fused_resampler_kernel(%arg0: memref<32x32xf32, #tpu.memory_space<vmem>>, %arg1: memref<8x32xf32, #tpu.memory_space<vmem>>, %arg2: memref<4x1x32xf32, #tpu.memory_space<vmem>>, %arg3: memref<2x1x32xf32, #tpu.memory_space<vmem>>, %arg4: memref<2x1x32xf32, #tpu.memory_space<vmem>>, %arg5: memref<2x1x32xf32, #tpu.memory_space<vmem>>, %arg6: memref<2x1x32xf32, #tpu.memory_space<vmem>>, %arg7: memref<2x32x96xf32, #tpu.memory_space<vmem>>, %arg8: memref<2x32x32xf32, #tpu.memory_space<vmem>>, %arg9: memref<2x1x32xf32, #tpu.memory_space<vmem>>, %arg10: memref<2x1x32xf32, #tpu.memory_space<vmem>>, %arg11: memref<2x32x128xf32, #tpu.memory_space<vmem>>, %arg12: memref<2x128x32xf32, #tpu.memory_space<vmem>>, %arg13: memref<1x32xf32, #tpu.memory_space<vmem>>, %arg14: memref<1x32xf32, #tpu.memory_space<vmem>>, %arg15: memref<32x32xf32, #tpu.memory_space<vmem>>, %arg16: memref<64x32xf32, #tpu.memory_space<vmem>>) attributes {dimension_semantics = [], scalar_prefetch = 0 : i64, scratch_operands = 1 : i64, tpu.core_type = #tpu.core_type<tc>} {
    %0 = tpu.iota {dimensions = array<i32: 1>} : vector<1x32xi32>
    %c0_i32 = arith.constant 0 : i32
    %1 = vector.broadcast %c0_i32 : i32 to vector<1x32xi32>
    %2 = arith.cmpi sge, %0, %1 : vector<1x32xi32>
    %c16_i32 = arith.constant 16 : i32
    %3 = vector.broadcast %c16_i32 : i32 to vector<1x32xi32>
    %4 = arith.cmpi slt, %0, %3 : vector<1x32xi32>
    %5 = arith.andi %2, %4 : vector<1x32xi1>
    %6 = arith.extui %5 : vector<1x32xi1> to vector<1x32xi32>
    %7 = arith.sitofp %6 : vector<1x32xi32> to vector<1x32xf32>
    %c16_i32_0 = arith.constant 16 : i32
    %8 = vector.broadcast %c16_i32_0 : i32 to vector<1x32xi32>
    %9 = arith.cmpi sge, %0, %8 : vector<1x32xi32>
    %c32_i32 = arith.constant 32 : i32
    %10 = vector.broadcast %c32_i32 : i32 to vector<1x32xi32>
    %11 = arith.cmpi slt, %0, %10 : vector<1x32xi32>
    %12 = arith.andi %9, %11 : vector<1x32xi1>
    %13 = arith.extui %12 : vector<1x32xi1> to vector<1x32xi32>
    %14 = arith.sitofp %13 : vector<1x32xi32> to vector<1x32xf32>
    %c0 = arith.constant 0 : index
    %c0_1 = arith.constant 0 : index
    %c0_2 = arith.constant 0 : index
    %15 = vector.load %arg2[%c0, %c0_1, %c0_2] : memref<4x1x32xf32, #tpu.memory_space<vmem>>, vector<1x1x32xf32>
    %16 = vector.shape_cast %15 : vector<1x1x32xf32> to vector<1x32xf32>
    %17 = vector.shape_cast %16 : vector<1x32xf32> to vector<1x32xf32>
    %18 = vector.broadcast %17 : vector<1x32xf32> to vector<8x32xf32>
    %c1 = arith.constant 1 : index
    %c0_3 = arith.constant 0 : index
    %c0_4 = arith.constant 0 : index
    %19 = vector.load %arg2[%c1, %c0_3, %c0_4] : memref<4x1x32xf32, #tpu.memory_space<vmem>>, vector<1x1x32xf32>
    %20 = vector.shape_cast %19 : vector<1x1x32xf32> to vector<1x32xf32>
    %21 = vector.shape_cast %20 : vector<1x32xf32> to vector<1x32xf32>
    %22 = vector.broadcast %21 : vector<1x32xf32> to vector<8x32xf32>
    %c0_5 = arith.constant 0 : index
    %c0_6 = arith.constant 0 : index
    %c0_7 = arith.constant 0 : index
    %23 = vector.load %arg2[%c0_5, %c0_6, %c0_7] : memref<4x1x32xf32, #tpu.memory_space<vmem>>, vector<1x1x32xf32>
    %24 = vector.shape_cast %23 : vector<1x1x32xf32> to vector<1x32xf32>
    %25 = vector.shape_cast %24 : vector<1x32xf32> to vector<1x32xf32>
    %26 = vector.broadcast %25 : vector<1x32xf32> to vector<8x32xf32>
    %c1_8 = arith.constant 1 : index
    %c0_9 = arith.constant 0 : index
    %c0_10 = arith.constant 0 : index
    %27 = vector.load %arg2[%c1_8, %c0_9, %c0_10] : memref<4x1x32xf32, #tpu.memory_space<vmem>>, vector<1x1x32xf32>
    %28 = vector.shape_cast %27 : vector<1x1x32xf32> to vector<1x32xf32>
    %29 = vector.shape_cast %28 : vector<1x32xf32> to vector<1x32xf32>
    %30 = vector.broadcast %29 : vector<1x32xf32> to vector<8x32xf32>
    %31 = tpu.concatenate %18, %22, %26, %30 in 0 : vector<8x32xf32>, vector<8x32xf32>, vector<8x32xf32>, vector<8x32xf32> -> vector<32x32xf32>
    %c0_11 = arith.constant 0 : index
    %c0_12 = arith.constant 0 : index
    %32 = vector.load %arg0[%c0_11, %c0_12] : memref<32x32xf32, #tpu.memory_space<vmem>>, vector<32x32xf32>
    %33 = arith.addf %32, %31 : vector<32x32xf32>
    %c0_13 = arith.constant 0 : index
    %c0_14 = arith.constant 0 : index
    %34 = vector.load %arg1[%c0_13, %c0_14] : memref<8x32xf32, #tpu.memory_space<vmem>>, vector<8x32xf32>
    %35 = tpu.concatenate %34, %34, %34, %34 in 0 : vector<8x32xf32>, vector<8x32xf32>, vector<8x32xf32>, vector<8x32xf32> -> vector<32x32xf32>
    %c0_15 = arith.constant 0 : index
    %c0_16 = arith.constant 0 : index
    %c0_17 = arith.constant 0 : index
    %36 = vector.load %arg3[%c0_15, %c0_16, %c0_17] : memref<2x1x32xf32, #tpu.memory_space<vmem>>, vector<1x1x32xf32>
    %37 = vector.shape_cast %36 : vector<1x1x32xf32> to vector<1x32xf32>
    %c0_18 = arith.constant 0 : index
    %c0_19 = arith.constant 0 : index
    %c0_20 = arith.constant 0 : index
    %38 = vector.load %arg4[%c0_18, %c0_19, %c0_20] : memref<2x1x32xf32, #tpu.memory_space<vmem>>, vector<1x1x32xf32>
    %39 = vector.shape_cast %38 : vector<1x1x32xf32> to vector<1x32xf32>
    %cst = arith.constant dense<0.000000e+00> : vector<32xf32>
    %40 = vector.multi_reduction <add>, %33, %cst [1] : vector<32x32xf32> to vector<32xf32>
    %41 = vector.shape_cast %40 : vector<32xf32> to vector<32x1xf32>
    %cst_21 = arith.constant 3.200000e+01 : f32
    %42 = vector.broadcast %cst_21 : f32 to vector<32x1xf32>
    %43 = arith.divf %41, %42 : vector<32x1xf32>
    %44 = vector.broadcast %43 : vector<32x1xf32> to vector<32x32xf32>
    %45 = arith.subf %33, %44 : vector<32x32xf32>
    %46 = arith.mulf %45, %45 : vector<32x32xf32>
    %cst_22 = arith.constant dense<0.000000e+00> : vector<32xf32>
    %47 = vector.multi_reduction <add>, %46, %cst_22 [1] : vector<32x32xf32> to vector<32xf32>
    %48 = vector.shape_cast %47 : vector<32xf32> to vector<32x1xf32>
    %cst_23 = arith.constant 3.200000e+01 : f32
    %49 = vector.broadcast %cst_23 : f32 to vector<32x1xf32>
    %50 = arith.divf %48, %49 : vector<32x1xf32>
    %51 = vector.broadcast %43 : vector<32x1xf32> to vector<32x32xf32>
    %52 = arith.subf %33, %51 : vector<32x32xf32>
    %cst_24 = arith.constant 9.99999974E-6 : f32
    %53 = vector.broadcast %cst_24 : f32 to vector<32x1xf32>
    %54 = arith.addf %50, %53 : vector<32x1xf32>
    %55 = math.rsqrt %54 : vector<32x1xf32>
    %56 = vector.broadcast %55 : vector<32x1xf32> to vector<32x32xf32>
    %57 = arith.mulf %52, %56 : vector<32x32xf32>
    %58 = vector.broadcast %37 : vector<1x32xf32> to vector<32x32xf32>
    %59 = arith.mulf %57, %58 : vector<32x32xf32>
    %60 = vector.broadcast %39 : vector<1x32xf32> to vector<32x32xf32>
    %61 = arith.addf %59, %60 : vector<32x32xf32>
    %c0_25 = arith.constant 0 : index
    %c0_26 = arith.constant 0 : index
    %c0_27 = arith.constant 0 : index
    %62 = vector.load %arg5[%c0_25, %c0_26, %c0_27] : memref<2x1x32xf32, #tpu.memory_space<vmem>>, vector<1x1x32xf32>
    %63 = vector.shape_cast %62 : vector<1x1x32xf32> to vector<1x32xf32>
    %c0_28 = arith.constant 0 : index
    %c0_29 = arith.constant 0 : index
    %c0_30 = arith.constant 0 : index
    %64 = vector.load %arg6[%c0_28, %c0_29, %c0_30] : memref<2x1x32xf32, #tpu.memory_space<vmem>>, vector<1x1x32xf32>
    %65 = vector.shape_cast %64 : vector<1x1x32xf32> to vector<1x32xf32>
    %cst_31 = arith.constant dense<0.000000e+00> : vector<32xf32>
    %66 = vector.multi_reduction <add>, %35, %cst_31 [1] : vector<32x32xf32> to vector<32xf32>
    %67 = vector.shape_cast %66 : vector<32xf32> to vector<32x1xf32>
    %cst_32 = arith.constant 3.200000e+01 : f32
    %68 = vector.broadcast %cst_32 : f32 to vector<32x1xf32>
    %69 = arith.divf %67, %68 : vector<32x1xf32>
    %70 = vector.broadcast %69 : vector<32x1xf32> to vector<32x32xf32>
    %71 = arith.subf %35, %70 : vector<32x32xf32>
    %72 = arith.mulf %71, %71 : vector<32x32xf32>
    %cst_33 = arith.constant dense<0.000000e+00> : vector<32xf32>
    %73 = vector.multi_reduction <add>, %72, %cst_33 [1] : vector<32x32xf32> to vector<32xf32>
    %74 = vector.shape_cast %73 : vector<32xf32> to vector<32x1xf32>
    %cst_34 = arith.constant 3.200000e+01 : f32
    %75 = vector.broadcast %cst_34 : f32 to vector<32x1xf32>
    %76 = arith.divf %74, %75 : vector<32x1xf32>
    %77 = vector.broadcast %69 : vector<32x1xf32> to vector<32x32xf32>
    %78 = arith.subf %35, %77 : vector<32x32xf32>
    %cst_35 = arith.constant 9.99999974E-6 : f32
    %79 = vector.broadcast %cst_35 : f32 to vector<32x1xf32>
    %80 = arith.addf %76, %79 : vector<32x1xf32>
    %81 = math.rsqrt %80 : vector<32x1xf32>
    %82 = vector.broadcast %81 : vector<32x1xf32> to vector<32x32xf32>
    %83 = arith.mulf %78, %82 : vector<32x32xf32>
    %84 = vector.broadcast %63 : vector<1x32xf32> to vector<32x32xf32>
    %85 = arith.mulf %83, %84 : vector<32x32xf32>
    %86 = vector.broadcast %65 : vector<1x32xf32> to vector<32x32xf32>
    %87 = arith.addf %85, %86 : vector<32x32xf32>
    %88 = vector.extract_strided_slice %61 {offsets = [0, 0], sizes = [8, 32], strides = [1, 1]} : vector<32x32xf32> to vector<8x32xf32>
    %c0_36 = arith.constant 0 : index
    %c0_37 = arith.constant 0 : index
    %89 = vector.load %arg16[%c0_36, %c0_37] : memref<64x32xf32, #tpu.memory_space<vmem>>, vector<8x32xf32>
    tpu.vector_store %arg16[%c0_36, %c0_37], %88 {strides = array<i32>} : memref<64x32xf32, #tpu.memory_space<vmem>>, vector<8x32xf32>,
    %90 = vector.extract_strided_slice %87 {offsets = [0, 0], sizes = [8, 32], strides = [1, 1]} : vector<32x32xf32> to vector<8x32xf32>
    %c8 = arith.constant 8 : index
    %c0_38 = arith.constant 0 : index
    %91 = vector.load %arg16[%c8, %c0_38] : memref<64x32xf32, #tpu.memory_space<vmem>>, vector<8x32xf32>
    tpu.vector_store %arg16[%c8, %c0_38], %90 {strides = array<i32>} : memref<64x32xf32, #tpu.memory_space<vmem>>, vector<8x32xf32>,
    %92 = vector.extract_strided_slice %61 {offsets = [8, 0], sizes = [8, 32], strides = [1, 1]} : vector<32x32xf32> to vector<8x32xf32>
    %c16 = arith.constant 16 : index
    %c0_39 = arith.constant 0 : index
    %93 = vector.load %arg16[%c16, %c0_39] : memref<64x32xf32, #tpu.memory_space<vmem>>, vector<8x32xf32>
    tpu.vector_store %arg16[%c16, %c0_39], %92 {strides = array<i32>} : memref<64x32xf32, #tpu.memory_space<vmem>>, vector<8x32xf32>,
    %94 = vector.extract_strided_slice %87 {offsets = [8, 0], sizes = [8, 32], strides = [1, 1]} : vector<32x32xf32> to vector<8x32xf32>
    %c24 = arith.constant 24 : index
    %c0_40 = arith.constant 0 : index
    %95 = vector.load %arg16[%c24, %c0_40] : memref<64x32xf32, #tpu.memory_space<vmem>>, vector<8x32xf32>
    tpu.vector_store %arg16[%c24, %c0_40], %94 {strides = array<i32>} : memref<64x32xf32, #tpu.memory_space<vmem>>, vector<8x32xf32>,
    %96 = vector.extract_strided_slice %61 {offsets = [16, 0], sizes = [8, 32], strides = [1, 1]} : vector<32x32xf32> to vector<8x32xf32>
    %c32 = arith.constant 32 : index
    %c0_41 = arith.constant 0 : index
    %97 = vector.load %arg16[%c32, %c0_41] : memref<64x32xf32, #tpu.memory_space<vmem>>, vector<8x32xf32>
    tpu.vector_store %arg16[%c32, %c0_41], %96 {strides = array<i32>} : memref<64x32xf32, #tpu.memory_space<vmem>>, vector<8x32xf32>,
    %98 = vector.extract_strided_slice %87 {offsets = [16, 0], sizes = [8, 32], strides = [1, 1]} : vector<32x32xf32> to vector<8x32xf32>
    %c40 = arith.constant 40 : index
    %c0_42 = arith.constant 0 : index
    %99 = vector.load %arg16[%c40, %c0_42] : memref<64x32xf32, #tpu.memory_space<vmem>>, vector<8x32xf32>
    tpu.vector_store %arg16[%c40, %c0_42], %98 {strides = array<i32>} : memref<64x32xf32, #tpu.memory_space<vmem>>, vector<8x32xf32>,
    %100 = vector.extract_strided_slice %61 {offsets = [24, 0], sizes = [8, 32], strides = [1, 1]} : vector<32x32xf32> to vector<8x32xf32>
    %c48 = arith.constant 48 : index
    %c0_43 = arith.constant 0 : index
    %101 = vector.load %arg16[%c48, %c0_43] : memref<64x32xf32, #tpu.memory_space<vmem>>, vector<8x32xf32>
    tpu.vector_store %arg16[%c48, %c0_43], %100 {strides = array<i32>} : memref<64x32xf32, #tpu.memory_space<vmem>>, vector<8x32xf32>,
    %102 = vector.extract_strided_slice %87 {offsets = [24, 0], sizes = [8, 32], strides = [1, 1]} : vector<32x32xf32> to vector<8x32xf32>
    %c56 = arith.constant 56 : index
    %c0_44 = arith.constant 0 : index
    %103 = vector.load %arg16[%c56, %c0_44] : memref<64x32xf32, #tpu.memory_space<vmem>>, vector<8x32xf32>
    tpu.vector_store %arg16[%c56, %c0_44], %102 {strides = array<i32>} : memref<64x32xf32, #tpu.memory_space<vmem>>, vector<8x32xf32>,
    %c0_45 = arith.constant 0 : index
    %c0_46 = arith.constant 0 : index
    %104 = vector.load %arg16[%c0_45, %c0_46] : memref<64x32xf32, #tpu.memory_space<vmem>>, vector<64x32xf32>
    %c0_47 = arith.constant 0 : index
    %c0_48 = arith.constant 0 : index
    %c0_49 = arith.constant 0 : index
    %105 = vector.load %arg7[%c0_47, %c0_48, %c0_49] : memref<2x32x96xf32, #tpu.memory_space<vmem>>, vector<1x32x96xf32>
    %106 = vector.shape_cast %105 : vector<1x32x96xf32> to vector<32x96xf32>
    %cst_50 = arith.constant dense<0.000000e+00> : vector<64x96xf32>
    %107 = tpu.matmul %104, %106, %cst_50 {dimension_numbers = #tpu.dot_dimension_numbers<[1], [0], [0], [1], [0, 0, 1, 1], [], []>} : vector<64x32xf32>, vector<32x96xf32>, vector<64x96xf32> -> vector<64x96xf32>
    %108 = vector.extract_strided_slice %107 {offsets = [0, 0], sizes = [16, 96], strides = [1, 1]} : vector<64x96xf32> to vector<16x96xf32>
    %109 = vector.extract_strided_slice %108 {offsets = [8, 0], sizes = [8, 32], strides = [1, 1]} : vector<16x96xf32> to vector<8x32xf32>
    %cst_51 = arith.constant 2.500000e-01 : f32
    %110 = vector.broadcast %cst_51 : f32 to vector<8x32xf32>
    %111 = arith.mulf %109, %110 : vector<8x32xf32>
    %112 = vector.extract_strided_slice %108 {offsets = [0, 32], sizes = [16, 32], strides = [1, 1]} : vector<16x96xf32> to vector<16x32xf32>
    %113 = vector.extract_strided_slice %108 {offsets = [0, 64], sizes = [16, 32], strides = [1, 1]} : vector<16x96xf32> to vector<16x32xf32>
    %cst_52 = arith.constant 0.000000e+00 : f32
    %114 = vector.broadcast %cst_52 : f32 to vector<8x32xf32>
    %115 = vector.broadcast %7 : vector<1x32xf32> to vector<8x32xf32>
    %116 = arith.mulf %111, %115 : vector<8x32xf32>
    %cst_53 = arith.constant dense<0.000000e+00> : vector<8x16xf32>
    %117 = tpu.matmul %116, %112, %cst_53 {dimension_numbers = #tpu.dot_dimension_numbers<[1], [1], [0], [0], [0, 0, 1, 0], [], []>} : vector<8x32xf32>, vector<16x32xf32>, vector<8x16xf32> -> vector<8x16xf32>
    %cst_54 = arith.constant dense<0xFF800000> : vector<8xf32>
    %118 = vector.multi_reduction <maximumf>, %117, %cst_54 [1] : vector<8x16xf32> to vector<8xf32>
    %119 = vector.shape_cast %118 : vector<8xf32> to vector<8x1xf32>
    %120 = vector.broadcast %119 : vector<8x1xf32> to vector<8x16xf32>
    %121 = arith.subf %117, %120 : vector<8x16xf32>
    %122 = math.exp %121 : vector<8x16xf32>
    %cst_55 = arith.constant dense<0.000000e+00> : vector<8xf32>
    %123 = vector.multi_reduction <add>, %122, %cst_55 [1] : vector<8x16xf32> to vector<8xf32>
    %124 = vector.shape_cast %123 : vector<8xf32> to vector<8x1xf32>
    %125 = tpu.reciprocal %124 : vector<8x1xf32> -> vector<8x1xf32>
    %126 = vector.broadcast %125 : vector<8x1xf32> to vector<8x16xf32>
    %127 = arith.mulf %122, %126 : vector<8x16xf32>
    %cst_56 = arith.constant dense<0.000000e+00> : vector<8x32xf32>
    %128 = tpu.matmul %127, %113, %cst_56 {dimension_numbers = #tpu.dot_dimension_numbers<[1], [0], [0], [1], [0, 0, 1, 1], [], []>} : vector<8x16xf32>, vector<16x32xf32>, vector<8x32xf32> -> vector<8x32xf32>
    %129 = vector.broadcast %7 : vector<1x32xf32> to vector<8x32xf32>
    %130 = arith.mulf %128, %129 : vector<8x32xf32>
    %131 = arith.addf %114, %130 : vector<8x32xf32>
    %132 = vector.broadcast %14 : vector<1x32xf32> to vector<8x32xf32>
    %133 = arith.mulf %111, %132 : vector<8x32xf32>
    %cst_57 = arith.constant dense<0.000000e+00> : vector<8x16xf32>
    %134 = tpu.matmul %133, %112, %cst_57 {dimension_numbers = #tpu.dot_dimension_numbers<[1], [1], [0], [0], [0, 0, 1, 0], [], []>} : vector<8x32xf32>, vector<16x32xf32>, vector<8x16xf32> -> vector<8x16xf32>
    %cst_58 = arith.constant dense<0xFF800000> : vector<8xf32>
    %135 = vector.multi_reduction <maximumf>, %134, %cst_58 [1] : vector<8x16xf32> to vector<8xf32>
    %136 = vector.shape_cast %135 : vector<8xf32> to vector<8x1xf32>
    %137 = vector.broadcast %136 : vector<8x1xf32> to vector<8x16xf32>
    %138 = arith.subf %134, %137 : vector<8x16xf32>
    %139 = math.exp %138 : vector<8x16xf32>
    %cst_59 = arith.constant dense<0.000000e+00> : vector<8xf32>
    %140 = vector.multi_reduction <add>, %139, %cst_59 [1] : vector<8x16xf32> to vector<8xf32>
    %141 = vector.shape_cast %140 : vector<8xf32> to vector<8x1xf32>
    %142 = tpu.reciprocal %141 : vector<8x1xf32> -> vector<8x1xf32>
    %143 = vector.broadcast %142 : vector<8x1xf32> to vector<8x16xf32>
    %144 = arith.mulf %139, %143 : vector<8x16xf32>
    %cst_60 = arith.constant dense<0.000000e+00> : vector<8x32xf32>
    %145 = tpu.matmul %144, %113, %cst_60 {dimension_numbers = #tpu.dot_dimension_numbers<[1], [0], [0], [1], [0, 0, 1, 1], [], []>} : vector<8x16xf32>, vector<16x32xf32>, vector<8x32xf32> -> vector<8x32xf32>
    %146 = vector.broadcast %14 : vector<1x32xf32> to vector<8x32xf32>
    %147 = arith.mulf %145, %146 : vector<8x32xf32>
    %148 = arith.addf %131, %147 : vector<8x32xf32>
    %149 = vector.extract_strided_slice %107 {offsets = [16, 0], sizes = [16, 96], strides = [1, 1]} : vector<64x96xf32> to vector<16x96xf32>
    %150 = vector.extract_strided_slice %149 {offsets = [8, 0], sizes = [8, 32], strides = [1, 1]} : vector<16x96xf32> to vector<8x32xf32>
    %cst_61 = arith.constant 2.500000e-01 : f32
    %151 = vector.broadcast %cst_61 : f32 to vector<8x32xf32>
    %152 = arith.mulf %150, %151 : vector<8x32xf32>
    %153 = vector.extract_strided_slice %149 {offsets = [0, 32], sizes = [16, 32], strides = [1, 1]} : vector<16x96xf32> to vector<16x32xf32>
    %154 = vector.extract_strided_slice %149 {offsets = [0, 64], sizes = [16, 32], strides = [1, 1]} : vector<16x96xf32> to vector<16x32xf32>
    %cst_62 = arith.constant 0.000000e+00 : f32
    %155 = vector.broadcast %cst_62 : f32 to vector<8x32xf32>
    %156 = vector.broadcast %7 : vector<1x32xf32> to vector<8x32xf32>
    %157 = arith.mulf %152, %156 : vector<8x32xf32>
    %cst_63 = arith.constant dense<0.000000e+00> : vector<8x16xf32>
    %158 = tpu.matmul %157, %153, %cst_63 {dimension_numbers = #tpu.dot_dimension_numbers<[1], [1], [0], [0], [0, 0, 1, 0], [], []>} : vector<8x32xf32>, vector<16x32xf32>, vector<8x16xf32> -> vector<8x16xf32>
    %cst_64 = arith.constant dense<0xFF800000> : vector<8xf32>
    %159 = vector.multi_reduction <maximumf>, %158, %cst_64 [1] : vector<8x16xf32> to vector<8xf32>
    %160 = vector.shape_cast %159 : vector<8xf32> to vector<8x1xf32>
    %161 = vector.broadcast %160 : vector<8x1xf32> to vector<8x16xf32>
    %162 = arith.subf %158, %161 : vector<8x16xf32>
    %163 = math.exp %162 : vector<8x16xf32>
    %cst_65 = arith.constant dense<0.000000e+00> : vector<8xf32>
    %164 = vector.multi_reduction <add>, %163, %cst_65 [1] : vector<8x16xf32> to vector<8xf32>
    %165 = vector.shape_cast %164 : vector<8xf32> to vector<8x1xf32>
    %166 = tpu.reciprocal %165 : vector<8x1xf32> -> vector<8x1xf32>
    %167 = vector.broadcast %166 : vector<8x1xf32> to vector<8x16xf32>
    %168 = arith.mulf %163, %167 : vector<8x16xf32>
    %cst_66 = arith.constant dense<0.000000e+00> : vector<8x32xf32>
    %169 = tpu.matmul %168, %154, %cst_66 {dimension_numbers = #tpu.dot_dimension_numbers<[1], [0], [0], [1], [0, 0, 1, 1], [], []>} : vector<8x16xf32>, vector<16x32xf32>, vector<8x32xf32> -> vector<8x32xf32>
    %170 = vector.broadcast %7 : vector<1x32xf32> to vector<8x32xf32>
    %171 = arith.mulf %169, %170 : vector<8x32xf32>
    %172 = arith.addf %155, %171 : vector<8x32xf32>
    %173 = vector.broadcast %14 : vector<1x32xf32> to vector<8x32xf32>
    %174 = arith.mulf %152, %173 : vector<8x32xf32>
    %cst_67 = arith.constant dense<0.000000e+00> : vector<8x16xf32>
    %175 = tpu.matmul %174, %153, %cst_67 {dimension_numbers = #tpu.dot_dimension_numbers<[1], [1], [0], [0], [0, 0, 1, 0], [], []>} : vector<8x32xf32>, vector<16x32xf32>, vector<8x16xf32> -> vector<8x16xf32>
    %cst_68 = arith.constant dense<0xFF800000> : vector<8xf32>
    %176 = vector.multi_reduction <maximumf>, %175, %cst_68 [1] : vector<8x16xf32> to vector<8xf32>
    %177 = vector.shape_cast %176 : vector<8xf32> to vector<8x1xf32>
    %178 = vector.broadcast %177 : vector<8x1xf32> to vector<8x16xf32>
    %179 = arith.subf %175, %178 : vector<8x16xf32>
    %180 = math.exp %179 : vector<8x16xf32>
    %cst_69 = arith.constant dense<0.000000e+00> : vector<8xf32>
    %181 = vector.multi_reduction <add>, %180, %cst_69 [1] : vector<8x16xf32> to vector<8xf32>
    %182 = vector.shape_cast %181 : vector<8xf32> to vector<8x1xf32>
    %183 = tpu.reciprocal %182 : vector<8x1xf32> -> vector<8x1xf32>
    %184 = vector.broadcast %183 : vector<8x1xf32> to vector<8x16xf32>
    %185 = arith.mulf %180, %184 : vector<8x16xf32>
    %cst_70 = arith.constant dense<0.000000e+00> : vector<8x32xf32>
    %186 = tpu.matmul %185, %154, %cst_70 {dimension_numbers = #tpu.dot_dimension_numbers<[1], [0], [0], [1], [0, 0, 1, 1], [], []>} : vector<8x16xf32>, vector<16x32xf32>, vector<8x32xf32> -> vector<8x32xf32>
    %187 = vector.broadcast %14 : vector<1x32xf32> to vector<8x32xf32>
    %188 = arith.mulf %186, %187 : vector<8x32xf32>
    %189 = arith.addf %172, %188 : vector<8x32xf32>
    %190 = vector.extract_strided_slice %107 {offsets = [32, 0], sizes = [16, 96], strides = [1, 1]} : vector<64x96xf32> to vector<16x96xf32>
    %191 = vector.extract_strided_slice %190 {offsets = [8, 0], sizes = [8, 32], strides = [1, 1]} : vector<16x96xf32> to vector<8x32xf32>
    %cst_71 = arith.constant 2.500000e-01 : f32
    %192 = vector.broadcast %cst_71 : f32 to vector<8x32xf32>
    %193 = arith.mulf %191, %192 : vector<8x32xf32>
    %194 = vector.extract_strided_slice %190 {offsets = [0, 32], sizes = [16, 32], strides = [1, 1]} : vector<16x96xf32> to vector<16x32xf32>
    %195 = vector.extract_strided_slice %190 {offsets = [0, 64], sizes = [16, 32], strides = [1, 1]} : vector<16x96xf32> to vector<16x32xf32>
    %cst_72 = arith.constant 0.000000e+00 : f32
    %196 = vector.broadcast %cst_72 : f32 to vector<8x32xf32>
    %197 = vector.broadcast %7 : vector<1x32xf32> to vector<8x32xf32>
    %198 = arith.mulf %193, %197 : vector<8x32xf32>
    %cst_73 = arith.constant dense<0.000000e+00> : vector<8x16xf32>
    %199 = tpu.matmul %198, %194, %cst_73 {dimension_numbers = #tpu.dot_dimension_numbers<[1], [1], [0], [0], [0, 0, 1, 0], [], []>} : vector<8x32xf32>, vector<16x32xf32>, vector<8x16xf32> -> vector<8x16xf32>
    %cst_74 = arith.constant dense<0xFF800000> : vector<8xf32>
    %200 = vector.multi_reduction <maximumf>, %199, %cst_74 [1] : vector<8x16xf32> to vector<8xf32>
    %201 = vector.shape_cast %200 : vector<8xf32> to vector<8x1xf32>
    %202 = vector.broadcast %201 : vector<8x1xf32> to vector<8x16xf32>
    %203 = arith.subf %199, %202 : vector<8x16xf32>
    %204 = math.exp %203 : vector<8x16xf32>
    %cst_75 = arith.constant dense<0.000000e+00> : vector<8xf32>
    %205 = vector.multi_reduction <add>, %204, %cst_75 [1] : vector<8x16xf32> to vector<8xf32>
    %206 = vector.shape_cast %205 : vector<8xf32> to vector<8x1xf32>
    %207 = tpu.reciprocal %206 : vector<8x1xf32> -> vector<8x1xf32>
    %208 = vector.broadcast %207 : vector<8x1xf32> to vector<8x16xf32>
    %209 = arith.mulf %204, %208 : vector<8x16xf32>
    %cst_76 = arith.constant dense<0.000000e+00> : vector<8x32xf32>
    %210 = tpu.matmul %209, %195, %cst_76 {dimension_numbers = #tpu.dot_dimension_numbers<[1], [0], [0], [1], [0, 0, 1, 1], [], []>} : vector<8x16xf32>, vector<16x32xf32>, vector<8x32xf32> -> vector<8x32xf32>
    %211 = vector.broadcast %7 : vector<1x32xf32> to vector<8x32xf32>
    %212 = arith.mulf %210, %211 : vector<8x32xf32>
    %213 = arith.addf %196, %212 : vector<8x32xf32>
    %214 = vector.broadcast %14 : vector<1x32xf32> to vector<8x32xf32>
    %215 = arith.mulf %193, %214 : vector<8x32xf32>
    %cst_77 = arith.constant dense<0.000000e+00> : vector<8x16xf32>
    %216 = tpu.matmul %215, %194, %cst_77 {dimension_numbers = #tpu.dot_dimension_numbers<[1], [1], [0], [0], [0, 0, 1, 0], [], []>} : vector<8x32xf32>, vector<16x32xf32>, vector<8x16xf32> -> vector<8x16xf32>
    %cst_78 = arith.constant dense<0xFF800000> : vector<8xf32>
    %217 = vector.multi_reduction <maximumf>, %216, %cst_78 [1] : vector<8x16xf32> to vector<8xf32>
    %218 = vector.shape_cast %217 : vector<8xf32> to vector<8x1xf32>
    %219 = vector.broadcast %218 : vector<8x1xf32> to vector<8x16xf32>
    %220 = arith.subf %216, %219 : vector<8x16xf32>
    %221 = math.exp %220 : vector<8x16xf32>
    %cst_79 = arith.constant dense<0.000000e+00> : vector<8xf32>
    %222 = vector.multi_reduction <add>, %221, %cst_79 [1] : vector<8x16xf32> to vector<8xf32>
    %223 = vector.shape_cast %222 : vector<8xf32> to vector<8x1xf32>
    %224 = tpu.reciprocal %223 : vector<8x1xf32> -> vector<8x1xf32>
    %225 = vector.broadcast %224 : vector<8x1xf32> to vector<8x16xf32>
    %226 = arith.mulf %221, %225 : vector<8x16xf32>
    %cst_80 = arith.constant dense<0.000000e+00> : vector<8x32xf32>
    %227 = tpu.matmul %226, %195, %cst_80 {dimension_numbers = #tpu.dot_dimension_numbers<[1], [0], [0], [1], [0, 0, 1, 1], [], []>} : vector<8x16xf32>, vector<16x32xf32>, vector<8x32xf32> -> vector<8x32xf32>
    %228 = vector.broadcast %14 : vector<1x32xf32> to vector<8x32xf32>
    %229 = arith.mulf %227, %228 : vector<8x32xf32>
    %230 = arith.addf %213, %229 : vector<8x32xf32>
    %231 = vector.extract_strided_slice %107 {offsets = [48, 0], sizes = [16, 96], strides = [1, 1]} : vector<64x96xf32> to vector<16x96xf32>
    %232 = vector.extract_strided_slice %231 {offsets = [8, 0], sizes = [8, 32], strides = [1, 1]} : vector<16x96xf32> to vector<8x32xf32>
    %cst_81 = arith.constant 2.500000e-01 : f32
    %233 = vector.broadcast %cst_81 : f32 to vector<8x32xf32>
    %234 = arith.mulf %232, %233 : vector<8x32xf32>
    %235 = vector.extract_strided_slice %231 {offsets = [0, 32], sizes = [16, 32], strides = [1, 1]} : vector<16x96xf32> to vector<16x32xf32>
    %236 = vector.extract_strided_slice %231 {offsets = [0, 64], sizes = [16, 32], strides = [1, 1]} : vector<16x96xf32> to vector<16x32xf32>
    %cst_82 = arith.constant 0.000000e+00 : f32
    %237 = vector.broadcast %cst_82 : f32 to vector<8x32xf32>
    %238 = vector.broadcast %7 : vector<1x32xf32> to vector<8x32xf32>
    %239 = arith.mulf %234, %238 : vector<8x32xf32>
    %cst_83 = arith.constant dense<0.000000e+00> : vector<8x16xf32>
    %240 = tpu.matmul %239, %235, %cst_83 {dimension_numbers = #tpu.dot_dimension_numbers<[1], [1], [0], [0], [0, 0, 1, 0], [], []>} : vector<8x32xf32>, vector<16x32xf32>, vector<8x16xf32> -> vector<8x16xf32>
    %cst_84 = arith.constant dense<0xFF800000> : vector<8xf32>
    %241 = vector.multi_reduction <maximumf>, %240, %cst_84 [1] : vector<8x16xf32> to vector<8xf32>
    %242 = vector.shape_cast %241 : vector<8xf32> to vector<8x1xf32>
    %243 = vector.broadcast %242 : vector<8x1xf32> to vector<8x16xf32>
    %244 = arith.subf %240, %243 : vector<8x16xf32>
    %245 = math.exp %244 : vector<8x16xf32>
    %cst_85 = arith.constant dense<0.000000e+00> : vector<8xf32>
    %246 = vector.multi_reduction <add>, %245, %cst_85 [1] : vector<8x16xf32> to vector<8xf32>
    %247 = vector.shape_cast %246 : vector<8xf32> to vector<8x1xf32>
    %248 = tpu.reciprocal %247 : vector<8x1xf32> -> vector<8x1xf32>
    %249 = vector.broadcast %248 : vector<8x1xf32> to vector<8x16xf32>
    %250 = arith.mulf %245, %249 : vector<8x16xf32>
    %cst_86 = arith.constant dense<0.000000e+00> : vector<8x32xf32>
    %251 = tpu.matmul %250, %236, %cst_86 {dimension_numbers = #tpu.dot_dimension_numbers<[1], [0], [0], [1], [0, 0, 1, 1], [], []>} : vector<8x16xf32>, vector<16x32xf32>, vector<8x32xf32> -> vector<8x32xf32>
    %252 = vector.broadcast %7 : vector<1x32xf32> to vector<8x32xf32>
    %253 = arith.mulf %251, %252 : vector<8x32xf32>
    %254 = arith.addf %237, %253 : vector<8x32xf32>
    %255 = vector.broadcast %14 : vector<1x32xf32> to vector<8x32xf32>
    %256 = arith.mulf %234, %255 : vector<8x32xf32>
    %cst_87 = arith.constant dense<0.000000e+00> : vector<8x16xf32>
    %257 = tpu.matmul %256, %235, %cst_87 {dimension_numbers = #tpu.dot_dimension_numbers<[1], [1], [0], [0], [0, 0, 1, 0], [], []>} : vector<8x32xf32>, vector<16x32xf32>, vector<8x16xf32> -> vector<8x16xf32>
    %cst_88 = arith.constant dense<0xFF800000> : vector<8xf32>
    %258 = vector.multi_reduction <maximumf>, %257, %cst_88 [1] : vector<8x16xf32> to vector<8xf32>
    %259 = vector.shape_cast %258 : vector<8xf32> to vector<8x1xf32>
    %260 = vector.broadcast %259 : vector<8x1xf32> to vector<8x16xf32>
    %261 = arith.subf %257, %260 : vector<8x16xf32>
    %262 = math.exp %261 : vector<8x16xf32>
    %cst_89 = arith.constant dense<0.000000e+00> : vector<8xf32>
    %263 = vector.multi_reduction <add>, %262, %cst_89 [1] : vector<8x16xf32> to vector<8xf32>
    %264 = vector.shape_cast %263 : vector<8xf32> to vector<8x1xf32>
    %265 = tpu.reciprocal %264 : vector<8x1xf32> -> vector<8x1xf32>
    %266 = vector.broadcast %265 : vector<8x1xf32> to vector<8x16xf32>
    %267 = arith.mulf %262, %266 : vector<8x16xf32>
    %cst_90 = arith.constant dense<0.000000e+00> : vector<8x32xf32>
    %268 = tpu.matmul %267, %236, %cst_90 {dimension_numbers = #tpu.dot_dimension_numbers<[1], [0], [0], [1], [0, 0, 1, 1], [], []>} : vector<8x16xf32>, vector<16x32xf32>, vector<8x32xf32> -> vector<8x32xf32>
    %269 = vector.broadcast %14 : vector<1x32xf32> to vector<8x32xf32>
    %270 = arith.mulf %268, %269 : vector<8x32xf32>
    %271 = arith.addf %254, %270 : vector<8x32xf32>
    %272 = tpu.concatenate %148, %189, %230, %271 in 0 : vector<8x32xf32>, vector<8x32xf32>, vector<8x32xf32>, vector<8x32xf32> -> vector<32x32xf32>
    %c0_91 = arith.constant 0 : index
    %c0_92 = arith.constant 0 : index
    %c0_93 = arith.constant 0 : index
    %273 = vector.load %arg8[%c0_91, %c0_92, %c0_93] : memref<2x32x32xf32, #tpu.memory_space<vmem>>, vector<1x32x32xf32>
    %274 = vector.shape_cast %273 : vector<1x32x32xf32> to vector<32x32xf32>
    %cst_94 = arith.constant dense<0.000000e+00> : vector<32x32xf32>
    %275 = tpu.matmul %272, %274, %cst_94 {dimension_numbers = #tpu.dot_dimension_numbers<[1], [0], [0], [1], [0, 0, 1, 1], [], []>} : vector<32x32xf32>, vector<32x32xf32>, vector<32x32xf32> -> vector<32x32xf32>
    %276 = arith.addf %35, %275 : vector<32x32xf32>
    %c0_95 = arith.constant 0 : index
    %c0_96 = arith.constant 0 : index
    %c0_97 = arith.constant 0 : index
    %277 = vector.load %arg9[%c0_95, %c0_96, %c0_97] : memref<2x1x32xf32, #tpu.memory_space<vmem>>, vector<1x1x32xf32>
    %278 = vector.shape_cast %277 : vector<1x1x32xf32> to vector<1x32xf32>
    %c0_98 = arith.constant 0 : index
    %c0_99 = arith.constant 0 : index
    %c0_100 = arith.constant 0 : index
    %279 = vector.load %arg10[%c0_98, %c0_99, %c0_100] : memref<2x1x32xf32, #tpu.memory_space<vmem>>, vector<1x1x32xf32>
    %280 = vector.shape_cast %279 : vector<1x1x32xf32> to vector<1x32xf32>
    %cst_101 = arith.constant dense<0.000000e+00> : vector<32xf32>
    %281 = vector.multi_reduction <add>, %276, %cst_101 [1] : vector<32x32xf32> to vector<32xf32>
    %282 = vector.shape_cast %281 : vector<32xf32> to vector<32x1xf32>
    %cst_102 = arith.constant 3.200000e+01 : f32
    %283 = vector.broadcast %cst_102 : f32 to vector<32x1xf32>
    %284 = arith.divf %282, %283 : vector<32x1xf32>
    %285 = vector.broadcast %284 : vector<32x1xf32> to vector<32x32xf32>
    %286 = arith.subf %276, %285 : vector<32x32xf32>
    %287 = arith.mulf %286, %286 : vector<32x32xf32>
    %cst_103 = arith.constant dense<0.000000e+00> : vector<32xf32>
    %288 = vector.multi_reduction <add>, %287, %cst_103 [1] : vector<32x32xf32> to vector<32xf32>
    %289 = vector.shape_cast %288 : vector<32xf32> to vector<32x1xf32>
    %cst_104 = arith.constant 3.200000e+01 : f32
    %290 = vector.broadcast %cst_104 : f32 to vector<32x1xf32>
    %291 = arith.divf %289, %290 : vector<32x1xf32>
    %292 = vector.broadcast %284 : vector<32x1xf32> to vector<32x32xf32>
    %293 = arith.subf %276, %292 : vector<32x32xf32>
    %cst_105 = arith.constant 9.99999974E-6 : f32
    %294 = vector.broadcast %cst_105 : f32 to vector<32x1xf32>
    %295 = arith.addf %291, %294 : vector<32x1xf32>
    %296 = math.rsqrt %295 : vector<32x1xf32>
    %297 = vector.broadcast %296 : vector<32x1xf32> to vector<32x32xf32>
    %298 = arith.mulf %293, %297 : vector<32x32xf32>
    %299 = vector.broadcast %278 : vector<1x32xf32> to vector<32x32xf32>
    %300 = arith.mulf %298, %299 : vector<32x32xf32>
    %301 = vector.broadcast %280 : vector<1x32xf32> to vector<32x32xf32>
    %302 = arith.addf %300, %301 : vector<32x32xf32>
    %c0_106 = arith.constant 0 : index
    %c0_107 = arith.constant 0 : index
    %c0_108 = arith.constant 0 : index
    %303 = vector.load %arg11[%c0_106, %c0_107, %c0_108] : memref<2x32x128xf32, #tpu.memory_space<vmem>>, vector<1x32x128xf32>
    %304 = vector.shape_cast %303 : vector<1x32x128xf32> to vector<32x128xf32>
    %cst_109 = arith.constant dense<0.000000e+00> : vector<32x128xf32>
    %305 = tpu.matmul %302, %304, %cst_109 {dimension_numbers = #tpu.dot_dimension_numbers<[1], [0], [0], [1], [0, 0, 1, 1], [], []>} : vector<32x32xf32>, vector<32x128xf32>, vector<32x128xf32> -> vector<32x128xf32>
    %cst_110 = arith.constant 5.000000e-01 : f32
    %306 = vector.broadcast %cst_110 : f32 to vector<32x128xf32>
    %307 = arith.mulf %306, %305 : vector<32x128xf32>
    %cst_111 = arith.constant 0.707106769 : f32
    %308 = vector.broadcast %cst_111 : f32 to vector<32x128xf32>
    %309 = arith.mulf %305, %308 : vector<32x128xf32>
    %310 = math.erf %309 : vector<32x128xf32>
    %cst_112 = arith.constant 1.000000e+00 : f32
    %311 = vector.broadcast %cst_112 : f32 to vector<32x128xf32>
    %312 = arith.addf %311, %310 : vector<32x128xf32>
    %313 = arith.mulf %307, %312 : vector<32x128xf32>
    %c0_113 = arith.constant 0 : index
    %c0_114 = arith.constant 0 : index
    %c0_115 = arith.constant 0 : index
    %314 = vector.load %arg12[%c0_113, %c0_114, %c0_115] : memref<2x128x32xf32, #tpu.memory_space<vmem>>, vector<1x128x32xf32>
    %315 = vector.shape_cast %314 : vector<1x128x32xf32> to vector<128x32xf32>
    %cst_116 = arith.constant dense<0.000000e+00> : vector<32x32xf32>
    %316 = tpu.matmul %313, %315, %cst_116 {dimension_numbers = #tpu.dot_dimension_numbers<[1], [0], [0], [1], [0, 0, 1, 1], [], []>} : vector<32x128xf32>, vector<128x32xf32>, vector<32x32xf32> -> vector<32x32xf32>
    %317 = arith.addf %276, %316 : vector<32x32xf32>
    %c1_117 = arith.constant 1 : index
    %c0_118 = arith.constant 0 : index
    %c0_119 = arith.constant 0 : index
    %318 = vector.load %arg3[%c1_117, %c0_118, %c0_119] : memref<2x1x32xf32, #tpu.memory_space<vmem>>, vector<1x1x32xf32>
    %319 = vector.shape_cast %318 : vector<1x1x32xf32> to vector<1x32xf32>
    %c1_120 = arith.constant 1 : index
    %c0_121 = arith.constant 0 : index
    %c0_122 = arith.constant 0 : index
    %320 = vector.load %arg4[%c1_120, %c0_121, %c0_122] : memref<2x1x32xf32, #tpu.memory_space<vmem>>, vector<1x1x32xf32>
    %321 = vector.shape_cast %320 : vector<1x1x32xf32> to vector<1x32xf32>
    %cst_123 = arith.constant dense<0.000000e+00> : vector<32xf32>
    %322 = vector.multi_reduction <add>, %33, %cst_123 [1] : vector<32x32xf32> to vector<32xf32>
    %323 = vector.shape_cast %322 : vector<32xf32> to vector<32x1xf32>
    %cst_124 = arith.constant 3.200000e+01 : f32
    %324 = vector.broadcast %cst_124 : f32 to vector<32x1xf32>
    %325 = arith.divf %323, %324 : vector<32x1xf32>
    %326 = vector.broadcast %325 : vector<32x1xf32> to vector<32x32xf32>
    %327 = arith.subf %33, %326 : vector<32x32xf32>
    %328 = arith.mulf %327, %327 : vector<32x32xf32>
    %cst_125 = arith.constant dense<0.000000e+00> : vector<32xf32>
    %329 = vector.multi_reduction <add>, %328, %cst_125 [1] : vector<32x32xf32> to vector<32xf32>
    %330 = vector.shape_cast %329 : vector<32xf32> to vector<32x1xf32>
    %cst_126 = arith.constant 3.200000e+01 : f32
    %331 = vector.broadcast %cst_126 : f32 to vector<32x1xf32>
    %332 = arith.divf %330, %331 : vector<32x1xf32>
    %333 = vector.broadcast %325 : vector<32x1xf32> to vector<32x32xf32>
    %334 = arith.subf %33, %333 : vector<32x32xf32>
    %cst_127 = arith.constant 9.99999974E-6 : f32
    %335 = vector.broadcast %cst_127 : f32 to vector<32x1xf32>
    %336 = arith.addf %332, %335 : vector<32x1xf32>
    %337 = math.rsqrt %336 : vector<32x1xf32>
    %338 = vector.broadcast %337 : vector<32x1xf32> to vector<32x32xf32>
    %339 = arith.mulf %334, %338 : vector<32x32xf32>
    %340 = vector.broadcast %319 : vector<1x32xf32> to vector<32x32xf32>
    %341 = arith.mulf %339, %340 : vector<32x32xf32>
    %342 = vector.broadcast %321 : vector<1x32xf32> to vector<32x32xf32>
    %343 = arith.addf %341, %342 : vector<32x32xf32>
    %c1_128 = arith.constant 1 : index
    %c0_129 = arith.constant 0 : index
    %c0_130 = arith.constant 0 : index
    %344 = vector.load %arg5[%c1_128, %c0_129, %c0_130] : memref<2x1x32xf32, #tpu.memory_space<vmem>>, vector<1x1x32xf32>
    %345 = vector.shape_cast %344 : vector<1x1x32xf32> to vector<1x32xf32>
    %c1_131 = arith.constant 1 : index
    %c0_132 = arith.constant 0 : index
    %c0_133 = arith.constant 0 : index
    %346 = vector.load %arg6[%c1_131, %c0_132, %c0_133] : memref<2x1x32xf32, #tpu.memory_space<vmem>>, vector<1x1x32xf32>
    %347 = vector.shape_cast %346 : vector<1x1x32xf32> to vector<1x32xf32>
    %cst_134 = arith.constant dense<0.000000e+00> : vector<32xf32>
    %348 = vector.multi_reduction <add>, %317, %cst_134 [1] : vector<32x32xf32> to vector<32xf32>
    %349 = vector.shape_cast %348 : vector<32xf32> to vector<32x1xf32>
    %cst_135 = arith.constant 3.200000e+01 : f32
    %350 = vector.broadcast %cst_135 : f32 to vector<32x1xf32>
    %351 = arith.divf %349, %350 : vector<32x1xf32>
    %352 = vector.broadcast %351 : vector<32x1xf32> to vector<32x32xf32>
    %353 = arith.subf %317, %352 : vector<32x32xf32>
    %354 = arith.mulf %353, %353 : vector<32x32xf32>
    %cst_136 = arith.constant dense<0.000000e+00> : vector<32xf32>
    %355 = vector.multi_reduction <add>, %354, %cst_136 [1] : vector<32x32xf32> to vector<32xf32>
    %356 = vector.shape_cast %355 : vector<32xf32> to vector<32x1xf32>
    %cst_137 = arith.constant 3.200000e+01 : f32
    %357 = vector.broadcast %cst_137 : f32 to vector<32x1xf32>
    %358 = arith.divf %356, %357 : vector<32x1xf32>
    %359 = vector.broadcast %351 : vector<32x1xf32> to vector<32x32xf32>
    %360 = arith.subf %317, %359 : vector<32x32xf32>
    %cst_138 = arith.constant 9.99999974E-6 : f32
    %361 = vector.broadcast %cst_138 : f32 to vector<32x1xf32>
    %362 = arith.addf %358, %361 : vector<32x1xf32>
    %363 = math.rsqrt %362 : vector<32x1xf32>
    %364 = vector.broadcast %363 : vector<32x1xf32> to vector<32x32xf32>
    %365 = arith.mulf %360, %364 : vector<32x32xf32>
    %366 = vector.broadcast %345 : vector<1x32xf32> to vector<32x32xf32>
    %367 = arith.mulf %365, %366 : vector<32x32xf32>
    %368 = vector.broadcast %347 : vector<1x32xf32> to vector<32x32xf32>
    %369 = arith.addf %367, %368 : vector<32x32xf32>
    %370 = vector.extract_strided_slice %343 {offsets = [0, 0], sizes = [8, 32], strides = [1, 1]} : vector<32x32xf32> to vector<8x32xf32>
    %c0_139 = arith.constant 0 : index
    %c0_140 = arith.constant 0 : index
    %371 = vector.load %arg16[%c0_139, %c0_140] : memref<64x32xf32, #tpu.memory_space<vmem>>, vector<8x32xf32>
    tpu.vector_store %arg16[%c0_139, %c0_140], %370 {strides = array<i32>} : memref<64x32xf32, #tpu.memory_space<vmem>>, vector<8x32xf32>,
    %372 = vector.extract_strided_slice %369 {offsets = [0, 0], sizes = [8, 32], strides = [1, 1]} : vector<32x32xf32> to vector<8x32xf32>
    %c8_141 = arith.constant 8 : index
    %c0_142 = arith.constant 0 : index
    %373 = vector.load %arg16[%c8_141, %c0_142] : memref<64x32xf32, #tpu.memory_space<vmem>>, vector<8x32xf32>
    tpu.vector_store %arg16[%c8_141, %c0_142], %372 {strides = array<i32>} : memref<64x32xf32, #tpu.memory_space<vmem>>, vector<8x32xf32>,
    %374 = vector.extract_strided_slice %343 {offsets = [8, 0], sizes = [8, 32], strides = [1, 1]} : vector<32x32xf32> to vector<8x32xf32>
    %c16_143 = arith.constant 16 : index
    %c0_144 = arith.constant 0 : index
    %375 = vector.load %arg16[%c16_143, %c0_144] : memref<64x32xf32, #tpu.memory_space<vmem>>, vector<8x32xf32>
    tpu.vector_store %arg16[%c16_143, %c0_144], %374 {strides = array<i32>} : memref<64x32xf32, #tpu.memory_space<vmem>>, vector<8x32xf32>,
    %376 = vector.extract_strided_slice %369 {offsets = [8, 0], sizes = [8, 32], strides = [1, 1]} : vector<32x32xf32> to vector<8x32xf32>
    %c24_145 = arith.constant 24 : index
    %c0_146 = arith.constant 0 : index
    %377 = vector.load %arg16[%c24_145, %c0_146] : memref<64x32xf32, #tpu.memory_space<vmem>>, vector<8x32xf32>
    tpu.vector_store %arg16[%c24_145, %c0_146], %376 {strides = array<i32>} : memref<64x32xf32, #tpu.memory_space<vmem>>, vector<8x32xf32>,
    %378 = vector.extract_strided_slice %343 {offsets = [16, 0], sizes = [8, 32], strides = [1, 1]} : vector<32x32xf32> to vector<8x32xf32>
    %c32_147 = arith.constant 32 : index
    %c0_148 = arith.constant 0 : index
    %379 = vector.load %arg16[%c32_147, %c0_148] : memref<64x32xf32, #tpu.memory_space<vmem>>, vector<8x32xf32>
    tpu.vector_store %arg16[%c32_147, %c0_148], %378 {strides = array<i32>} : memref<64x32xf32, #tpu.memory_space<vmem>>, vector<8x32xf32>,
    %380 = vector.extract_strided_slice %369 {offsets = [16, 0], sizes = [8, 32], strides = [1, 1]} : vector<32x32xf32> to vector<8x32xf32>
    %c40_149 = arith.constant 40 : index
    %c0_150 = arith.constant 0 : index
    %381 = vector.load %arg16[%c40_149, %c0_150] : memref<64x32xf32, #tpu.memory_space<vmem>>, vector<8x32xf32>
    tpu.vector_store %arg16[%c40_149, %c0_150], %380 {strides = array<i32>} : memref<64x32xf32, #tpu.memory_space<vmem>>, vector<8x32xf32>,
    %382 = vector.extract_strided_slice %343 {offsets = [24, 0], sizes = [8, 32], strides = [1, 1]} : vector<32x32xf32> to vector<8x32xf32>
    %c48_151 = arith.constant 48 : index
    %c0_152 = arith.constant 0 : index
    %383 = vector.load %arg16[%c48_151, %c0_152] : memref<64x32xf32, #tpu.memory_space<vmem>>, vector<8x32xf32>
    tpu.vector_store %arg16[%c48_151, %c0_152], %382 {strides = array<i32>} : memref<64x32xf32, #tpu.memory_space<vmem>>, vector<8x32xf32>,
    %384 = vector.extract_strided_slice %369 {offsets = [24, 0], sizes = [8, 32], strides = [1, 1]} : vector<32x32xf32> to vector<8x32xf32>
    %c56_153 = arith.constant 56 : index
    %c0_154 = arith.constant 0 : index
    %385 = vector.load %arg16[%c56_153, %c0_154] : memref<64x32xf32, #tpu.memory_space<vmem>>, vector<8x32xf32>
    tpu.vector_store %arg16[%c56_153, %c0_154], %384 {strides = array<i32>} : memref<64x32xf32, #tpu.memory_space<vmem>>, vector<8x32xf32>,
    %c0_155 = arith.constant 0 : index
    %c0_156 = arith.constant 0 : index
    %386 = vector.load %arg16[%c0_155, %c0_156] : memref<64x32xf32, #tpu.memory_space<vmem>>, vector<64x32xf32>
    %c1_157 = arith.constant 1 : index
    %c0_158 = arith.constant 0 : index
    %c0_159 = arith.constant 0 : index
    %387 = vector.load %arg7[%c1_157, %c0_158, %c0_159] : memref<2x32x96xf32, #tpu.memory_space<vmem>>, vector<1x32x96xf32>
    %388 = vector.shape_cast %387 : vector<1x32x96xf32> to vector<32x96xf32>
    %cst_160 = arith.constant dense<0.000000e+00> : vector<64x96xf32>
    %389 = tpu.matmul %386, %388, %cst_160 {dimension_numbers = #tpu.dot_dimension_numbers<[1], [0], [0], [1], [0, 0, 1, 1], [], []>} : vector<64x32xf32>, vector<32x96xf32>, vector<64x96xf32> -> vector<64x96xf32>
    %390 = vector.extract_strided_slice %389 {offsets = [0, 0], sizes = [16, 96], strides = [1, 1]} : vector<64x96xf32> to vector<16x96xf32>
    %391 = vector.extract_strided_slice %390 {offsets = [8, 0], sizes = [8, 32], strides = [1, 1]} : vector<16x96xf32> to vector<8x32xf32>
    %cst_161 = arith.constant 2.500000e-01 : f32
    %392 = vector.broadcast %cst_161 : f32 to vector<8x32xf32>
    %393 = arith.mulf %391, %392 : vector<8x32xf32>
    %394 = vector.extract_strided_slice %390 {offsets = [0, 32], sizes = [16, 32], strides = [1, 1]} : vector<16x96xf32> to vector<16x32xf32>
    %395 = vector.extract_strided_slice %390 {offsets = [0, 64], sizes = [16, 32], strides = [1, 1]} : vector<16x96xf32> to vector<16x32xf32>
    %cst_162 = arith.constant 0.000000e+00 : f32
    %396 = vector.broadcast %cst_162 : f32 to vector<8x32xf32>
    %397 = vector.broadcast %7 : vector<1x32xf32> to vector<8x32xf32>
    %398 = arith.mulf %393, %397 : vector<8x32xf32>
    %cst_163 = arith.constant dense<0.000000e+00> : vector<8x16xf32>
    %399 = tpu.matmul %398, %394, %cst_163 {dimension_numbers = #tpu.dot_dimension_numbers<[1], [1], [0], [0], [0, 0, 1, 0], [], []>} : vector<8x32xf32>, vector<16x32xf32>, vector<8x16xf32> -> vector<8x16xf32>
    %cst_164 = arith.constant dense<0xFF800000> : vector<8xf32>
    %400 = vector.multi_reduction <maximumf>, %399, %cst_164 [1] : vector<8x16xf32> to vector<8xf32>
    %401 = vector.shape_cast %400 : vector<8xf32> to vector<8x1xf32>
    %402 = vector.broadcast %401 : vector<8x1xf32> to vector<8x16xf32>
    %403 = arith.subf %399, %402 : vector<8x16xf32>
    %404 = math.exp %403 : vector<8x16xf32>
    %cst_165 = arith.constant dense<0.000000e+00> : vector<8xf32>
    %405 = vector.multi_reduction <add>, %404, %cst_165 [1] : vector<8x16xf32> to vector<8xf32>
    %406 = vector.shape_cast %405 : vector<8xf32> to vector<8x1xf32>
    %407 = tpu.reciprocal %406 : vector<8x1xf32> -> vector<8x1xf32>
    %408 = vector.broadcast %407 : vector<8x1xf32> to vector<8x16xf32>
    %409 = arith.mulf %404, %408 : vector<8x16xf32>
    %cst_166 = arith.constant dense<0.000000e+00> : vector<8x32xf32>
    %410 = tpu.matmul %409, %395, %cst_166 {dimension_numbers = #tpu.dot_dimension_numbers<[1], [0], [0], [1], [0, 0, 1, 1], [], []>} : vector<8x16xf32>, vector<16x32xf32>, vector<8x32xf32> -> vector<8x32xf32>
    %411 = vector.broadcast %7 : vector<1x32xf32> to vector<8x32xf32>
    %412 = arith.mulf %410, %411 : vector<8x32xf32>
    %413 = arith.addf %396, %412 : vector<8x32xf32>
    %414 = vector.broadcast %14 : vector<1x32xf32> to vector<8x32xf32>
    %415 = arith.mulf %393, %414 : vector<8x32xf32>
    %cst_167 = arith.constant dense<0.000000e+00> : vector<8x16xf32>
    %416 = tpu.matmul %415, %394, %cst_167 {dimension_numbers = #tpu.dot_dimension_numbers<[1], [1], [0], [0], [0, 0, 1, 0], [], []>} : vector<8x32xf32>, vector<16x32xf32>, vector<8x16xf32> -> vector<8x16xf32>
    %cst_168 = arith.constant dense<0xFF800000> : vector<8xf32>
    %417 = vector.multi_reduction <maximumf>, %416, %cst_168 [1] : vector<8x16xf32> to vector<8xf32>
    %418 = vector.shape_cast %417 : vector<8xf32> to vector<8x1xf32>
    %419 = vector.broadcast %418 : vector<8x1xf32> to vector<8x16xf32>
    %420 = arith.subf %416, %419 : vector<8x16xf32>
    %421 = math.exp %420 : vector<8x16xf32>
    %cst_169 = arith.constant dense<0.000000e+00> : vector<8xf32>
    %422 = vector.multi_reduction <add>, %421, %cst_169 [1] : vector<8x16xf32> to vector<8xf32>
    %423 = vector.shape_cast %422 : vector<8xf32> to vector<8x1xf32>
    %424 = tpu.reciprocal %423 : vector<8x1xf32> -> vector<8x1xf32>
    %425 = vector.broadcast %424 : vector<8x1xf32> to vector<8x16xf32>
    %426 = arith.mulf %421, %425 : vector<8x16xf32>
    %cst_170 = arith.constant dense<0.000000e+00> : vector<8x32xf32>
    %427 = tpu.matmul %426, %395, %cst_170 {dimension_numbers = #tpu.dot_dimension_numbers<[1], [0], [0], [1], [0, 0, 1, 1], [], []>} : vector<8x16xf32>, vector<16x32xf32>, vector<8x32xf32> -> vector<8x32xf32>
    %428 = vector.broadcast %14 : vector<1x32xf32> to vector<8x32xf32>
    %429 = arith.mulf %427, %428 : vector<8x32xf32>
    %430 = arith.addf %413, %429 : vector<8x32xf32>
    %431 = vector.extract_strided_slice %389 {offsets = [16, 0], sizes = [16, 96], strides = [1, 1]} : vector<64x96xf32> to vector<16x96xf32>
    %432 = vector.extract_strided_slice %431 {offsets = [8, 0], sizes = [8, 32], strides = [1, 1]} : vector<16x96xf32> to vector<8x32xf32>
    %cst_171 = arith.constant 2.500000e-01 : f32
    %433 = vector.broadcast %cst_171 : f32 to vector<8x32xf32>
    %434 = arith.mulf %432, %433 : vector<8x32xf32>
    %435 = vector.extract_strided_slice %431 {offsets = [0, 32], sizes = [16, 32], strides = [1, 1]} : vector<16x96xf32> to vector<16x32xf32>
    %436 = vector.extract_strided_slice %431 {offsets = [0, 64], sizes = [16, 32], strides = [1, 1]} : vector<16x96xf32> to vector<16x32xf32>
    %cst_172 = arith.constant 0.000000e+00 : f32
    %437 = vector.broadcast %cst_172 : f32 to vector<8x32xf32>
    %438 = vector.broadcast %7 : vector<1x32xf32> to vector<8x32xf32>
    %439 = arith.mulf %434, %438 : vector<8x32xf32>
    %cst_173 = arith.constant dense<0.000000e+00> : vector<8x16xf32>
    %440 = tpu.matmul %439, %435, %cst_173 {dimension_numbers = #tpu.dot_dimension_numbers<[1], [1], [0], [0], [0, 0, 1, 0], [], []>} : vector<8x32xf32>, vector<16x32xf32>, vector<8x16xf32> -> vector<8x16xf32>
    %cst_174 = arith.constant dense<0xFF800000> : vector<8xf32>
    %441 = vector.multi_reduction <maximumf>, %440, %cst_174 [1] : vector<8x16xf32> to vector<8xf32>
    %442 = vector.shape_cast %441 : vector<8xf32> to vector<8x1xf32>
    %443 = vector.broadcast %442 : vector<8x1xf32> to vector<8x16xf32>
    %444 = arith.subf %440, %443 : vector<8x16xf32>
    %445 = math.exp %444 : vector<8x16xf32>
    %cst_175 = arith.constant dense<0.000000e+00> : vector<8xf32>
    %446 = vector.multi_reduction <add>, %445, %cst_175 [1] : vector<8x16xf32> to vector<8xf32>
    %447 = vector.shape_cast %446 : vector<8xf32> to vector<8x1xf32>
    %448 = tpu.reciprocal %447 : vector<8x1xf32> -> vector<8x1xf32>
    %449 = vector.broadcast %448 : vector<8x1xf32> to vector<8x16xf32>
    %450 = arith.mulf %445, %449 : vector<8x16xf32>
    %cst_176 = arith.constant dense<0.000000e+00> : vector<8x32xf32>
    %451 = tpu.matmul %450, %436, %cst_176 {dimension_numbers = #tpu.dot_dimension_numbers<[1], [0], [0], [1], [0, 0, 1, 1], [], []>} : vector<8x16xf32>, vector<16x32xf32>, vector<8x32xf32> -> vector<8x32xf32>
    %452 = vector.broadcast %7 : vector<1x32xf32> to vector<8x32xf32>
    %453 = arith.mulf %451, %452 : vector<8x32xf32>
    %454 = arith.addf %437, %453 : vector<8x32xf32>
    %455 = vector.broadcast %14 : vector<1x32xf32> to vector<8x32xf32>
    %456 = arith.mulf %434, %455 : vector<8x32xf32>
    %cst_177 = arith.constant dense<0.000000e+00> : vector<8x16xf32>
    %457 = tpu.matmul %456, %435, %cst_177 {dimension_numbers = #tpu.dot_dimension_numbers<[1], [1], [0], [0], [0, 0, 1, 0], [], []>} : vector<8x32xf32>, vector<16x32xf32>, vector<8x16xf32> -> vector<8x16xf32>
    %cst_178 = arith.constant dense<0xFF800000> : vector<8xf32>
    %458 = vector.multi_reduction <maximumf>, %457, %cst_178 [1] : vector<8x16xf32> to vector<8xf32>
    %459 = vector.shape_cast %458 : vector<8xf32> to vector<8x1xf32>
    %460 = vector.broadcast %459 : vector<8x1xf32> to vector<8x16xf32>
    %461 = arith.subf %457, %460 : vector<8x16xf32>
    %462 = math.exp %461 : vector<8x16xf32>
    %cst_179 = arith.constant dense<0.000000e+00> : vector<8xf32>
    %463 = vector.multi_reduction <add>, %462, %cst_179 [1] : vector<8x16xf32> to vector<8xf32>
    %464 = vector.shape_cast %463 : vector<8xf32> to vector<8x1xf32>
    %465 = tpu.reciprocal %464 : vector<8x1xf32> -> vector<8x1xf32>
    %466 = vector.broadcast %465 : vector<8x1xf32> to vector<8x16xf32>
    %467 = arith.mulf %462, %466 : vector<8x16xf32>
    %cst_180 = arith.constant dense<0.000000e+00> : vector<8x32xf32>
    %468 = tpu.matmul %467, %436, %cst_180 {dimension_numbers = #tpu.dot_dimension_numbers<[1], [0], [0], [1], [0, 0, 1, 1], [], []>} : vector<8x16xf32>, vector<16x32xf32>, vector<8x32xf32> -> vector<8x32xf32>
    %469 = vector.broadcast %14 : vector<1x32xf32> to vector<8x32xf32>
    %470 = arith.mulf %468, %469 : vector<8x32xf32>
    %471 = arith.addf %454, %470 : vector<8x32xf32>
    %472 = vector.extract_strided_slice %389 {offsets = [32, 0], sizes = [16, 96], strides = [1, 1]} : vector<64x96xf32> to vector<16x96xf32>
    %473 = vector.extract_strided_slice %472 {offsets = [8, 0], sizes = [8, 32], strides = [1, 1]} : vector<16x96xf32> to vector<8x32xf32>
    %cst_181 = arith.constant 2.500000e-01 : f32
    %474 = vector.broadcast %cst_181 : f32 to vector<8x32xf32>
    %475 = arith.mulf %473, %474 : vector<8x32xf32>
    %476 = vector.extract_strided_slice %472 {offsets = [0, 32], sizes = [16, 32], strides = [1, 1]} : vector<16x96xf32> to vector<16x32xf32>
    %477 = vector.extract_strided_slice %472 {offsets = [0, 64], sizes = [16, 32], strides = [1, 1]} : vector<16x96xf32> to vector<16x32xf32>
    %cst_182 = arith.constant 0.000000e+00 : f32
    %478 = vector.broadcast %cst_182 : f32 to vector<8x32xf32>
    %479 = vector.broadcast %7 : vector<1x32xf32> to vector<8x32xf32>
    %480 = arith.mulf %475, %479 : vector<8x32xf32>
    %cst_183 = arith.constant dense<0.000000e+00> : vector<8x16xf32>
    %481 = tpu.matmul %480, %476, %cst_183 {dimension_numbers = #tpu.dot_dimension_numbers<[1], [1], [0], [0], [0, 0, 1, 0], [], []>} : vector<8x32xf32>, vector<16x32xf32>, vector<8x16xf32> -> vector<8x16xf32>
    %cst_184 = arith.constant dense<0xFF800000> : vector<8xf32>
    %482 = vector.multi_reduction <maximumf>, %481, %cst_184 [1] : vector<8x16xf32> to vector<8xf32>
    %483 = vector.shape_cast %482 : vector<8xf32> to vector<8x1xf32>
    %484 = vector.broadcast %483 : vector<8x1xf32> to vector<8x16xf32>
    %485 = arith.subf %481, %484 : vector<8x16xf32>
    %486 = math.exp %485 : vector<8x16xf32>
    %cst_185 = arith.constant dense<0.000000e+00> : vector<8xf32>
    %487 = vector.multi_reduction <add>, %486, %cst_185 [1] : vector<8x16xf32> to vector<8xf32>
    %488 = vector.shape_cast %487 : vector<8xf32> to vector<8x1xf32>
    %489 = tpu.reciprocal %488 : vector<8x1xf32> -> vector<8x1xf32>
    %490 = vector.broadcast %489 : vector<8x1xf32> to vector<8x16xf32>
    %491 = arith.mulf %486, %490 : vector<8x16xf32>
    %cst_186 = arith.constant dense<0.000000e+00> : vector<8x32xf32>
    %492 = tpu.matmul %491, %477, %cst_186 {dimension_numbers = #tpu.dot_dimension_numbers<[1], [0], [0], [1], [0, 0, 1, 1], [], []>} : vector<8x16xf32>, vector<16x32xf32>, vector<8x32xf32> -> vector<8x32xf32>
    %493 = vector.broadcast %7 : vector<1x32xf32> to vector<8x32xf32>
    %494 = arith.mulf %492, %493 : vector<8x32xf32>
    %495 = arith.addf %478, %494 : vector<8x32xf32>
    %496 = vector.broadcast %14 : vector<1x32xf32> to vector<8x32xf32>
    %497 = arith.mulf %475, %496 : vector<8x32xf32>
    %cst_187 = arith.constant dense<0.000000e+00> : vector<8x16xf32>
    %498 = tpu.matmul %497, %476, %cst_187 {dimension_numbers = #tpu.dot_dimension_numbers<[1], [1], [0], [0], [0, 0, 1, 0], [], []>} : vector<8x32xf32>, vector<16x32xf32>, vector<8x16xf32> -> vector<8x16xf32>
    %cst_188 = arith.constant dense<0xFF800000> : vector<8xf32>
    %499 = vector.multi_reduction <maximumf>, %498, %cst_188 [1] : vector<8x16xf32> to vector<8xf32>
    %500 = vector.shape_cast %499 : vector<8xf32> to vector<8x1xf32>
    %501 = vector.broadcast %500 : vector<8x1xf32> to vector<8x16xf32>
    %502 = arith.subf %498, %501 : vector<8x16xf32>
    %503 = math.exp %502 : vector<8x16xf32>
    %cst_189 = arith.constant dense<0.000000e+00> : vector<8xf32>
    %504 = vector.multi_reduction <add>, %503, %cst_189 [1] : vector<8x16xf32> to vector<8xf32>
    %505 = vector.shape_cast %504 : vector<8xf32> to vector<8x1xf32>
    %506 = tpu.reciprocal %505 : vector<8x1xf32> -> vector<8x1xf32>
    %507 = vector.broadcast %506 : vector<8x1xf32> to vector<8x16xf32>
    %508 = arith.mulf %503, %507 : vector<8x16xf32>
    %cst_190 = arith.constant dense<0.000000e+00> : vector<8x32xf32>
    %509 = tpu.matmul %508, %477, %cst_190 {dimension_numbers = #tpu.dot_dimension_numbers<[1], [0], [0], [1], [0, 0, 1, 1], [], []>} : vector<8x16xf32>, vector<16x32xf32>, vector<8x32xf32> -> vector<8x32xf32>
    %510 = vector.broadcast %14 : vector<1x32xf32> to vector<8x32xf32>
    %511 = arith.mulf %509, %510 : vector<8x32xf32>
    %512 = arith.addf %495, %511 : vector<8x32xf32>
    %513 = vector.extract_strided_slice %389 {offsets = [48, 0], sizes = [16, 96], strides = [1, 1]} : vector<64x96xf32> to vector<16x96xf32>
    %514 = vector.extract_strided_slice %513 {offsets = [8, 0], sizes = [8, 32], strides = [1, 1]} : vector<16x96xf32> to vector<8x32xf32>
    %cst_191 = arith.constant 2.500000e-01 : f32
    %515 = vector.broadcast %cst_191 : f32 to vector<8x32xf32>
    %516 = arith.mulf %514, %515 : vector<8x32xf32>
    %517 = vector.extract_strided_slice %513 {offsets = [0, 32], sizes = [16, 32], strides = [1, 1]} : vector<16x96xf32> to vector<16x32xf32>
    %518 = vector.extract_strided_slice %513 {offsets = [0, 64], sizes = [16, 32], strides = [1, 1]} : vector<16x96xf32> to vector<16x32xf32>
    %cst_192 = arith.constant 0.000000e+00 : f32
    %519 = vector.broadcast %cst_192 : f32 to vector<8x32xf32>
    %520 = vector.broadcast %7 : vector<1x32xf32> to vector<8x32xf32>
    %521 = arith.mulf %516, %520 : vector<8x32xf32>
    %cst_193 = arith.constant dense<0.000000e+00> : vector<8x16xf32>
    %522 = tpu.matmul %521, %517, %cst_193 {dimension_numbers = #tpu.dot_dimension_numbers<[1], [1], [0], [0], [0, 0, 1, 0], [], []>} : vector<8x32xf32>, vector<16x32xf32>, vector<8x16xf32> -> vector<8x16xf32>
    %cst_194 = arith.constant dense<0xFF800000> : vector<8xf32>
    %523 = vector.multi_reduction <maximumf>, %522, %cst_194 [1] : vector<8x16xf32> to vector<8xf32>
    %524 = vector.shape_cast %523 : vector<8xf32> to vector<8x1xf32>
    %525 = vector.broadcast %524 : vector<8x1xf32> to vector<8x16xf32>
    %526 = arith.subf %522, %525 : vector<8x16xf32>
    %527 = math.exp %526 : vector<8x16xf32>
    %cst_195 = arith.constant dense<0.000000e+00> : vector<8xf32>
    %528 = vector.multi_reduction <add>, %527, %cst_195 [1] : vector<8x16xf32> to vector<8xf32>
    %529 = vector.shape_cast %528 : vector<8xf32> to vector<8x1xf32>
    %530 = tpu.reciprocal %529 : vector<8x1xf32> -> vector<8x1xf32>
    %531 = vector.broadcast %530 : vector<8x1xf32> to vector<8x16xf32>
    %532 = arith.mulf %527, %531 : vector<8x16xf32>
    %cst_196 = arith.constant dense<0.000000e+00> : vector<8x32xf32>
    %533 = tpu.matmul %532, %518, %cst_196 {dimension_numbers = #tpu.dot_dimension_numbers<[1], [0], [0], [1], [0, 0, 1, 1], [], []>} : vector<8x16xf32>, vector<16x32xf32>, vector<8x32xf32> -> vector<8x32xf32>
    %534 = vector.broadcast %7 : vector<1x32xf32> to vector<8x32xf32>
    %535 = arith.mulf %533, %534 : vector<8x32xf32>
    %536 = arith.addf %519, %535 : vector<8x32xf32>
    %537 = vector.broadcast %14 : vector<1x32xf32> to vector<8x32xf32>
    %538 = arith.mulf %516, %537 : vector<8x32xf32>
    %cst_197 = arith.constant dense<0.000000e+00> : vector<8x16xf32>
    %539 = tpu.matmul %538, %517, %cst_197 {dimension_numbers = #tpu.dot_dimension_numbers<[1], [1], [0], [0], [0, 0, 1, 0], [], []>} : vector<8x32xf32>, vector<16x32xf32>, vector<8x16xf32> -> vector<8x16xf32>
    %cst_198 = arith.constant dense<0xFF800000> : vector<8xf32>
    %540 = vector.multi_reduction <maximumf>, %539, %cst_198 [1] : vector<8x16xf32> to vector<8xf32>
    %541 = vector.shape_cast %540 : vector<8xf32> to vector<8x1xf32>
    %542 = vector.broadcast %541 : vector<8x1xf32> to vector<8x16xf32>
    %543 = arith.subf %539, %542 : vector<8x16xf32>
    %544 = math.exp %543 : vector<8x16xf32>
    %cst_199 = arith.constant dense<0.000000e+00> : vector<8xf32>
    %545 = vector.multi_reduction <add>, %544, %cst_199 [1] : vector<8x16xf32> to vector<8xf32>
    %546 = vector.shape_cast %545 : vector<8xf32> to vector<8x1xf32>
    %547 = tpu.reciprocal %546 : vector<8x1xf32> -> vector<8x1xf32>
    %548 = vector.broadcast %547 : vector<8x1xf32> to vector<8x16xf32>
    %549 = arith.mulf %544, %548 : vector<8x16xf32>
    %cst_200 = arith.constant dense<0.000000e+00> : vector<8x32xf32>
    %550 = tpu.matmul %549, %518, %cst_200 {dimension_numbers = #tpu.dot_dimension_numbers<[1], [0], [0], [1], [0, 0, 1, 1], [], []>} : vector<8x16xf32>, vector<16x32xf32>, vector<8x32xf32> -> vector<8x32xf32>
    %551 = vector.broadcast %14 : vector<1x32xf32> to vector<8x32xf32>
    %552 = arith.mulf %550, %551 : vector<8x32xf32>
    %553 = arith.addf %536, %552 : vector<8x32xf32>
    %554 = tpu.concatenate %430, %471, %512, %553 in 0 : vector<8x32xf32>, vector<8x32xf32>, vector<8x32xf32>, vector<8x32xf32> -> vector<32x32xf32>
    %c1_201 = arith.constant 1 : index
    %c0_202 = arith.constant 0 : index
    %c0_203 = arith.constant 0 : index
    %555 = vector.load %arg8[%c1_201, %c0_202, %c0_203] : memref<2x32x32xf32, #tpu.memory_space<vmem>>, vector<1x32x32xf32>
    %556 = vector.shape_cast %555 : vector<1x32x32xf32> to vector<32x32xf32>
    %cst_204 = arith.constant dense<0.000000e+00> : vector<32x32xf32>
    %557 = tpu.matmul %554, %556, %cst_204 {dimension_numbers = #tpu.dot_dimension_numbers<[1], [0], [0], [1], [0, 0, 1, 1], [], []>} : vector<32x32xf32>, vector<32x32xf32>, vector<32x32xf32> -> vector<32x32xf32>
    %558 = arith.addf %317, %557 : vector<32x32xf32>
    %c1_205 = arith.constant 1 : index
    %c0_206 = arith.constant 0 : index
    %c0_207 = arith.constant 0 : index
    %559 = vector.load %arg9[%c1_205, %c0_206, %c0_207] : memref<2x1x32xf32, #tpu.memory_space<vmem>>, vector<1x1x32xf32>
    %560 = vector.shape_cast %559 : vector<1x1x32xf32> to vector<1x32xf32>
    %c1_208 = arith.constant 1 : index
    %c0_209 = arith.constant 0 : index
    %c0_210 = arith.constant 0 : index
    %561 = vector.load %arg10[%c1_208, %c0_209, %c0_210] : memref<2x1x32xf32, #tpu.memory_space<vmem>>, vector<1x1x32xf32>
    %562 = vector.shape_cast %561 : vector<1x1x32xf32> to vector<1x32xf32>
    %cst_211 = arith.constant dense<0.000000e+00> : vector<32xf32>
    %563 = vector.multi_reduction <add>, %558, %cst_211 [1] : vector<32x32xf32> to vector<32xf32>
    %564 = vector.shape_cast %563 : vector<32xf32> to vector<32x1xf32>
    %cst_212 = arith.constant 3.200000e+01 : f32
    %565 = vector.broadcast %cst_212 : f32 to vector<32x1xf32>
    %566 = arith.divf %564, %565 : vector<32x1xf32>
    %567 = vector.broadcast %566 : vector<32x1xf32> to vector<32x32xf32>
    %568 = arith.subf %558, %567 : vector<32x32xf32>
    %569 = arith.mulf %568, %568 : vector<32x32xf32>
    %cst_213 = arith.constant dense<0.000000e+00> : vector<32xf32>
    %570 = vector.multi_reduction <add>, %569, %cst_213 [1] : vector<32x32xf32> to vector<32xf32>
    %571 = vector.shape_cast %570 : vector<32xf32> to vector<32x1xf32>
    %cst_214 = arith.constant 3.200000e+01 : f32
    %572 = vector.broadcast %cst_214 : f32 to vector<32x1xf32>
    %573 = arith.divf %571, %572 : vector<32x1xf32>
    %574 = vector.broadcast %566 : vector<32x1xf32> to vector<32x32xf32>
    %575 = arith.subf %558, %574 : vector<32x32xf32>
    %cst_215 = arith.constant 9.99999974E-6 : f32
    %576 = vector.broadcast %cst_215 : f32 to vector<32x1xf32>
    %577 = arith.addf %573, %576 : vector<32x1xf32>
    %578 = math.rsqrt %577 : vector<32x1xf32>
    %579 = vector.broadcast %578 : vector<32x1xf32> to vector<32x32xf32>
    %580 = arith.mulf %575, %579 : vector<32x32xf32>
    %581 = vector.broadcast %560 : vector<1x32xf32> to vector<32x32xf32>
    %582 = arith.mulf %580, %581 : vector<32x32xf32>
    %583 = vector.broadcast %562 : vector<1x32xf32> to vector<32x32xf32>
    %584 = arith.addf %582, %583 : vector<32x32xf32>
    %c1_216 = arith.constant 1 : index
    %c0_217 = arith.constant 0 : index
    %c0_218 = arith.constant 0 : index
    %585 = vector.load %arg11[%c1_216, %c0_217, %c0_218] : memref<2x32x128xf32, #tpu.memory_space<vmem>>, vector<1x32x128xf32>
    %586 = vector.shape_cast %585 : vector<1x32x128xf32> to vector<32x128xf32>
    %cst_219 = arith.constant dense<0.000000e+00> : vector<32x128xf32>
    %587 = tpu.matmul %584, %586, %cst_219 {dimension_numbers = #tpu.dot_dimension_numbers<[1], [0], [0], [1], [0, 0, 1, 1], [], []>} : vector<32x32xf32>, vector<32x128xf32>, vector<32x128xf32> -> vector<32x128xf32>
    %cst_220 = arith.constant 5.000000e-01 : f32
    %588 = vector.broadcast %cst_220 : f32 to vector<32x128xf32>
    %589 = arith.mulf %588, %587 : vector<32x128xf32>
    %cst_221 = arith.constant 0.707106769 : f32
    %590 = vector.broadcast %cst_221 : f32 to vector<32x128xf32>
    %591 = arith.mulf %587, %590 : vector<32x128xf32>
    %592 = math.erf %591 : vector<32x128xf32>
    %cst_222 = arith.constant 1.000000e+00 : f32
    %593 = vector.broadcast %cst_222 : f32 to vector<32x128xf32>
    %594 = arith.addf %593, %592 : vector<32x128xf32>
    %595 = arith.mulf %589, %594 : vector<32x128xf32>
    %c1_223 = arith.constant 1 : index
    %c0_224 = arith.constant 0 : index
    %c0_225 = arith.constant 0 : index
    %596 = vector.load %arg12[%c1_223, %c0_224, %c0_225] : memref<2x128x32xf32, #tpu.memory_space<vmem>>, vector<1x128x32xf32>
    %597 = vector.shape_cast %596 : vector<1x128x32xf32> to vector<128x32xf32>
    %cst_226 = arith.constant dense<0.000000e+00> : vector<32x32xf32>
    %598 = tpu.matmul %595, %597, %cst_226 {dimension_numbers = #tpu.dot_dimension_numbers<[1], [0], [0], [1], [0, 0, 1, 1], [], []>} : vector<32x128xf32>, vector<128x32xf32>, vector<32x32xf32> -> vector<32x32xf32>
    %599 = arith.addf %558, %598 : vector<32x32xf32>
    %c0_227 = arith.constant 0 : index
    %c0_228 = arith.constant 0 : index
    %600 = vector.load %arg13[%c0_227, %c0_228] : memref<1x32xf32, #tpu.memory_space<vmem>>, vector<1x32xf32>
    %c0_229 = arith.constant 0 : index
    %c0_230 = arith.constant 0 : index
    %601 = vector.load %arg14[%c0_229, %c0_230] : memref<1x32xf32, #tpu.memory_space<vmem>>, vector<1x32xf32>
    %cst_231 = arith.constant dense<0.000000e+00> : vector<32xf32>
    %602 = vector.multi_reduction <add>, %599, %cst_231 [1] : vector<32x32xf32> to vector<32xf32>
    %603 = vector.shape_cast %602 : vector<32xf32> to vector<32x1xf32>
    %cst_232 = arith.constant 3.200000e+01 : f32
    %604 = vector.broadcast %cst_232 : f32 to vector<32x1xf32>
    %605 = arith.divf %603, %604 : vector<32x1xf32>
    %606 = vector.broadcast %605 : vector<32x1xf32> to vector<32x32xf32>
    %607 = arith.subf %599, %606 : vector<32x32xf32>
    %608 = arith.mulf %607, %607 : vector<32x32xf32>
    %cst_233 = arith.constant dense<0.000000e+00> : vector<32xf32>
    %609 = vector.multi_reduction <add>, %608, %cst_233 [1] : vector<32x32xf32> to vector<32xf32>
    %610 = vector.shape_cast %609 : vector<32xf32> to vector<32x1xf32>
    %cst_234 = arith.constant 3.200000e+01 : f32
    %611 = vector.broadcast %cst_234 : f32 to vector<32x1xf32>
    %612 = arith.divf %610, %611 : vector<32x1xf32>
    %613 = vector.broadcast %605 : vector<32x1xf32> to vector<32x32xf32>
    %614 = arith.subf %599, %613 : vector<32x32xf32>
    %cst_235 = arith.constant 9.99999974E-6 : f32
    %615 = vector.broadcast %cst_235 : f32 to vector<32x1xf32>
    %616 = arith.addf %612, %615 : vector<32x1xf32>
    %617 = math.rsqrt %616 : vector<32x1xf32>
    %618 = vector.broadcast %617 : vector<32x1xf32> to vector<32x32xf32>
    %619 = arith.mulf %614, %618 : vector<32x32xf32>
    %620 = vector.broadcast %600 : vector<1x32xf32> to vector<32x32xf32>
    %621 = arith.mulf %619, %620 : vector<32x32xf32>
    %622 = vector.broadcast %601 : vector<1x32xf32> to vector<32x32xf32>
    %623 = arith.addf %621, %622 : vector<32x32xf32>
    %c0_236 = arith.constant 0 : index
    %c0_237 = arith.constant 0 : index
    %624 = vector.load %arg15[%c0_236, %c0_237] : memref<32x32xf32, #tpu.memory_space<vmem>>, vector<32x32xf32>
    tpu.vector_store %arg15[%c0_236, %c0_237], %623 {strides = array<i32>} : memref<32x32xf32, #tpu.memory_space<vmem>>, vector<32x32xf32>,
    return
  }
}

</mosaic_0001>

<llo_original>
// kernel: augmentation_resampler.1
$region0: #{augmentation_resampler.1}
  #allocation0 [shape = 'u32[]', space=smem, size = 0x4, offset = 0x4, fixed_abs, tag = 'smem constant byte address 0x4 - core index']
  #allocation1 [shape = 'u32[144,128]{1,0:T(1,128)}', space=vmem, size = 0x12000, scoped, tag = 'internal scratch']
  #allocation2 [shape = 'f32[64,32]{1,0:T(8,128)}', space=vmem, size = 0x8000, scoped, tag = 'scratch operand']
  %s0 = inlined_call_operand.vmem [shape: f32[32,32], index: 0, kind: input, shape index: {}]
  %s1 = inlined_call_operand.vmem [shape: f32[8,32], index: 1, kind: input, shape index: {}]
  %s2 = inlined_call_operand.vmem [shape: f32[4,1,32], index: 2, kind: input, shape index: {}]
  %s3 = inlined_call_operand.vmem [shape: f32[2,1,32], index: 3, kind: input, shape index: {}]
  %s4 = inlined_call_operand.vmem [shape: f32[2,1,32], index: 4, kind: input, shape index: {}]
  %s5 = inlined_call_operand.vmem [shape: f32[2,1,32], index: 5, kind: input, shape index: {}]
  %s6 = inlined_call_operand.vmem [shape: f32[2,1,32], index: 6, kind: input, shape index: {}]
  %s7 = inlined_call_operand.vmem [shape: f32[2,32,96], index: 7, kind: input, shape index: {}]
  %s8 = inlined_call_operand.vmem [shape: f32[2,32,32], index: 8, kind: input, shape index: {}]
  %s9 = inlined_call_operand.vmem [shape: f32[2,1,32], index: 9, kind: input, shape index: {}]
  %s10 = inlined_call_operand.vmem [shape: f32[2,1,32], index: 10, kind: input, shape index: {}]
  %s11 = inlined_call_operand.vmem [shape: f32[2,32,128], index: 11, kind: input, shape index: {}]
  %s12 = inlined_call_operand.vmem [shape: f32[2,128,32], index: 12, kind: input, shape index: {}]
  %s13 = inlined_call_operand.vmem [shape: f32[1,32], index: 13, kind: input, shape index: {}]
  %s14 = inlined_call_operand.vmem [shape: f32[1,32], index: 14, kind: input, shape index: {}]
  %s15 = inlined_call_operand.hbm [shape: f32[32,32], index: 15, kind: output, shape index: {}]
  %s16 = sld [smem:[#allocation0]]
  $region70: #{augmentation_resampler.1} parent=0
    _
  %s18 = ssub.s32 1, %s16
  %s19 = scalar_select 0, %s18, %s16
  $region1: #{augmentation_resampler.1} parent=0
    #allocation3 [shape = 'u8[16384]{0}', space=vmem, size = 0x4000, scoped, tag = 'output window, operand 0, single buffered']
    #allocation4 [shape = 's32[1]{0}', space=sflag, size = 0x4, scoped, tag = 'scoped memory for augmentation_resampler.1']
    %20 = vsyncpa [#allocation4], 0
    // Predicated region
    $region2: #{augmentation_resampler.1} parent=1 // pred_check
      _
    $region3: #{augmentation_resampler.1} parent=1 // pred_check_branch
      %22 = sbr.rel (0) target = $region5
    $region4: #{augmentation_resampler.1} parent=1 // pred_region
      _
    $region5: #{augmentation_resampler.1} parent=1 // pred_fallthru
      _
    // Predicated region
    $region6: #{augmentation_resampler.1} parent=1 // pred_check
      _
    $region7: #{augmentation_resampler.1} parent=1 // pred_check_branch
      %24 = sbr.rel (0) target = $region9
    $region8: #{augmentation_resampler.1} parent=1 // pred_region
      _
    $region9: #{augmentation_resampler.1} parent=1 // pred_fallthru
      _
    // Predicated region
    $region10: #{augmentation_resampler.1} parent=1 // pred_check
      _
    $region11: #{augmentation_resampler.1} parent=1 // pred_check_branch
      %26 = sbr.rel (0) target = $region13
    $region12: #{augmentation_resampler.1} parent=1 // pred_region
      _
    $region13: #{augmentation_resampler.1} parent=1 // pred_fallthru
      _
    // Predicated region
    $region14: #{augmentation_resampler.1} parent=1 // pred_check
      _
    $region15: #{augmentation_resampler.1} parent=1 // pred_check_branch
      %28 = sbr.rel (0) target = $region17
    $region16: #{augmentation_resampler.1} parent=1 // pred_region
      _
    $region17: #{augmentation_resampler.1} parent=1 // pred_fallthru
      _
    // Predicated region
    $region18: #{augmentation_resampler.1} parent=1 // pred_check
      _
    $region19: #{augmentation_resampler.1} parent=1 // pred_check_branch
      %30 = sbr.rel (0) target = $region21
    $region20: #{augmentation_resampler.1} parent=1 // pred_region
      _
    $region21: #{augmentation_resampler.1} parent=1 // pred_fallthru
      _
    // Predicated region
    $region22: #{augmentation_resampler.1} parent=1 // pred_check
      _
    $region23: #{augmentation_resampler.1} parent=1 // pred_check_branch
      %32 = sbr.rel (0) target = $region25
    $region24: #{augmentation_resampler.1} parent=1 // pred_region
      _
    $region25: #{augmentation_resampler.1} parent=1 // pred_fallthru
      _
    // Predicated region
    $region26: #{augmentation_resampler.1} parent=1 // pred_check
      _
    $region27: #{augmentation_resampler.1} parent=1 // pred_check_branch
      %34 = sbr.rel (0) target = $region29
    $region28: #{augmentation_resampler.1} parent=1 // pred_region
      _
    $region29: #{augmentation_resampler.1} parent=1 // pred_fallthru
      _
    // Predicated region
    $region30: #{augmentation_resampler.1} parent=1 // pred_check
      _
    $region31: #{augmentation_resampler.1} parent=1 // pred_check_branch
      %36 = sbr.rel (0) target = $region33
    $region32: #{augmentation_resampler.1} parent=1 // pred_region
      _
    $region33: #{augmentation_resampler.1} parent=1 // pred_fallthru
      _
    // Predicated region
    $region34: #{augmentation_resampler.1} parent=1 // pred_check
      _
    $region35: #{augmentation_resampler.1} parent=1 // pred_check_branch
      %38 = sbr.rel (0) target = $region37
    $region36: #{augmentation_resampler.1} parent=1 // pred_region
      _
    $region37: #{augmentation_resampler.1} parent=1 // pred_fallthru
      _
    // Predicated region
    $region38: #{augmentation_resampler.1} parent=1 // pred_check
      _
    $region39: #{augmentation_resampler.1} parent=1 // pred_check_branch
      %40 = sbr.rel (0) target = $region41
    $region40: #{augmentation_resampler.1} parent=1 // pred_region
      _
    $region41: #{augmentation_resampler.1} parent=1 // pred_fallthru
      _
    // Predicated region
    $region42: #{augmentation_resampler.1} parent=1 // pred_check
      _
    $region43: #{augmentation_resampler.1} parent=1 // pred_check_branch
      %42 = sbr.rel (0) target = $region45
    $region44: #{augmentation_resampler.1} parent=1 // pred_region
      _
    $region45: #{augmentation_resampler.1} parent=1 // pred_fallthru
      _
    // Predicated region
    $region46: #{augmentation_resampler.1} parent=1 // pred_check
      _
    $region47: #{augmentation_resampler.1} parent=1 // pred_check_branch
      %44 = sbr.rel (0) target = $region49
    $region48: #{augmentation_resampler.1} parent=1 // pred_region
      _
    $region49: #{augmentation_resampler.1} parent=1 // pred_fallthru
      _
    // Predicated region
    $region50: #{augmentation_resampler.1} parent=1 // pred_check
      _
    $region51: #{augmentation_resampler.1} parent=1 // pred_check_branch
      %46 = sbr.rel (0) target = $region53
    $region52: #{augmentation_resampler.1} parent=1 // pred_region
      _
    $region53: #{augmentation_resampler.1} parent=1 // pred_fallthru
      _
    // Predicated region
    $region54: #{augmentation_resampler.1} parent=1 // pred_check
      _
    $region55: #{augmentation_resampler.1} parent=1 // pred_check_branch
      %48 = sbr.rel (0) target = $region57
    $region56: #{augmentation_resampler.1} parent=1 // pred_region
      _
    $region57: #{augmentation_resampler.1} parent=1 // pred_fallthru
      _
    // Predicated region
    $region58: #{augmentation_resampler.1} parent=1 // pred_check
      _
    $region59: #{augmentation_resampler.1} parent=1 // pred_check_branch
      %50 = sbr.rel (0) target = $region61
    $region60: #{augmentation_resampler.1} parent=1 // pred_region
      _
    $region61: #{augmentation_resampler.1} parent=1 // pred_fallthru
      _
    %v51 = vlaneseq
    %v52 = vand.u32 %v51, 127
    %vm53 = vcmp.ge.s32.totalorder %v52, 0
    %vm54 = vcmp.lt.s32.totalorder %v52, 16
    %vm55 = vmand %vm53, %vm54
    %v56 = vsel %vm55, 1, 0
    %v57 = vcvt.s32.f32 %v56
    %vm58 = vcmp.ge.s32.totalorder %v52, 16
    %vm59 = vcmp.lt.s32.totalorder %v52, 32
    %vm60 = vmand %vm58, %vm59
    %v61 = vsel %vm60, 1, 0
    %v62 = vcvt.s32.f32 %v61
    %v63 = vld [vmem:[%s2] sm:$0x1]
    %v65 = vlaneseq
    %v66 = vshrl.u32 %v65, 7
    %v67 = vsub.s32 0, %v66
    %v68 = vrot.slane %v63, %v67
    %s70 = scalar_lea.vmem %s2, 1
    %v71 = vld [vmem:[%s70] sm:$0x1]
    %v73 = vlaneseq
    %v74 = vshrl.u32 %v73, 7
    %v75 = vsub.s32 0, %v74
    %v76 = vrot.slane %v71, %v75
    %v78 = vld [vmem:[%s0] sm:$0xff]
    %v79 = vld [vmem:[%s0 + $0x8] sm:$0xff]
    %v80 = vld [vmem:[%s0 + $0x10] sm:$0xff]
    %v81 = vld [vmem:[%s0 + $0x18] sm:$0xff]
    %v82 = vadd.f32 %v78, %v68
    %v83 = vadd.f32 %v79, %v76
    %v84 = vadd.f32 %v80, %v68
    %v85 = vadd.f32 %v81, %v76
    %v86 = vld [vmem:[%s1] sm:$0xff]
    %v87 = vld [vmem:[%s3] sm:$0x1]
    %v88 = vld [vmem:[%s4] sm:$0x1]
    %vm89 = vcmask 261120
    %v90 = vsel %vm89, %v82, 0.0
    %91 = vadd.xlane.f32.xlu0 %v90
    %v92 = vpop.xlane.xlu0 %91
    %v93 = vsel %vm89, %v83, 0.0
    %94 = vadd.xlane.f32.xlu0 %v93
    %v95 = vpop.xlane.xlu0 %94
    %v96 = vsel %vm89, %v84, 0.0
    %97 = vadd.xlane.f32.xlu0 %v96
    %v98 = vpop.xlane.xlu0 %97
    %v99 = vsel %vm89, %v85, 0.0
    %100 = vadd.xlane.f32.xlu0 %v99
    %v101 = vpop.xlane.xlu0 %100
    %v102 = vrcp.pop 32.0
    %v103 = vmul.f32 %v92, %v102
    %v104 = vmul.f32 %v95, %v102
    %v105 = vmul.f32 %v98, %v102
    %v106 = vmul.f32 %v101, %v102
    %v107 = vsub.f32 %v82, %v103
    %v108 = vsub.f32 %v83, %v104
    %v109 = vsub.f32 %v84, %v105
    %v110 = vsub.f32 %v85, %v106
    %v111 = vmul.f32 %v107, %v107
    %v112 = vmul.f32 %v108, %v108
    %v113 = vmul.f32 %v109, %v109
    %v114 = vmul.f32 %v110, %v110
    %v115 = vsel %vm89, %v111, 0.0
    %116 = vadd.xlane.f32.xlu0 %v115
    %v117 = vpop.xlane.xlu0 %116
    %v118 = vsel %vm89, %v112, 0.0
    %119 = vadd.xlane.f32.xlu0 %v118
    %v120 = vpop.xlane.xlu0 %119
    %v121 = vsel %vm89, %v113, 0.0
    %122 = vadd.xlane.f32.xlu0 %v121
    %v123 = vpop.xlane.xlu0 %122
    %v124 = vsel %vm89, %v114, 0.0
    %125 = vadd.xlane.f32.xlu0 %v124
    %v126 = vpop.xlane.xlu0 %125
    %v127 = vmul.f32 %v117, %v102
    %v128 = vmul.f32 %v120, %v102
    %v129 = vmul.f32 %v123, %v102
    %v130 = vmul.f32 %v126, %v102
    %v131 = vadd.f32 %v127, 1e-05
    %v132 = vadd.f32 %v128, 1e-05
    %v133 = vadd.f32 %v129, 1e-05
    %v134 = vadd.f32 %v130, 1e-05
    %v135 = vrsqrt.pop %v131
    %v136 = vrsqrt.pop %v132
    %v137 = vrsqrt.pop %v133
    %v138 = vrsqrt.pop %v134
    %v139 = vmul.f32 %v107, %v135
    %v140 = vmul.f32 %v108, %v136
    %v141 = vmul.f32 %v109, %v137
    %v142 = vmul.f32 %v110, %v138
    %v144 = vlaneseq
    %v145 = vshrl.u32 %v144, 7
    %v146 = vsub.s32 0, %v145
    %v147 = vrot.slane %v87, %v146
    %v149 = vmul.f32 %v139, %v147
    %v150 = vmul.f32 %v140, %v147
    %v151 = vmul.f32 %v141, %v147
    %v152 = vmul.f32 %v142, %v147
    %v154 = vlaneseq
    %v155 = vshrl.u32 %v154, 7
    %v156 = vsub.s32 0, %v155
    %v157 = vrot.slane %v88, %v156
    %v159 = vadd.f32 %v149, %v157
    %v160 = vadd.f32 %v150, %v157
    %v161 = vadd.f32 %v151, %v157
    %v162 = vadd.f32 %v152, %v157
    %v163 = vld [vmem:[%s5] sm:$0x1]
    %v164 = vld [vmem:[%s6] sm:$0x1]
    %v165 = vsel %vm89, %v86, 0.0
    %166 = vadd.xlane.f32.xlu0 %v165
    %v167 = vpop.xlane.xlu0 %166
    %v168 = vmul.f32 %v167, %v102
    %v169 = vsub.f32 %v86, %v168
    %v170 = vmul.f32 %v169, %v169
    %v171 = vsel %vm89, %v170, 0.0
    %172 = vadd.xlane.f32.xlu0 %v171
    %v173 = vpop.xlane.xlu0 %172
    %v174 = vmul.f32 %v173, %v102
    %v175 = vadd.f32 %v174, 1e-05
    %v176 = vrsqrt.pop %v175
    %v177 = vmul.f32 %v169, %v176
    %v179 = vlaneseq
    %v180 = vshrl.u32 %v179, 7
    %v181 = vsub.s32 0, %v180
    %v182 = vrot.slane %v163, %v181
    %v184 = vmul.f32 %v177, %v182
    %v186 = vlaneseq
    %v187 = vshrl.u32 %v186, 7
    %v188 = vsub.s32 0, %v187
    %v189 = vrot.slane %v164, %v188
    %v191 = vadd.f32 %v184, %v189
    %192 = vst.msk [vmem:[#allocation2] sm:$0xff] %vm89, %v159
    %193 = vst.msk [vmem:[#allocation2 + $0x8] sm:$0xff] %vm89, %v191
    %194 = vst.msk [vmem:[#allocation2 + $0x10] sm:$0xff] %vm89, %v160
    %195 = vst.msk [vmem:[#allocation2 + $0x18] sm:$0xff] %vm89, %v191
    %196 = vst.msk [vmem:[#allocation2 + $0x20] sm:$0xff] %vm89, %v161
    %197 = vst.msk [vmem:[#allocation2 + $0x28] sm:$0xff] %vm89, %v191
    %198 = vst.msk [vmem:[#allocation2 + $0x30] sm:$0xff] %vm89, %v162
    %199 = vst.msk [vmem:[#allocation2 + $0x38] sm:$0xff] %vm89, %v191
    %v200 = vld [vmem:[#allocation2] sm:$0xff]
    %v201 = vld [vmem:[#allocation2 + $0x8] sm:$0xff]
    %v202 = vld [vmem:[#allocation2 + $0x10] sm:$0xff]
    %v203 = vld [vmem:[#allocation2 + $0x18] sm:$0xff]
    %v204 = vld [vmem:[#allocation2 + $0x20] sm:$0xff]
    %v205 = vld [vmem:[#allocation2 + $0x28] sm:$0xff]
    %v206 = vld [vmem:[#allocation2 + $0x30] sm:$0xff]
    %v207 = vld [vmem:[#allocation2 + $0x38] sm:$0xff]
    %v208 = vld [vmem:[%s7] sm:$0xff]
    %v209 = vld [vmem:[%s7 + $0x8] sm:$0xff]
    %v210 = vld [vmem:[%s7 + $0x10] sm:$0xff]
    %v211 = vld [vmem:[%s7 + $0x18] sm:$0xff]
    %v213 = vsel %vm89, %v200, 0
    %v216 = vsel %vm89, %v201, 0
    %v219 = vsel %vm89, %v202, 0
    %v222 = vsel %vm89, %v203, 0
    %v225 = vsel %vm89, %v204, 0
    %v228 = vsel %vm89, %v205, 0
    %v231 = vsel %vm89, %v206, 0
    %v234 = vsel %vm89, %v207, 0
    %236 = vmatprep.subr.mxu0 0.0
    %237 = vmatpush1.msra.mxu0 %v208
    %238 = vmatprep.subr.mxu0 0.0
    %239 = vmatpush1.msra.mxu0 %v209
    %240 = vmatprep.subr.mxu0 0.0
    %241 = vmatpush1.msra.mxu0 %v210
    %242 = vmatprep.subr.mxu0 0.0
    %243 = vmatpush1.msra.mxu0 %v211
    %244 = vmatprep.subr.mxu0 0.0
    %245 = vmatpush1.msra.mxu0 0.0
    %246 = vmatprep.subr.mxu0 0.0
    %247 = vmatpush1.msra.mxu0 0.0
    %248 = vmatprep.subr.mxu0 0.0
    %249 = vmatpush1.msra.mxu0 0.0
    %250 = vmatprep.subr.mxu0 0.0
    %251 = vmatpush1.msra.mxu0 0.0
    %252 = vmatprep.subr.mxu0 0.0
    %253 = vmatpush1.msra.mxu0 0.0
    %254 = vmatprep.subr.mxu0 0.0
    %255 = vmatpush1.msra.mxu0 0.0
    %256 = vmatprep.subr.mxu0 0.0
    %257 = vmatpush1.msra.mxu0 0.0
    %258 = vmatprep.subr.mxu0 0.0
    %259 = vmatpush1.msra.mxu0 0.0
    %260 = vmatprep.subr.mxu0 0.0
    %261 = vmatpush1.msra.mxu0 0.0
    %262 = vmatprep.subr.mxu0 0.0
    %263 = vmatpush1.msra.mxu0 0.0
    %264 = vmatprep.subr.mxu0 0.0
    %265 = vmatpush1.msra.mxu0 0.0
    %266 = vmatprep.subr.mxu0 0.0
    %267 = vmatpush1.msra.mxu0 0.0
    %268 = vmatprep.subr.mxu0 0.0
    %269 = vmatpush1.msra.mxu0 0.0
    %270 = vmatprep.subr.mxu0 0.0
    %271 = vmatpush1.msra.mxu0 0.0
    %272 = vmatprep.subr.mxu0 0.0
    %273 = vmatpush1.msra.mxu0 0.0
    %274 = vmatprep.subr.mxu0 0.0
    %275 = vmatpush1.msra.mxu0 0.0
    %276 = vmatprep.subr.mxu0 0.0
    %277 = vmatpush1.msra.mxu0 0.0
    %278 = vmatprep.subr.mxu0 0.0
    %279 = vmatpush1.msra.mxu0 0.0
    %280 = vmatprep.subr.mxu0 0.0
    %281 = vmatpush1.msra.mxu0 0.0
    %282 = vmatprep.subr.mxu0 0.0
    %283 = vmatpush1.msra.mxu0 0.0
    %284 = vmatprep.subr.mxu0 0.0
    %285 = vmatpush1.msra.mxu0 0.0
    %286 = vmatprep.subr.mxu0 0.0
    %287 = vmatpush1.msra.mxu0 0.0
    %288 = vmatprep.subr.mxu0 0.0
    %289 = vmatpush1.msra.mxu0 0.0
    %290 = vmatprep.subr.mxu0 0.0
    %291 = vmatpush1.msra.mxu0 0.0
    %292 = vmatprep.subr.mxu0 0.0
    %293 = vmatpush1.msra.mxu0 0.0
    %294 = vmatprep.subr.mxu0 0.0
    %295 = vmatpush1.msra.mxu0 0.0
    %296 = vmatprep.subr.mxu0 0.0
    %297 = vmatpush1.msra.mxu0 0.0
    %298 = vmatprep.subr.mxu0 0.0
    %299 = vmatpush1.msra.mxu0 0.0
    %300 = vmatprep.mubr.f32.mxu0 0.0
    %301 = vmatmul.mubr.f32.gmra.mrb[0].mxu0 %v213
    %v302 = vpop.f32.mrb[0].mxu0
    %v303 = vadd.f32 0.0, %v302
    %v304 = vpop.f32.mrb[0].mxu0
    %305 = vmatprep.mubr.f32.mxu0 0.0
    %306 = vmatmul.mubr.f32.gmra.mrb[0].mxu0 %v216
    %v307 = vpop.f32.mrb[0].mxu0
    %v308 = vadd.f32 0.0, %v307
    %v309 = vpop.f32.mrb[0].mxu0
    %310 = vmatprep.mubr.f32.mxu0 0.0
    %311 = vmatmul.mubr.f32.gmra.mrb[0].mxu0 %v219
    %v312 = vpop.f32.mrb[0].mxu0
    %v313 = vadd.f32 0.0, %v312
    %v314 = vpop.f32.mrb[0].mxu0
    %315 = vmatprep.mubr.f32.mxu0 0.0
    %316 = vmatmul.mubr.f32.gmra.mrb[0].mxu0 %v222
    %v317 = vpop.f32.mrb[0].mxu0
    %v318 = vadd.f32 0.0, %v317
    %v319 = vpop.f32.mrb[0].mxu0
    %320 = vmatprep.mubr.f32.mxu0 0.0
    %321 = vmatmul.mubr.f32.gmra.mrb[0].mxu0 %v225
    %v322 = vpop.f32.mrb[0].mxu0
    %v323 = vadd.f32 0.0, %v322
    %v324 = vpop.f32.mrb[0].mxu0
    %325 = vmatprep.mubr.f32.mxu0 0.0
    %326 = vmatmul.mubr.f32.gmra.mrb[0].mxu0 %v228
    %v327 = vpop.f32.mrb[0].mxu0
    %v328 = vadd.f32 0.0, %v327
    %v329 = vpop.f32.mrb[0].mxu0
    %330 = vmatprep.mubr.f32.mxu0 0.0
    %331 = vmatmul.mubr.f32.gmra.mrb[0].mxu0 %v231
    %v332 = vpop.f32.mrb[0].mxu0
    %v333 = vadd.f32 0.0, %v332
    %v334 = vpop.f32.mrb[0].mxu0
    %335 = vmatprep.mubr.f32.mxu0 0.0
    %336 = vmatmul.mubr.f32.gmra.mrb[0].mxu0 %v234
    %v337 = vpop.f32.mrb[0].mxu0
    %v338 = vadd.f32 0.0, %v337
    %v339 = vpop.f32.mrb[0].mxu0
    %340 = vdwg.mxu0
    %v341 = vmul.f32 %v308, 0.25
    %v342 = vmul.f32 %v341, %v57
    %345 = vrot.lane.b32.xlu0 %v303, 96
    %v346 = vpop.permute.xlu0 %345
    %347 = vrot.lane.b32.xlu0 %v308, 96
    %v348 = vpop.permute.xlu0 %347
    %v350 = vsel %vm89, %v342, 0
    %v352 = vsel %vm89, %v346, 0
    %v354 = vsel %vm89, %v348, 0
    %356 = vmatprep.subr.mxu0 0.0
    %357 = vmatpush1.xpose.msra.mxu0 %v352
    %358 = vmatprep.subr.mxu0 0.0
    %359 = vmatpush1.xpose.msra.mxu0 %v354
    %360 = vmatprep.subr.mxu0 0.0
    %361 = vmatpush1.xpose.msra.mxu0 0.0
    %362 = vmatprep.subr.mxu0 0.0
    %363 = vmatpush1.xpose.msra.mxu0 0.0
    %364 = vmatprep.subr.mxu0 0.0
    %365 = vmatpush1.xpose.msra.mxu0 0.0
    %366 = vmatprep.subr.mxu0 0.0
    %367 = vmatpush1.xpose.msra.mxu0 0.0
    %368 = vmatprep.subr.mxu0 0.0
    %369 = vmatpush1.xpose.msra.mxu0 0.0
    %370 = vmatprep.subr.mxu0 0.0
    %371 = vmatpush1.xpose.msra.mxu0 0.0
    %372 = vmatprep.subr.mxu0 0.0
    %373 = vmatpush1.xpose.msra.mxu0 0.0
    %374 = vmatprep.subr.mxu0 0.0
    %375 = vmatpush1.xpose.msra.mxu0 0.0
    %376 = vmatprep.subr.mxu0 0.0
    %377 = vmatpush1.xpose.msra.mxu0 0.0
    %378 = vmatprep.subr.mxu0 0.0
    %379 = vmatpush1.xpose.msra.mxu0 0.0
    %380 = vmatprep.subr.mxu0 0.0
    %381 = vmatpush1.xpose.msra.mxu0 0.0
    %382 = vmatprep.subr.mxu0 0.0
    %383 = vmatpush1.xpose.msra.mxu0 0.0
    %384 = vmatprep.subr.mxu0 0.0
    %385 = vmatpush1.xpose.msra.mxu0 0.0
    %386 = vmatprep.subr.mxu0 0.0
    %387 = vmatpush1.xpose.msra.mxu0 0.0
    %388 = vmatprep.subr.mxu0 0.0
    %389 = vmatpush1.xpose.msra.mxu0 0.0
    %390 = vmatprep.subr.mxu0 0.0
    %391 = vmatpush1.xpose.msra.mxu0 0.0
    %392 = vmatprep.subr.mxu0 0.0
    %393 = vmatpush1.xpose.msra.mxu0 0.0
    %394 = vmatprep.subr.mxu0 0.0
    %395 = vmatpush1.xpose.msra.mxu0 0.0
    %396 = vmatprep.subr.mxu0 0.0
    %397 = vmatpush1.xpose.msra.mxu0 0.0
    %398 = vmatprep.subr.mxu0 0.0
    %399 = vmatpush1.xpose.msra.mxu0 0.0
    %400 = vmatprep.subr.mxu0 0.0
    %401 = vmatpush1.xpose.msra.mxu0 0.0
    %402 = vmatprep.subr.mxu0 0.0
    %403 = vmatpush1.xpose.msra.mxu0 0.0
    %404 = vmatprep.subr.mxu0 0.0
    %405 = vmatpush1.xpose.msra.mxu0 0.0
    %406 = vmatprep.subr.mxu0 0.0
    %407 = vmatpush1.xpose.msra.mxu0 0.0
    %408 = vmatprep.subr.mxu0 0.0
    %409 = vmatpush1.xpose.msra.mxu0 0.0
    %410 = vmatprep.subr.mxu0 0.0
    %411 = vmatpush1.xpose.msra.mxu0 0.0
    %412 = vmatprep.subr.mxu0 0.0
    %413 = vmatpush1.xpose.msra.mxu0 0.0
    %414 = vmatprep.subr.mxu0 0.0
    %415 = vmatpush1.xpose.msra.mxu0 0.0
    %416 = vmatprep.subr.mxu0 0.0
    %417 = vmatpush1.xpose.msra.mxu0 0.0
    %418 = vmatprep.subr.mxu0 0.0
    %419 = vmatpush1.xpose.msra.mxu0 0.0
    %420 = vmatprep.mubr.f32.mxu0 0.0
    %421 = vmatmul.mubr.f32.gmra.mrb[0].mxu0 %v350
    %v422 = vpop.f32.mrb[0].mxu0
    %v423 = vadd.f32 0.0, %v422
    %v424 = vpop.f32.mrb[0].mxu0
    %425 = vdwg.mxu0
    %vm426 = vcmask 130048
    %v427 = vsel %vm426, %v423, -inf
    %428 = vmax.xlane.f32.xlu0 %v427
    %v429 = vpop.xlane.xlu0 %428
    %v430 = vsub.f32 %v423, %v429
    %v431 = vmul.f32 %v430, 1.442695
    %v432 = vpow.pop %v431
    %v433 = vsel %vm426, %v432, 0.0
    %434 = vadd.xlane.f32.xlu0 %v433
    %v435 = vpop.xlane.xlu0 %434
    %v436 = vrcp.pop %v435
    %v437 = vmul.f32 %v432, %v436
    %438 = vrot.lane.b32.xlu0 %v303, 64
    %v439 = vpop.permute.xlu0 %438
    %440 = vrot.lane.b32.xlu0 %v308, 64
    %v441 = vpop.permute.xlu0 %440
    %v445 = vsel %vm426, %v437, 0
    %447 = vmatprep.subr.mxu0 0.0
    %448 = vmatpush1.msra.mxu0 %v439
    %449 = vmatprep.subr.mxu0 0.0
    %450 = vmatpush1.msra.mxu0 %v441
    %451 = vmatprep.subr.mxu0 0.0
    %452 = vmatpush1.msra.mxu0 0.0
    %453 = vmatprep.subr.mxu0 0.0
    %454 = vmatpush1.msra.mxu0 0.0
    %455 = vmatprep.subr.mxu0 0.0
    %456 = vmatpush1.msra.mxu0 0.0
    %457 = vmatprep.subr.mxu0 0.0
    %458 = vmatpush1.msra.mxu0 0.0
    %459 = vmatprep.subr.mxu0 0.0
    %460 = vmatpush1.msra.mxu0 0.0
    %461 = vmatprep.subr.mxu0 0.0
    %462 = vmatpush1.msra.mxu0 0.0
    %463 = vmatprep.subr.mxu0 0.0
    %464 = vmatpush1.msra.mxu0 0.0
    %465 = vmatprep.subr.mxu0 0.0
    %466 = vmatpush1.msra.mxu0 0.0
    %467 = vmatprep.subr.mxu0 0.0
    %468 = vmatpush1.msra.mxu0 0.0
    %469 = vmatprep.subr.mxu0 0.0
    %470 = vmatpush1.msra.mxu0 0.0
    %471 = vmatprep.subr.mxu0 0.0
    %472 = vmatpush1.msra.mxu0 0.0
    %473 = vmatprep.subr.mxu0 0.0
    %474 = vmatpush1.msra.mxu0 0.0
    %475 = vmatprep.subr.mxu0 0.0
    %476 = vmatpush1.msra.mxu0 0.0
    %477 = vmatprep.subr.mxu0 0.0
    %478 = vmatpush1.msra.mxu0 0.0
    %479 = vmatprep.subr.mxu0 0.0
    %480 = vmatpush1.msra.mxu0 0.0
    %481 = vmatprep.subr.mxu0 0.0
    %482 = vmatpush1.msra.mxu0 0.0
    %483 = vmatprep.subr.mxu0 0.0
    %484 = vmatpush1.msra.mxu0 0.0
    %485 = vmatprep.subr.mxu0 0.0
    %486 = vmatpush1.msra.mxu0 0.0
    %487 = vmatprep.subr.mxu0 0.0
    %488 = vmatpush1.msra.mxu0 0.0
    %489 = vmatprep.subr.mxu0 0.0
    %490 = vmatpush1.msra.mxu0 0.0
    %491 = vmatprep.subr.mxu0 0.0
    %492 = vmatpush1.msra.mxu0 0.0
    %493 = vmatprep.subr.mxu0 0.0
    %494 = vmatpush1.msra.mxu0 0.0
    %495 = vmatprep.subr.mxu0 0.0
    %496 = vmatpush1.msra.mxu0 0.0
    %497 = vmatprep.subr.mxu0 0.0
    %498 = vmatpush1.msra.mxu0 0.0
    %499 = vmatprep.subr.mxu0 0.0
    %500 = vmatpush1.msra.mxu0 0.0
    %501 = vmatprep.subr.mxu0 0.0
    %502 = vmatpush1.msra.mxu0 0.0
    %503 = vmatprep.subr.mxu0 0.0
    %504 = vmatpush1.msra.mxu0 0.0
    %505 = vmatprep.subr.mxu0 0.0
    %506 = vmatpush1.msra.mxu0 0.0
    %507 = vmatprep.subr.mxu0 0.0
    %508 = vmatpush1.msra.mxu0 0.0
    %509 = vmatprep.subr.mxu0 0.0
    %510 = vmatpush1.msra.mxu0 0.0
    %511 = vmatprep.mubr.f32.mxu0 0.0
    %512 = vmatmul.mubr.f32.gmra.mrb[0].mxu0 %v445
    %v513 = vpop.f32.mrb[0].mxu0
    %v514 = vadd.f32 0.0, %v513
    %v515 = vpop.f32.mrb[0].mxu0
    %516 = vdwg.mxu0
    %v517 = vmul.f32 %v514, %v57
    %v518 = vadd.f32 %v517, 0.0
    %v519 = vmul.f32 %v341, %v62
    %v521 = vsel %vm89, %v519, 0
    %523 = vmatprep.subr.mxu0 0.0
    %524 = vmatpush1.xpose.msra.mxu0 %v352
    %525 = vmatprep.subr.mxu0 0.0
    %526 = vmatpush1.xpose.msra.mxu0 %v354
    %527 = vmatprep.subr.mxu0 0.0
    %528 = vmatpush1.xpose.msra.mxu0 0.0
    %529 = vmatprep.subr.mxu0 0.0
    %530 = vmatpush1.xpose.msra.mxu0 0.0
    %531 = vmatprep.subr.mxu0 0.0
    %532 = vmatpush1.xpose.msra.mxu0 0.0
    %533 = vmatprep.subr.mxu0 0.0
    %534 = vmatpush1.xpose.msra.mxu0 0.0
    %535 = vmatprep.subr.mxu0 0.0
    %536 = vmatpush1.xpose.msra.mxu0 0.0
    %537 = vmatprep.subr.mxu0 0.0
    %538 = vmatpush1.xpose.msra.mxu0 0.0
    %539 = vmatprep.subr.mxu0 0.0
    %540 = vmatpush1.xpose.msra.mxu0 0.0
    %541 = vmatprep.subr.mxu0 0.0
    %542 = vmatpush1.xpose.msra.mxu0 0.0
    %543 = vmatprep.subr.mxu0 0.0
    %544 = vmatpush1.xpose.msra.mxu0 0.0
    %545 = vmatprep.subr.mxu0 0.0
    %546 = vmatpush1.xpose.msra.mxu0 0.0
    %547 = vmatprep.subr.mxu0 0.0
    %548 = vmatpush1.xpose.msra.mxu0 0.0
    %549 = vmatprep.subr.mxu0 0.0
    %550 = vmatpush1.xpose.msra.mxu0 0.0
    %551 = vmatprep.subr.mxu0 0.0
    %552 = vmatpush1.xpose.msra.mxu0 0.0
    %553 = vmatprep.subr.mxu0 0.0
    %554 = vmatpush1.xpose.msra.mxu0 0.0
    %555 = vmatprep.subr.mxu0 0.0
    %556 = vmatpush1.xpose.msra.mxu0 0.0
    %557 = vmatprep.subr.mxu0 0.0
    %558 = vmatpush1.xpose.msra.mxu0 0.0
    %559 = vmatprep.subr.mxu0 0.0
    %560 = vmatpush1.xpose.msra.mxu0 0.0
    %561 = vmatprep.subr.mxu0 0.0
    %562 = vmatpush1.xpose.msra.mxu0 0.0
    %563 = vmatprep.subr.mxu0 0.0
    %564 = vmatpush1.xpose.msra.mxu0 0.0
    %565 = vmatprep.subr.mxu0 0.0
    %566 = vmatpush1.xpose.msra.mxu0 0.0
    %567 = vmatprep.subr.mxu0 0.0
    %568 = vmatpush1.xpose.msra.mxu0 0.0
    %569 = vmatprep.subr.mxu0 0.0
    %570 = vmatpush1.xpose.msra.mxu0 0.0
    %571 = vmatprep.subr.mxu0 0.0
    %572 = vmatpush1.xpose.msra.mxu0 0.0
    %573 = vmatprep.subr.mxu0 0.0
    %574 = vmatpush1.xpose.msra.mxu0 0.0
    %575 = vmatprep.subr.mxu0 0.0
    %576 = vmatpush1.xpose.msra.mxu0 0.0
    %577 = vmatprep.subr.mxu0 0.0
    %578 = vmatpush1.xpose.msra.mxu0 0.0
    %579 = vmatprep.subr.mxu0 0.0
    %580 = vmatpush1.xpose.msra.mxu0 0.0
    %581 = vmatprep.subr.mxu0 0.0
    %582 = vmatpush1.xpose.msra.mxu0 0.0
    %583 = vmatprep.subr.mxu0 0.0
    %584 = vmatpush1.xpose.msra.mxu0 0.0
    %585 = vmatprep.subr.mxu0 0.0
    %586 = vmatpush1.xpose.msra.mxu0 0.0
    %587 = vmatprep.mubr.f32.mxu0 0.0
    %588 = vmatmul.mubr.f32.gmra.mrb[0].mxu0 %v521
    %v589 = vpop.f32.mrb[0].mxu0
    %v590 = vadd.f32 0.0, %v589
    %v591 = vpop.f32.mrb[0].mxu0
    %592 = vdwg.mxu0
    %v593 = vsel %vm426, %v590, -inf
    %594 = vmax.xlane.f32.xlu0 %v593
    %v595 = vpop.xlane.xlu0 %594
    %v596 = vsub.f32 %v590, %v595
    %v597 = vmul.f32 %v596, 1.442695
    %v598 = vpow.pop %v597
    %v599 = vsel %vm426, %v598, 0.0
    %600 = vadd.xlane.f32.xlu0 %v599
    %v601 = vpop.xlane.xlu0 %600
    %v602 = vrcp.pop %v601
    %v603 = vmul.f32 %v598, %v602
    %v605 = vsel %vm426, %v603, 0
    %607 = vmatprep.subr.mxu0 0.0
    %608 = vmatpush1.msra.mxu0 %v439
    %609 = vmatprep.subr.mxu0 0.0
    %610 = vmatpush1.msra.mxu0 %v441
    %611 = vmatprep.subr.mxu0 0.0
    %612 = vmatpush1.msra.mxu0 0.0
    %613 = vmatprep.subr.mxu0 0.0
    %614 = vmatpush1.msra.mxu0 0.0
    %615 = vmatprep.subr.mxu0 0.0
    %616 = vmatpush1.msra.mxu0 0.0
    %617 = vmatprep.subr.mxu0 0.0
    %618 = vmatpush1.msra.mxu0 0.0
    %619 = vmatprep.subr.mxu0 0.0
    %620 = vmatpush1.msra.mxu0 0.0
    %621 = vmatprep.subr.mxu0 0.0
    %622 = vmatpush1.msra.mxu0 0.0
    %623 = vmatprep.subr.mxu0 0.0
    %624 = vmatpush1.msra.mxu0 0.0
    %625 = vmatprep.subr.mxu0 0.0
    %626 = vmatpush1.msra.mxu0 0.0
    %627 = vmatprep.subr.mxu0 0.0
    %628 = vmatpush1.msra.mxu0 0.0
    %629 = vmatprep.subr.mxu0 0.0
    %630 = vmatpush1.msra.mxu0 0.0
    %631 = vmatprep.subr.mxu0 0.0
    %632 = vmatpush1.msra.mxu0 0.0
    %633 = vmatprep.subr.mxu0 0.0
    %634 = vmatpush1.msra.mxu0 0.0
    %635 = vmatprep.subr.mxu0 0.0
    %636 = vmatpush1.msra.mxu0 0.0
    %637 = vmatprep.subr.mxu0 0.0
    %638 = vmatpush1.msra.mxu0 0.0
    %639 = vmatprep.subr.mxu0 0.0
    %640 = vmatpush1.msra.mxu0 0.0
    %641 = vmatprep.subr.mxu0 0.0
    %642 = vmatpush1.msra.mxu0 0.0
    %643 = vmatprep.subr.mxu0 0.0
    %644 = vmatpush1.msra.mxu0 0.0
    %645 = vmatprep.subr.mxu0 0.0
    %646 = vmatpush1.msra.mxu0 0.0
    %647 = vmatprep.subr.mxu0 0.0
    %648 = vmatpush1.msra.mxu0 0.0
    %649 = vmatprep.subr.mxu0 0.0
    %650 = vmatpush1.msra.mxu0 0.0
    %651 = vmatprep.subr.mxu0 0.0
    %652 = vmatpush1.msra.mxu0 0.0
    %653 = vmatprep.subr.mxu0 0.0
    %654 = vmatpush1.msra.mxu0 0.0
    %655 = vmatprep.subr.mxu0 0.0
    %656 = vmatpush1.msra.mxu0 0.0
    %657 = vmatprep.subr.mxu0 0.0
    %658 = vmatpush1.msra.mxu0 0.0
    %659 = vmatprep.subr.mxu0 0.0
    %660 = vmatpush1.msra.mxu0 0.0
    %661 = vmatprep.subr.mxu0 0.0
    %662 = vmatpush1.msra.mxu0 0.0
    %663 = vmatprep.subr.mxu0 0.0
    %664 = vmatpush1.msra.mxu0 0.0
    %665 = vmatprep.subr.mxu0 0.0
    %666 = vmatpush1.msra.mxu0 0.0
    %667 = vmatprep.subr.mxu0 0.0
    %668 = vmatpush1.msra.mxu0 0.0
    %669 = vmatprep.subr.mxu0 0.0
    %670 = vmatpush1.msra.mxu0 0.0
    %671 = vmatprep.mubr.f32.mxu0 0.0
    %672 = vmatmul.mubr.f32.gmra.mrb[0].mxu0 %v605
    %v673 = vpop.f32.mrb[0].mxu0
    %v674 = vadd.f32 0.0, %v673
    %v675 = vpop.f32.mrb[0].mxu0
    %676 = vdwg.mxu0
    %v677 = vmul.f32 %v674, %v62
    %v678 = vadd.f32 %v518, %v677
    %v679 = vmul.f32 %v318, 0.25
    %v680 = vmul.f32 %v679, %v57
    %683 = vrot.lane.b32.xlu0 %v313, 96
    %v684 = vpop.permute.xlu0 %683
    %685 = vrot.lane.b32.xlu0 %v318, 96
    %v686 = vpop.permute.xlu0 %685
    %v688 = vsel %vm89, %v680, 0
    %v690 = vsel %vm89, %v684, 0
    %v692 = vsel %vm89, %v686, 0
    %694 = vmatprep.subr.mxu0 0.0
    %695 = vmatpush1.xpose.msra.mxu0 %v690
    %696 = vmatprep.subr.mxu0 0.0
    %697 = vmatpush1.xpose.msra.mxu0 %v692
    %698 = vmatprep.subr.mxu0 0.0
    %699 = vmatpush1.xpose.msra.mxu0 0.0
    %700 = vmatprep.subr.mxu0 0.0
    %701 = vmatpush1.xpose.msra.mxu0 0.0
    %702 = vmatprep.subr.mxu0 0.0
    %703 = vmatpush1.xpose.msra.mxu0 0.0
    %704 = vmatprep.subr.mxu0 0.0
    %705 = vmatpush1.xpose.msra.mxu0 0.0
    %706 = vmatprep.subr.mxu0 0.0
    %707 = vmatpush1.xpose.msra.mxu0 0.0
    %708 = vmatprep.subr.mxu0 0.0
    %709 = vmatpush1.xpose.msra.mxu0 0.0
    %710 = vmatprep.subr.mxu0 0.0
    %711 = vmatpush1.xpose.msra.mxu0 0.0
    %712 = vmatprep.subr.mxu0 0.0
    %713 = vmatpush1.xpose.msra.mxu0 0.0
    %714 = vmatprep.subr.mxu0 0.0
    %715 = vmatpush1.xpose.msra.mxu0 0.0
    %716 = vmatprep.subr.mxu0 0.0
    %717 = vmatpush1.xpose.msra.mxu0 0.0
    %718 = vmatprep.subr.mxu0 0.0
    %719 = vmatpush1.xpose.msra.mxu0 0.0
    %720 = vmatprep.subr.mxu0 0.0
    %721 = vmatpush1.xpose.msra.mxu0 0.0
    %722 = vmatprep.subr.mxu0 0.0
    %723 = vmatpush1.xpose.msra.mxu0 0.0
    %724 = vmatprep.subr.mxu0 0.0
    %725 = vmatpush1.xpose.msra.mxu0 0.0
    %726 = vmatprep.subr.mxu0 0.0
    %727 = vmatpush1.xpose.msra.mxu0 0.0
    %728 = vmatprep.subr.mxu0 0.0
    %729 = vmatpush1.xpose.msra.mxu0 0.0
    %730 = vmatprep.subr.mxu0 0.0
    %731 = vmatpush1.xpose.msra.mxu0 0.0
    %732 = vmatprep.subr.mxu0 0.0
    %733 = vmatpush1.xpose.msra.mxu0 0.0
    %734 = vmatprep.subr.mxu0 0.0
    %735 = vmatpush1.xpose.msra.mxu0 0.0
    %736 = vmatprep.subr.mxu0 0.0
    %737 = vmatpush1.xpose.msra.mxu0 0.0
    %738 = vmatprep.subr.mxu0 0.0
    %739 = vmatpush1.xpose.msra.mxu0 0.0
    %740 = vmatprep.subr.mxu0 0.0
    %741 = vmatpush1.xpose.msra.mxu0 0.0
    %742 = vmatprep.subr.mxu0 0.0
    %743 = vmatpush1.xpose.msra.mxu0 0.0
    %744 = vmatprep.subr.mxu0 0.0
    %745 = vmatpush1.xpose.msra.mxu0 0.0
    %746 = vmatprep.subr.mxu0 0.0
    %747 = vmatpush1.xpose.msra.mxu0 0.0
    %748 = vmatprep.subr.mxu0 0.0
    %749 = vmatpush1.xpose.msra.mxu0 0.0
    %750 = vmatprep.subr.mxu0 0.0
    %751 = vmatpush1.xpose.msra.mxu0 0.0
    %752 = vmatprep.subr.mxu0 0.0
    %753 = vmatpush1.xpose.msra.mxu0 0.0
    %754 = vmatprep.subr.mxu0 0.0
    %755 = vmatpush1.xpose.msra.mxu0 0.0
    %756 = vmatprep.subr.mxu0 0.0
    %757 = vmatpush1.xpose.msra.mxu0 0.0
    %758 = vmatprep.mubr.f32.mxu0 0.0
    %759 = vmatmul.mubr.f32.gmra.mrb[0].mxu0 %v688
    %v760 = vpop.f32.mrb[0].mxu0
    %v761 = vadd.f32 0.0, %v760
    %v762 = vpop.f32.mrb[0].mxu0
    %763 = vdwg.mxu0
    %v764 = vsel %vm426, %v761, -inf
    %765 = vmax.xlane.f32.xlu0 %v764
    %v766 = vpop.xlane.xlu0 %765
    %v767 = vsub.f32 %v761, %v766
    %v768 = vmul.f32 %v767, 1.442695
    %v769 = vpow.pop %v768
    %v770 = vsel %vm426, %v769, 0.0
    %771 = vadd.xlane.f32.xlu0 %v770
    %v772 = vpop.xlane.xlu0 %771
    %v773 = vrcp.pop %v772
    %v774 = vmul.f32 %v769, %v773
    %775 = vrot.lane.b32.xlu0 %v313, 64
    %v776 = vpop.permute.xlu0 %775
    %777 = vrot.lane.b32.xlu0 %v318, 64
    %v778 = vpop.permute.xlu0 %777
    %v782 = vsel %vm426, %v774, 0
    %784 = vmatprep.subr.mxu0 0.0
    %785 = vmatpush1.msra.mxu0 %v776
    %786 = vmatprep.subr.mxu0 0.0
    %787 = vmatpush1.msra.mxu0 %v778
    %788 = vmatprep.subr.mxu0 0.0
    %789 = vmatpush1.msra.mxu0 0.0
    %790 = vmatprep.subr.mxu0 0.0
    %791 = vmatpush1.msra.mxu0 0.0
    %792 = vmatprep.subr.mxu0 0.0
    %793 = vmatpush1.msra.mxu0 0.0
    %794 = vmatprep.subr.mxu0 0.0
    %795 = vmatpush1.msra.mxu0 0.0
    %796 = vmatprep.subr.mxu0 0.0
    %797 = vmatpush1.msra.mxu0 0.0
    %798 = vmatprep.subr.mxu0 0.0
    %799 = vmatpush1.msra.mxu0 0.0
    %800 = vmatprep.subr.mxu0 0.0
    %801 = vmatpush1.msra.mxu0 0.0
    %802 = vmatprep.subr.mxu0 0.0
    %803 = vmatpush1.msra.mxu0 0.0
    %804 = vmatprep.subr.mxu0 0.0
    %805 = vmatpush1.msra.mxu0 0.0
    %806 = vmatprep.subr.mxu0 0.0
    %807 = vmatpush1.msra.mxu0 0.0
    %808 = vmatprep.subr.mxu0 0.0
    %809 = vmatpush1.msra.mxu0 0.0
    %810 = vmatprep.subr.mxu0 0.0
    %811 = vmatpush1.msra.mxu0 0.0
    %812 = vmatprep.subr.mxu0 0.0
    %813 = vmatpush1.msra.mxu0 0.0
    %814 = vmatprep.subr.mxu0 0.0
    %815 = vmatpush1.msra.mxu0 0.0
    %816 = vmatprep.subr.mxu0 0.0
    %817 = vmatpush1.msra.mxu0 0.0
    %818 = vmatprep.subr.mxu0 0.0
    %819 = vmatpush1.msra.mxu0 0.0
    %820 = vmatprep.subr.mxu0 0.0
    %821 = vmatpush1.msra.mxu0 0.0
    %822 = vmatprep.subr.mxu0 0.0
    %823 = vmatpush1.msra.mxu0 0.0
    %824 = vmatprep.subr.mxu0 0.0
    %825 = vmatpush1.msra.mxu0 0.0
    %826 = vmatprep.subr.mxu0 0.0
    %827 = vmatpush1.msra.mxu0 0.0
    %828 = vmatprep.subr.mxu0 0.0
    %829 = vmatpush1.msra.mxu0 0.0
    %830 = vmatprep.subr.mxu0 0.0
    %831 = vmatpush1.msra.mxu0 0.0
    %832 = vmatprep.subr.mxu0 0.0
    %833 = vmatpush1.msra.mxu0 0.0
    %834 = vmatprep.subr.mxu0 0.0
    %835 = vmatpush1.msra.mxu0 0.0
    %836 = vmatprep.subr.mxu0 0.0
    %837 = vmatpush1.msra.mxu0 0.0
    %838 = vmatprep.subr.mxu0 0.0
    %839 = vmatpush1.msra.mxu0 0.0
    %840 = vmatprep.subr.mxu0 0.0
    %841 = vmatpush1.msra.mxu0 0.0
    %842 = vmatprep.subr.mxu0 0.0
    %843 = vmatpush1.msra.mxu0 0.0
    %844 = vmatprep.subr.mxu0 0.0
    %845 = vmatpush1.msra.mxu0 0.0
    %846 = vmatprep.subr.mxu0 0.0
    %847 = vmatpush1.msra.mxu0 0.0
    %848 = vmatprep.mubr.f32.mxu0 0.0
    %849 = vmatmul.mubr.f32.gmra.mrb[0].mxu0 %v782
    %v850 = vpop.f32.mrb[0].mxu0
    %v851 = vadd.f32 0.0, %v850
    %v852 = vpop.f32.mrb[0].mxu0
    %853 = vdwg.mxu0
    %v854 = vmul.f32 %v851, %v57
    %v855 = vadd.f32 %v854, 0.0
    %v856 = vmul.f32 %v679, %v62
    %v858 = vsel %vm89, %v856, 0
    %860 = vmatprep.subr.mxu0 0.0
    %861 = vmatpush1.xpose.msra.mxu0 %v690
    %862 = vmatprep.subr.mxu0 0.0
    %863 = vmatpush1.xpose.msra.mxu0 %v692
    %864 = vmatprep.subr.mxu0 0.0
    %865 = vmatpush1.xpose.msra.mxu0 0.0
    %866 = vmatprep.subr.mxu0 0.0
    %867 = vmatpush1.xpose.msra.mxu0 0.0
    %868 = vmatprep.subr.mxu0 0.0
    %869 = vmatpush1.xpose.msra.mxu0 0.0
    %870 = vmatprep.subr.mxu0 0.0
    %871 = vmatpush1.xpose.msra.mxu0 0.0
    %872 = vmatprep.subr.mxu0 0.0
    %873 = vmatpush1.xpose.msra.mxu0 0.0
    %874 = vmatprep.subr.mxu0 0.0
    %875 = vmatpush1.xpose.msra.mxu0 0.0
    %876 = vmatprep.subr.mxu0 0.0
    %877 = vmatpush1.xpose.msra.mxu0 0.0
    %878 = vmatprep.subr.mxu0 0.0
    %879 = vmatpush1.xpose.msra.mxu0 0.0
    %880 = vmatprep.subr.mxu0 0.0
    %881 = vmatpush1.xpose.msra.mxu0 0.0
    %882 = vmatprep.subr.mxu0 0.0
    %883 = vmatpush1.xpose.msra.mxu0 0.0
    %884 = vmatprep.subr.mxu0 0.0
    %885 = vmatpush1.xpose.msra.mxu0 0.0
    %886 = vmatprep.subr.mxu0 0.0
    %887 = vmatpush1.xpose.msra.mxu0 0.0
    %888 = vmatprep.subr.mxu0 0.0
    %889 = vmatpush1.xpose.msra.mxu0 0.0
    %890 = vmatprep.subr.mxu0 0.0
    %891 = vmatpush1.xpose.msra.mxu0 0.0
    %892 = vmatprep.subr.mxu0 0.0
    %893 = vmatpush1.xpose.msra.mxu0 0.0
    %894 = vmatprep.subr.mxu0 0.0
    %895 = vmatpush1.xpose.msra.mxu0 0.0
    %896 = vmatprep.subr.mxu0 0.0
    %897 = vmatpush1.xpose.msra.mxu0 0.0
    %898 = vmatprep.subr.mxu0 0.0
    %899 = vmatpush1.xpose.msra.mxu0 0.0
    %900 = vmatprep.subr.mxu0 0.0
    %901 = vmatpush1.xpose.msra.mxu0 0.0
    %902 = vmatprep.subr.mxu0 0.0
    %903 = vmatpush1.xpose.msra.mxu0 0.0
    %904 = vmatprep.subr.mxu0 0.0
    %905 = vmatpush1.xpose.msra.mxu0 0.0
    %906 = vmatprep.subr.mxu0 0.0
    %907 = vmatpush1.xpose.msra.mxu0 0.0
    %908 = vmatprep.subr.mxu0 0.0
    %909 = vmatpush1.xpose.msra.mxu0 0.0
    %910 = vmatprep.subr.mxu0 0.0
    %911 = vmatpush1.xpose.msra.mxu0 0.0
    %912 = vmatprep.subr.mxu0 0.0
    %913 = vmatpush1.xpose.msra.mxu0 0.0
    %914 = vmatprep.subr.mxu0 0.0
    %915 = vmatpush1.xpose.msra.mxu0 0.0
    %916 = vmatprep.subr.mxu0 0.0
    %917 = vmatpush1.xpose.msra.mxu0 0.0
    %918 = vmatprep.subr.mxu0 0.0
    %919 = vmatpush1.xpose.msra.mxu0 0.0
    %920 = vmatprep.subr.mxu0 0.0
    %921 = vmatpush1.xpose.msra.mxu0 0.0
    %922 = vmatprep.subr.mxu0 0.0
    %923 = vmatpush1.xpose.msra.mxu0 0.0
    %924 = vmatprep.mubr.f32.mxu0 0.0
    %925 = vmatmul.mubr.f32.gmra.mrb[0].mxu0 %v858
    %v926 = vpop.f32.mrb[0].mxu0
    %v927 = vadd.f32 0.0, %v926
    %v928 = vpop.f32.mrb[0].mxu0
    %929 = vdwg.mxu0
    %v930 = vsel %vm426, %v927, -inf
    %931 = vmax.xlane.f32.xlu0 %v930
    %v932 = vpop.xlane.xlu0 %931
    %v933 = vsub.f32 %v927, %v932
    %v934 = vmul.f32 %v933, 1.442695
    %v935 = vpow.pop %v934
    %v936 = vsel %vm426, %v935, 0.0
    %937 = vadd.xlane.f32.xlu0 %v936
    %v938 = vpop.xlane.xlu0 %937
    %v939 = vrcp.pop %v938
    %v940 = vmul.f32 %v935, %v939
    %v942 = vsel %vm426, %v940, 0
    %944 = vmatprep.subr.mxu0 0.0
    %945 = vmatpush1.msra.mxu0 %v776
    %946 = vmatprep.subr.mxu0 0.0
    %947 = vmatpush1.msra.mxu0 %v778
    %948 = vmatprep.subr.mxu0 0.0
    %949 = vmatpush1.msra.mxu0 0.0
    %950 = vmatprep.subr.mxu0 0.0
    %951 = vmatpush1.msra.mxu0 0.0
    %952 = vmatprep.subr.mxu0 0.0
    %953 = vmatpush1.msra.mxu0 0.0
    %954 = vmatprep.subr.mxu0 0.0
    %955 = vmatpush1.msra.mxu0 0.0
    %956 = vmatprep.subr.mxu0 0.0
    %957 = vmatpush1.msra.mxu0 0.0
    %958 = vmatprep.subr.mxu0 0.0
    %959 = vmatpush1.msra.mxu0 0.0
    %960 = vmatprep.subr.mxu0 0.0
    %961 = vmatpush1.msra.mxu0 0.0
    %962 = vmatprep.subr.mxu0 0.0
    %963 = vmatpush1.msra.mxu0 0.0
    %964 = vmatprep.subr.mxu0 0.0
    %965 = vmatpush1.msra.mxu0 0.0
    %966 = vmatprep.subr.mxu0 0.0
    %967 = vmatpush1.msra.mxu0 0.0
    %968 = vmatprep.subr.mxu0 0.0
    %969 = vmatpush1.msra.mxu0 0.0
    %970 = vmatprep.subr.mxu0 0.0
    %971 = vmatpush1.msra.mxu0 0.0
    %972 = vmatprep.subr.mxu0 0.0
    %973 = vmatpush1.msra.mxu0 0.0
    %974 = vmatprep.subr.mxu0 0.0
    %975 = vmatpush1.msra.mxu0 0.0
    %976 = vmatprep.subr.mxu0 0.0
    %977 = vmatpush1.msra.mxu0 0.0
    %978 = vmatprep.subr.mxu0 0.0
    %979 = vmatpush1.msra.mxu0 0.0
    %980 = vmatprep.subr.mxu0 0.0
    %981 = vmatpush1.msra.mxu0 0.0
    %982 = vmatprep.subr.mxu0 0.0
    %983 = vmatpush1.msra.mxu0 0.0
    %984 = vmatprep.subr.mxu0 0.0
    %985 = vmatpush1.msra.mxu0 0.0
    %986 = vmatprep.subr.mxu0 0.0
    %987 = vmatpush1.msra.mxu0 0.0
    %988 = vmatprep.subr.mxu0 0.0
    %989 = vmatpush1.msra.mxu0 0.0
    %990 = vmatprep.subr.mxu0 0.0
    %991 = vmatpush1.msra.mxu0 0.0
    %992 = vmatprep.subr.mxu0 0.0
    %993 = vmatpush1.msra.mxu0 0.0
    %994 = vmatprep.subr.mxu0 0.0
    %995 = vmatpush1.msra.mxu0 0.0
    %996 = vmatprep.subr.mxu0 0.0
    %997 = vmatpush1.msra.mxu0 0.0
    %998 = vmatprep.subr.mxu0 0.0
    %999 = vmatpush1.msra.mxu0 0.0
    %1000 = vmatprep.subr.mxu0 0.0
    %1001 = vmatpush1.msra.mxu0 0.0
    %1002 = vmatprep.subr.mxu0 0.0
    %1003 = vmatpush1.msra.mxu0 0.0
    %1004 = vmatprep.subr.mxu0 0.0
    %1005 = vmatpush1.msra.mxu0 0.0
    %1006 = vmatprep.subr.mxu0 0.0
    %1007 = vmatpush1.msra.mxu0 0.0
    %1008 = vmatprep.mubr.f32.mxu0 0.0
    %1009 = vmatmul.mubr.f32.gmra.mrb[0].mxu0 %v942
    %v1010 = vpop.f32.mrb[0].mxu0
    %v1011 = vadd.f32 0.0, %v1010
    %v1012 = vpop.f32.mrb[0].mxu0
    %1013 = vdwg.mxu0
    %v1014 = vmul.f32 %v1011, %v62
    %v1015 = vadd.f32 %v855, %v1014
    %v1016 = vmul.f32 %v328, 0.25
    %v1017 = vmul.f32 %v1016, %v57
    %1020 = vrot.lane.b32.xlu0 %v323, 96
    %v1021 = vpop.permute.xlu0 %1020
    %1022 = vrot.lane.b32.xlu0 %v328, 96
    %v1023 = vpop.permute.xlu0 %1022
    %v1025 = vsel %vm89, %v1017, 0
    %v1027 = vsel %vm89, %v1021, 0
    %v1029 = vsel %vm89, %v1023, 0
    %1031 = vmatprep.subr.mxu0 0.0
    %1032 = vmatpush1.xpose.msra.mxu0 %v1027
    %1033 = vmatprep.subr.mxu0 0.0
    %1034 = vmatpush1.xpose.msra.mxu0 %v1029
    %1035 = vmatprep.subr.mxu0 0.0
    %1036 = vmatpush1.xpose.msra.mxu0 0.0
    %1037 = vmatprep.subr.mxu0 0.0
    %1038 = vmatpush1.xpose.msra.mxu0 0.0
    %1039 = vmatprep.subr.mxu0 0.0
    %1040 = vmatpush1.xpose.msra.mxu0 0.0
    %1041 = vmatprep.subr.mxu0 0.0
    %1042 = vmatpush1.xpose.msra.mxu0 0.0
    %1043 = vmatprep.subr.mxu0 0.0
    %1044 = vmatpush1.xpose.msra.mxu0 0.0
    %1045 = vmatprep.subr.mxu0 0.0
    %1046 = vmatpush1.xpose.msra.mxu0 0.0
    %1047 = vmatprep.subr.mxu0 0.0
    %1048 = vmatpush1.xpose.msra.mxu0 0.0
    %1049 = vmatprep.subr.mxu0 0.0
    %1050 = vmatpush1.xpose.msra.mxu0 0.0
    %1051 = vmatprep.subr.mxu0 0.0
    %1052 = vmatpush1.xpose.msra.mxu0 0.0
    %1053 = vmatprep.subr.mxu0 0.0
    %1054 = vmatpush1.xpose.msra.mxu0 0.0
    %1055 = vmatprep.subr.mxu0 0.0
    %1056 = vmatpush1.xpose.msra.mxu0 0.0
    %1057 = vmatprep.subr.mxu0 0.0
    %1058 = vmatpush1.xpose.msra.mxu0 0.0
    %1059 = vmatprep.subr.mxu0 0.0
    %1060 = vmatpush1.xpose.msra.mxu0 0.0
    %1061 = vmatprep.subr.mxu0 0.0
    %1062 = vmatpush1.xpose.msra.mxu0 0.0
    %1063 = vmatprep.subr.mxu0 0.0
    %1064 = vmatpush1.xpose.msra.mxu0 0.0
    %1065 = vmatprep.subr.mxu0 0.0
    %1066 = vmatpush1.xpose.msra.mxu0 0.0
    %1067 = vmatprep.subr.mxu0 0.0
    %1068 = vmatpush1.xpose.msra.mxu0 0.0
    %1069 = vmatprep.subr.mxu0 0.0
    %1070 = vmatpush1.xpose.msra.mxu0 0.0
    %1071 = vmatprep.subr.mxu0 0.0
    %1072 = vmatpush1.xpose.msra.mxu0 0.0
    %1073 = vmatprep.subr.mxu0 0.0
    %1074 = vmatpush1.xpose.msra.mxu0 0.0
    %1075 = vmatprep.subr.mxu0 0.0
    %1076 = vmatpush1.xpose.msra.mxu0 0.0
    %1077 = vmatprep.subr.mxu0 0.0
    %1078 = vmatpush1.xpose.msra.mxu0 0.0
    %1079 = vmatprep.subr.mxu0 0.0
    %1080 = vmatpush1.xpose.msra.mxu0 0.0
    %1081 = vmatprep.subr.mxu0 0.0
    %1082 = vmatpush1.xpose.msra.mxu0 0.0
    %1083 = vmatprep.subr.mxu0 0.0
    %1084 = vmatpush1.xpose.msra.mxu0 0.0
    %1085 = vmatprep.subr.mxu0 0.0
    %1086 = vmatpush1.xpose.msra.mxu0 0.0
    %1087 = vmatprep.subr.mxu0 0.0
    %1088 = vmatpush1.xpose.msra.mxu0 0.0
    %1089 = vmatprep.subr.mxu0 0.0
    %1090 = vmatpush1.xpose.msra.mxu0 0.0
    %1091 = vmatprep.subr.mxu0 0.0
    %1092 = vmatpush1.xpose.msra.mxu0 0.0
    %1093 = vmatprep.subr.mxu0 0.0
    %1094 = vmatpush1.xpose.msra.mxu0 0.0
    %1095 = vmatprep.mubr.f32.mxu0 0.0
    %1096 = vmatmul.mubr.f32.gmra.mrb[0].mxu0 %v1025
    %v1097 = vpop.f32.mrb[0].mxu0
    %v1098 = vadd.f32 0.0, %v1097
    %v1099 = vpop.f32.mrb[0].mxu0
    %1100 = vdwg.mxu0
    %v1101 = vsel %vm426, %v1098, -inf
    %1102 = vmax.xlane.f32.xlu0 %v1101
    %v1103 = vpop.xlane.xlu0 %1102
    %v1104 = vsub.f32 %v1098, %v1103
    %v1105 = vmul.f32 %v1104, 1.442695
    %v1106 = vpow.pop %v1105
    %v1107 = vsel %vm426, %v1106, 0.0
    %1108 = vadd.xlane.f32.xlu0 %v1107
    %v1109 = vpop.xlane.xlu0 %1108
    %v1110 = vrcp.pop %v1109
    %v1111 = vmul.f32 %v1106, %v1110
    %1112 = vrot.lane.b32.xlu0 %v323, 64
    %v1113 = vpop.permute.xlu0 %1112
    %1114 = vrot.lane.b32.xlu0 %v328, 64
    %v1115 = vpop.permute.xlu0 %1114
    %v1119 = vsel %vm426, %v1111, 0
    %1121 = vmatprep.subr.mxu0 0.0
    %1122 = vmatpush1.msra.mxu0 %v1113
    %1123 = vmatprep.subr.mxu0 0.0
    %1124 = vmatpush1.msra.mxu0 %v1115
    %1125 = vmatprep.subr.mxu0 0.0
    %1126 = vmatpush1.msra.mxu0 0.0
    %1127 = vmatprep.subr.mxu0 0.0
    %1128 = vmatpush1.msra.mxu0 0.0
    %1129 = vmatprep.subr.mxu0 0.0
    %1130 = vmatpush1.msra.mxu0 0.0
    %1131 = vmatprep.subr.mxu0 0.0
    %1132 = vmatpush1.msra.mxu0 0.0
    %1133 = vmatprep.subr.mxu0 0.0
    %1134 = vmatpush1.msra.mxu0 0.0
    %1135 = vmatprep.subr.mxu0 0.0
    %1136 = vmatpush1.msra.mxu0 0.0
    %1137 = vmatprep.subr.mxu0 0.0
    %1138 = vmatpush1.msra.mxu0 0.0
    %1139 = vmatprep.subr.mxu0 0.0
    %1140 = vmatpush1.msra.mxu0 0.0
    %1141 = vmatprep.subr.mxu0 0.0
    %1142 = vmatpush1.msra.mxu0 0.0
    %1143 = vmatprep.subr.mxu0 0.0
    %1144 = vmatpush1.msra.mxu0 0.0
    %1145 = vmatprep.subr.mxu0 0.0
    %1146 = vmatpush1.msra.mxu0 0.0
    %1147 = vmatprep.subr.mxu0 0.0
    %1148 = vmatpush1.msra.mxu0 0.0
    %1149 = vmatprep.subr.mxu0 0.0
    %1150 = vmatpush1.msra.mxu0 0.0
    %1151 = vmatprep.subr.mxu0 0.0
    %1152 = vmatpush1.msra.mxu0 0.0
    %1153 = vmatprep.subr.mxu0 0.0
    %1154 = vmatpush1.msra.mxu0 0.0
    %1155 = vmatprep.subr.mxu0 0.0
    %1156 = vmatpush1.msra.mxu0 0.0
    %1157 = vmatprep.subr.mxu0 0.0
    %1158 = vmatpush1.msra.mxu0 0.0
    %1159 = vmatprep.subr.mxu0 0.0
    %1160 = vmatpush1.msra.mxu0 0.0
    %1161 = vmatprep.subr.mxu0 0.0
    %1162 = vmatpush1.msra.mxu0 0.0
    %1163 = vmatprep.subr.mxu0 0.0
    %1164 = vmatpush1.msra.mxu0 0.0
    %1165 = vmatprep.subr.mxu0 0.0
    %1166 = vmatpush1.msra.mxu0 0.0
    %1167 = vmatprep.subr.mxu0 0.0
    %1168 = vmatpush1.msra.mxu0 0.0
    %1169 = vmatprep.subr.mxu0 0.0
    %1170 = vmatpush1.msra.mxu0 0.0
    %1171 = vmatprep.subr.mxu0 0.0
    %1172 = vmatpush1.msra.mxu0 0.0
    %1173 = vmatprep.subr.mxu0 0.0
    %1174 = vmatpush1.msra.mxu0 0.0
    %1175 = vmatprep.subr.mxu0 0.0
    %1176 = vmatpush1.msra.mxu0 0.0
    %1177 = vmatprep.subr.mxu0 0.0
    %1178 = vmatpush1.msra.mxu0 0.0
    %1179 = vmatprep.subr.mxu0 0.0
    %1180 = vmatpush1.msra.mxu0 0.0
    %1181 = vmatprep.subr.mxu0 0.0
    %1182 = vmatpush1.msra.mxu0 0.0
    %1183 = vmatprep.subr.mxu0 0.0
    %1184 = vmatpush1.msra.mxu0 0.0
    %1185 = vmatprep.mubr.f32.mxu0 0.0
    %1186 = vmatmul.mubr.f32.gmra.mrb[0].mxu0 %v1119
    %v1187 = vpop.f32.mrb[0].mxu0
    %v1188 = vadd.f32 0.0, %v1187
    %v1189 = vpop.f32.mrb[0].mxu0
    %1190 = vdwg.mxu0
    %v1191 = vmul.f32 %v1188, %v57
    %v1192 = vadd.f32 %v1191, 0.0
    %v1193 = vmul.f32 %v1016, %v62
    %v1195 = vsel %vm89, %v1193, 0
    %1197 = vmatprep.subr.mxu0 0.0
    %1198 = vmatpush1.xpose.msra.mxu0 %v1027
    %1199 = vmatprep.subr.mxu0 0.0
    %1200 = vmatpush1.xpose.msra.mxu0 %v1029
    %1201 = vmatprep.subr.mxu0 0.0
    %1202 = vmatpush1.xpose.msra.mxu0 0.0
    %1203 = vmatprep.subr.mxu0 0.0
    %1204 = vmatpush1.xpose.msra.mxu0 0.0
    %1205 = vmatprep.subr.mxu0 0.0
    %1206 = vmatpush1.xpose.msra.mxu0 0.0
    %1207 = vmatprep.subr.mxu0 0.0
    %1208 = vmatpush1.xpose.msra.mxu0 0.0
    %1209 = vmatprep.subr.mxu0 0.0
    %1210 = vmatpush1.xpose.msra.mxu0 0.0
    %1211 = vmatprep.subr.mxu0 0.0
    %1212 = vmatpush1.xpose.msra.mxu0 0.0
    %1213 = vmatprep.subr.mxu0 0.0
    %1214 = vmatpush1.xpose.msra.mxu0 0.0
    %1215 = vmatprep.subr.mxu0 0.0
    %1216 = vmatpush1.xpose.msra.mxu0 0.0
    %1217 = vmatprep.subr.mxu0 0.0
    %1218 = vmatpush1.xpose.msra.mxu0 0.0
    %1219 = vmatprep.subr.mxu0 0.0
    %1220 = vmatpush1.xpose.msra.mxu0 0.0
    %1221 = vmatprep.subr.mxu0 0.0
    %1222 = vmatpush1.xpose.msra.mxu0 0.0
    %1223 = vmatprep.subr.mxu0 0.0
    %1224 = vmatpush1.xpose.msra.mxu0 0.0
    %1225 = vmatprep.subr.mxu0 0.0
    %1226 = vmatpush1.xpose.msra.mxu0 0.0
    %1227 = vmatprep.subr.mxu0 0.0
    %1228 = vmatpush1.xpose.msra.mxu0 0.0
    %1229 = vmatprep.subr.mxu0 0.0
    %1230 = vmatpush1.xpose.msra.mxu0 0.0
    %1231 = vmatprep.subr.mxu0 0.0
    %1232 = vmatpush1.xpose.msra.mxu0 0.0
    %1233 = vmatprep.subr.mxu0 0.0
    %1234 = vmatpush1.xpose.msra.mxu0 0.0
    %1235 = vmatprep.subr.mxu0 0.0
    %1236 = vmatpush1.xpose.msra.mxu0 0.0
    %1237 = vmatprep.subr.mxu0 0.0
    %1238 = vmatpush1.xpose.msra.mxu0 0.0
    %1239 = vmatprep.subr.mxu0 0.0
    %1240 = vmatpush1.xpose.msra.mxu0 0.0
    %1241 = vmatprep.subr.mxu0 0.0
    %1242 = vmatpush1.xpose.msra.mxu0 0.0
    %1243 = vmatprep.subr.mxu0 0.0
    %1244 = vmatpush1.xpose.msra.mxu0 0.0
    %1245 = vmatprep.subr.mxu0 0.0
    %1246 = vmatpush1.xpose.msra.mxu0 0.0
    %1247 = vmatprep.subr.mxu0 0.0
    %1248 = vmatpush1.xpose.msra.mxu0 0.0
    %1249 = vmatprep.subr.mxu0 0.0
    %1250 = vmatpush1.xpose.msra.mxu0 0.0
    %1251 = vmatprep.subr.mxu0 0.0
    %1252 = vmatpush1.xpose.msra.mxu0 0.0
    %1253 = vmatprep.subr.mxu0 0.0
    %1254 = vmatpush1.xpose.msra.mxu0 0.0
    %1255 = vmatprep.subr.mxu0 0.0
    %1256 = vmatpush1.xpose.msra.mxu0 0.0
    %1257 = vmatprep.subr.mxu0 0.0
    %1258 = vmatpush1.xpose.msra.mxu0 0.0
    %1259 = vmatprep.subr.mxu0 0.0
    %1260 = vmatpush1.xpose.msra.mxu0 0.0
    %1261 = vmatprep.mubr.f32.mxu0 0.0
    %1262 = vmatmul.mubr.f32.gmra.mrb[0].mxu0 %v1195
    %v1263 = vpop.f32.mrb[0].mxu0
    %v1264 = vadd.f32 0.0, %v1263
    %v1265 = vpop.f32.mrb[0].mxu0
    %1266 = vdwg.mxu0
    %v1267 = vsel %vm426, %v1264, -inf
    %1268 = vmax.xlane.f32.xlu0 %v1267
    %v1269 = vpop.xlane.xlu0 %1268
    %v1270 = vsub.f32 %v1264, %v1269
    %v1271 = vmul.f32 %v1270, 1.442695
    %v1272 = vpow.pop %v1271
    %v1273 = vsel %vm426, %v1272, 0.0
    %1274 = vadd.xlane.f32.xlu0 %v1273
    %v1275 = vpop.xlane.xlu0 %1274
    %v1276 = vrcp.pop %v1275
    %v1277 = vmul.f32 %v1272, %v1276
    %v1279 = vsel %vm426, %v1277, 0
    %1281 = vmatprep.subr.mxu0 0.0
    %1282 = vmatpush1.msra.mxu0 %v1113
    %1283 = vmatprep.subr.mxu0 0.0
    %1284 = vmatpush1.msra.mxu0 %v1115
    %1285 = vmatprep.subr.mxu0 0.0
    %1286 = vmatpush1.msra.mxu0 0.0
    %1287 = vmatprep.subr.mxu0 0.0
    %1288 = vmatpush1.msra.mxu0 0.0
    %1289 = vmatprep.subr.mxu0 0.0
    %1290 = vmatpush1.msra.mxu0 0.0
    %1291 = vmatprep.subr.mxu0 0.0
    %1292 = vmatpush1.msra.mxu0 0.0
    %1293 = vmatprep.subr.mxu0 0.0
    %1294 = vmatpush1.msra.mxu0 0.0
    %1295 = vmatprep.subr.mxu0 0.0
    %1296 = vmatpush1.msra.mxu0 0.0
    %1297 = vmatprep.subr.mxu0 0.0
    %1298 = vmatpush1.msra.mxu0 0.0
    %1299 = vmatprep.subr.mxu0 0.0
    %1300 = vmatpush1.msra.mxu0 0.0
    %1301 = vmatprep.subr.mxu0 0.0
    %1302 = vmatpush1.msra.mxu0 0.0
    %1303 = vmatprep.subr.mxu0 0.0
    %1304 = vmatpush1.msra.mxu0 0.0
    %1305 = vmatprep.subr.mxu0 0.0
    %1306 = vmatpush1.msra.mxu0 0.0
    %1307 = vmatprep.subr.mxu0 0.0
    %1308 = vmatpush1.msra.mxu0 0.0
    %1309 = vmatprep.subr.mxu0 0.0
    %1310 = vmatpush1.msra.mxu0 0.0
    %1311 = vmatprep.subr.mxu0 0.0
    %1312 = vmatpush1.msra.mxu0 0.0
    %1313 = vmatprep.subr.mxu0 0.0
    %1314 = vmatpush1.msra.mxu0 0.0
    %1315 = vmatprep.subr.mxu0 0.0
    %1316 = vmatpush1.msra.mxu0 0.0
    %1317 = vmatprep.subr.mxu0 0.0
    %1318 = vmatpush1.msra.mxu0 0.0
    %1319 = vmatprep.subr.mxu0 0.0
    %1320 = vmatpush1.msra.mxu0 0.0
    %1321 = vmatprep.subr.mxu0 0.0
    %1322 = vmatpush1.msra.mxu0 0.0
    %1323 = vmatprep.subr.mxu0 0.0
    %1324 = vmatpush1.msra.mxu0 0.0
    %1325 = vmatprep.subr.mxu0 0.0
    %1326 = vmatpush1.msra.mxu0 0.0
    %1327 = vmatprep.subr.mxu0 0.0
    %1328 = vmatpush1.msra.mxu0 0.0
    %1329 = vmatprep.subr.mxu0 0.0
    %1330 = vmatpush1.msra.mxu0 0.0
    %1331 = vmatprep.subr.mxu0 0.0
    %1332 = vmatpush1.msra.mxu0 0.0
    %1333 = vmatprep.subr.mxu0 0.0
    %1334 = vmatpush1.msra.mxu0 0.0
    %1335 = vmatprep.subr.mxu0 0.0
    %1336 = vmatpush1.msra.mxu0 0.0
    %1337 = vmatprep.subr.mxu0 0.0
    %1338 = vmatpush1.msra.mxu0 0.0
    %1339 = vmatprep.subr.mxu0 0.0
    %1340 = vmatpush1.msra.mxu0 0.0
    %1341 = vmatprep.subr.mxu0 0.0
    %1342 = vmatpush1.msra.mxu0 0.0
    %1343 = vmatprep.subr.mxu0 0.0
    %1344 = vmatpush1.msra.mxu0 0.0
    %1345 = vmatprep.mubr.f32.mxu0 0.0
    %1346 = vmatmul.mubr.f32.gmra.mrb[0].mxu0 %v1279
    %v1347 = vpop.f32.mrb[0].mxu0
    %v1348 = vadd.f32 0.0, %v1347
    %v1349 = vpop.f32.mrb[0].mxu0
    %1350 = vdwg.mxu0
    %v1351 = vmul.f32 %v1348, %v62
    %v1352 = vadd.f32 %v1192, %v1351
    %v1353 = vmul.f32 %v338, 0.25
    %v1354 = vmul.f32 %v1353, %v57
    %1357 = vrot.lane.b32.xlu0 %v333, 96
    %v1358 = vpop.permute.xlu0 %1357
    %1359 = vrot.lane.b32.xlu0 %v338, 96
    %v1360 = vpop.permute.xlu0 %1359
    %v1362 = vsel %vm89, %v1354, 0
    %v1364 = vsel %vm89, %v1358, 0
    %v1366 = vsel %vm89, %v1360, 0
    %1368 = vmatprep.subr.mxu0 0.0
    %1369 = vmatpush1.xpose.msra.mxu0 %v1364
    %1370 = vmatprep.subr.mxu0 0.0
    %1371 = vmatpush1.xpose.msra.mxu0 %v1366
    %1372 = vmatprep.subr.mxu0 0.0
    %1373 = vmatpush1.xpose.msra.mxu0 0.0
    %1374 = vmatprep.subr.mxu0 0.0
    %1375 = vmatpush1.xpose.msra.mxu0 0.0
    %1376 = vmatprep.subr.mxu0 0.0
    %1377 = vmatpush1.xpose.msra.mxu0 0.0
    %1378 = vmatprep.subr.mxu0 0.0
    %1379 = vmatpush1.xpose.msra.mxu0 0.0
    %1380 = vmatprep.subr.mxu0 0.0
    %1381 = vmatpush1.xpose.msra.mxu0 0.0
    %1382 = vmatprep.subr.mxu0 0.0
    %1383 = vmatpush1.xpose.msra.mxu0 0.0
    %1384 = vmatprep.subr.mxu0 0.0
    %1385 = vmatpush1.xpose.msra.mxu0 0.0
    %1386 = vmatprep.subr.mxu0 0.0
    %1387 = vmatpush1.xpose.msra.mxu0 0.0
    %1388 = vmatprep.subr.mxu0 0.0
    %1389 = vmatpush1.xpose.msra.mxu0 0.0
    %1390 = vmatprep.subr.mxu0 0.0
    %1391 = vmatpush1.xpose.msra.mxu0 0.0
    %1392 = vmatprep.subr.mxu0 0.0
    %1393 = vmatpush1.xpose.msra.mxu0 0.0
    %1394 = vmatprep.subr.mxu0 0.0
    %1395 = vmatpush1.xpose.msra.mxu0 0.0
    %1396 = vmatprep.subr.mxu0 0.0
    %1397 = vmatpush1.xpose.msra.mxu0 0.0
    %1398 = vmatprep.subr.mxu0 0.0
    %1399 = vmatpush1.xpose.msra.mxu0 0.0
    %1400 = vmatprep.subr.mxu0 0.0
    %1401 = vmatpush1.xpose.msra.mxu0 0.0
    %1402 = vmatprep.subr.mxu0 0.0
    %1403 = vmatpush1.xpose.msra.mxu0 0.0
    %1404 = vmatprep.subr.mxu0 0.0
    %1405 = vmatpush1.xpose.msra.mxu0 0.0
    %1406 = vmatprep.subr.mxu0 0.0
    %1407 = vmatpush1.xpose.msra.mxu0 0.0
    %1408 = vmatprep.subr.mxu0 0.0
    %1409 = vmatpush1.xpose.msra.mxu0 0.0
    %1410 = vmatprep.subr.mxu0 0.0
    %1411 = vmatpush1.xpose.msra.mxu0 0.0
    %1412 = vmatprep.subr.mxu0 0.0
    %1413 = vmatpush1.xpose.msra.mxu0 0.0
    %1414 = vmatprep.subr.mxu0 0.0
    %1415 = vmatpush1.xpose.msra.mxu0 0.0
    %1416 = vmatprep.subr.mxu0 0.0
    %1417 = vmatpush1.xpose.msra.mxu0 0.0
    %1418 = vmatprep.subr.mxu0 0.0
    %1419 = vmatpush1.xpose.msra.mxu0 0.0
    %1420 = vmatprep.subr.mxu0 0.0
    %1421 = vmatpush1.xpose.msra.mxu0 0.0
    %1422 = vmatprep.subr.mxu0 0.0
    %1423 = vmatpush1.xpose.msra.mxu0 0.0
    %1424 = vmatprep.subr.mxu0 0.0
    %1425 = vmatpush1.xpose.msra.mxu0 0.0
    %1426 = vmatprep.subr.mxu0 0.0
    %1427 = vmatpush1.xpose.msra.mxu0 0.0
    %1428 = vmatprep.subr.mxu0 0.0
    %1429 = vmatpush1.xpose.msra.mxu0 0.0
    %1430 = vmatprep.subr.mxu0 0.0
    %1431 = vmatpush1.xpose.msra.mxu0 0.0
    %1432 = vmatprep.mubr.f32.mxu0 0.0
    %1433 = vmatmul.mubr.f32.gmra.mrb[0].mxu0 %v1362
    %v1434 = vpop.f32.mrb[0].mxu0
    %v1435 = vadd.f32 0.0, %v1434
    %v1436 = vpop.f32.mrb[0].mxu0
    %1437 = vdwg.mxu0
    %v1438 = vsel %vm426, %v1435, -inf
    %1439 = vmax.xlane.f32.xlu0 %v1438
    %v1440 = vpop.xlane.xlu0 %1439
    %v1441 = vsub.f32 %v1435, %v1440
    %v1442 = vmul.f32 %v1441, 1.442695
    %v1443 = vpow.pop %v1442
    %v1444 = vsel %vm426, %v1443, 0.0
    %1445 = vadd.xlane.f32.xlu0 %v1444
    %v1446 = vpop.xlane.xlu0 %1445
    %v1447 = vrcp.pop %v1446
    %v1448 = vmul.f32 %v1443, %v1447
    %1449 = vrot.lane.b32.xlu0 %v333, 64
    %v1450 = vpop.permute.xlu0 %1449
    %1451 = vrot.lane.b32.xlu0 %v338, 64
    %v1452 = vpop.permute.xlu0 %1451
    %v1456 = vsel %vm426, %v1448, 0
    %1458 = vmatprep.subr.mxu0 0.0
    %1459 = vmatpush1.msra.mxu0 %v1450
    %1460 = vmatprep.subr.mxu0 0.0
    %1461 = vmatpush1.msra.mxu0 %v1452
    %1462 = vmatprep.subr.mxu0 0.0
    %1463 = vmatpush1.msra.mxu0 0.0
    %1464 = vmatprep.subr.mxu0 0.0
    %1465 = vmatpush1.msra.mxu0 0.0
    %1466 = vmatprep.subr.mxu0 0.0
    %1467 = vmatpush1.msra.mxu0 0.0
    %1468 = vmatprep.subr.mxu0 0.0
    %1469 = vmatpush1.msra.mxu0 0.0
    %1470 = vmatprep.subr.mxu0 0.0
    %1471 = vmatpush1.msra.mxu0 0.0
    %1472 = vmatprep.subr.mxu0 0.0
    %1473 = vmatpush1.msra.mxu0 0.0
    %1474 = vmatprep.subr.mxu0 0.0
    %1475 = vmatpush1.msra.mxu0 0.0
    %1476 = vmatprep.subr.mxu0 0.0
    %1477 = vmatpush1.msra.mxu0 0.0
    %1478 = vmatprep.subr.mxu0 0.0
    %1479 = vmatpush1.msra.mxu0 0.0
    %1480 = vmatprep.subr.mxu0 0.0
    %1481 = vmatpush1.msra.mxu0 0.0
    %1482 = vmatprep.subr.mxu0 0.0
    %1483 = vmatpush1.msra.mxu0 0.0
    %1484 = vmatprep.subr.mxu0 0.0
    %1485 = vmatpush1.msra.mxu0 0.0
    %1486 = vmatprep.subr.mxu0 0.0
    %1487 = vmatpush1.msra.mxu0 0.0
    %1488 = vmatprep.subr.mxu0 0.0
    %1489 = vmatpush1.msra.mxu0 0.0
    %1490 = vmatprep.subr.mxu0 0.0
    %1491 = vmatpush1.msra.mxu0 0.0
    %1492 = vmatprep.subr.mxu0 0.0
    %1493 = vmatpush1.msra.mxu0 0.0
    %1494 = vmatprep.subr.mxu0 0.0
    %1495 = vmatpush1.msra.mxu0 0.0
    %1496 = vmatprep.subr.mxu0 0.0
    %1497 = vmatpush1.msra.mxu0 0.0
    %1498 = vmatprep.subr.mxu0 0.0
    %1499 = vmatpush1.msra.mxu0 0.0
    %1500 = vmatprep.subr.mxu0 0.0
    %1501 = vmatpush1.msra.mxu0 0.0
    %1502 = vmatprep.subr.mxu0 0.0
    %1503 = vmatpush1.msra.mxu0 0.0
    %1504 = vmatprep.subr.mxu0 0.0
    %1505 = vmatpush1.msra.mxu0 0.0
    %1506 = vmatprep.subr.mxu0 0.0
    %1507 = vmatpush1.msra.mxu0 0.0
    %1508 = vmatprep.subr.mxu0 0.0
    %1509 = vmatpush1.msra.mxu0 0.0
    %1510 = vmatprep.subr.mxu0 0.0
    %1511 = vmatpush1.msra.mxu0 0.0
    %1512 = vmatprep.subr.mxu0 0.0
    %1513 = vmatpush1.msra.mxu0 0.0
    %1514 = vmatprep.subr.mxu0 0.0
    %1515 = vmatpush1.msra.mxu0 0.0
    %1516 = vmatprep.subr.mxu0 0.0
    %1517 = vmatpush1.msra.mxu0 0.0
    %1518 = vmatprep.subr.mxu0 0.0
    %1519 = vmatpush1.msra.mxu0 0.0
    %1520 = vmatprep.subr.mxu0 0.0
    %1521 = vmatpush1.msra.mxu0 0.0
    %1522 = vmatprep.mubr.f32.mxu0 0.0
    %1523 = vmatmul.mubr.f32.gmra.mrb[0].mxu0 %v1456
    %v1524 = vpop.f32.mrb[0].mxu0
    %v1525 = vadd.f32 0.0, %v1524
    %v1526 = vpop.f32.mrb[0].mxu0
    %1527 = vdwg.mxu0
    %v1528 = vmul.f32 %v1525, %v57
    %v1529 = vadd.f32 %v1528, 0.0
    %v1530 = vmul.f32 %v1353, %v62
    %v1532 = vsel %vm89, %v1530, 0
    %1534 = vmatprep.subr.mxu0 0.0
    %1535 = vmatpush1.xpose.msra.mxu0 %v1364
    %1536 = vmatprep.subr.mxu0 0.0
    %1537 = vmatpush1.xpose.msra.mxu0 %v1366
    %1538 = vmatprep.subr.mxu0 0.0
    %1539 = vmatpush1.xpose.msra.mxu0 0.0
    %1540 = vmatprep.subr.mxu0 0.0
    %1541 = vmatpush1.xpose.msra.mxu0 0.0
    %1542 = vmatprep.subr.mxu0 0.0
    %1543 = vmatpush1.xpose.msra.mxu0 0.0
    %1544 = vmatprep.subr.mxu0 0.0
    %1545 = vmatpush1.xpose.msra.mxu0 0.0
    %1546 = vmatprep.subr.mxu0 0.0
    %1547 = vmatpush1.xpose.msra.mxu0 0.0
    %1548 = vmatprep.subr.mxu0 0.0
    %1549 = vmatpush1.xpose.msra.mxu0 0.0
    %1550 = vmatprep.subr.mxu0 0.0
    %1551 = vmatpush1.xpose.msra.mxu0 0.0
    %1552 = vmatprep.subr.mxu0 0.0
    %1553 = vmatpush1.xpose.msra.mxu0 0.0
    %1554 = vmatprep.subr.mxu0 0.0
    %1555 = vmatpush1.xpose.msra.mxu0 0.0
    %1556 = vmatprep.subr.mxu0 0.0
    %1557 = vmatpush1.xpose.msra.mxu0 0.0
    %1558 = vmatprep.subr.mxu0 0.0
    %1559 = vmatpush1.xpose.msra.mxu0 0.0
    %1560 = vmatprep.subr.mxu0 0.0
    %1561 = vmatpush1.xpose.msra.mxu0 0.0
    %1562 = vmatprep.subr.mxu0 0.0
    %1563 = vmatpush1.xpose.msra.mxu0 0.0
    %1564 = vmatprep.subr.mxu0 0.0
    %1565 = vmatpush1.xpose.msra.mxu0 0.0
    %1566 = vmatprep.subr.mxu0 0.0
    %1567 = vmatpush1.xpose.msra.mxu0 0.0
    %1568 = vmatprep.subr.mxu0 0.0
    %1569 = vmatpush1.xpose.msra.mxu0 0.0
    %1570 = vmatprep.subr.mxu0 0.0
    %1571 = vmatpush1.xpose.msra.mxu0 0.0
    %1572 = vmatprep.subr.mxu0 0.0
    %1573 = vmatpush1.xpose.msra.mxu0 0.0
    %1574 = vmatprep.subr.mxu0 0.0
    %1575 = vmatpush1.xpose.msra.mxu0 0.0
    %1576 = vmatprep.subr.mxu0 0.0
    %1577 = vmatpush1.xpose.msra.mxu0 0.0
    %1578 = vmatprep.subr.mxu0 0.0
    %1579 = vmatpush1.xpose.msra.mxu0 0.0
    %1580 = vmatprep.subr.mxu0 0.0
    %1581 = vmatpush1.xpose.msra.mxu0 0.0
    %1582 = vmatprep.subr.mxu0 0.0
    %1583 = vmatpush1.xpose.msra.mxu0 0.0
    %1584 = vmatprep.subr.mxu0 0.0
    %1585 = vmatpush1.xpose.msra.mxu0 0.0
    %1586 = vmatprep.subr.mxu0 0.0
    %1587 = vmatpush1.xpose.msra.mxu0 0.0
    %1588 = vmatprep.subr.mxu0 0.0
    %1589 = vmatpush1.xpose.msra.mxu0 0.0
    %1590 = vmatprep.subr.mxu0 0.0
    %1591 = vmatpush1.xpose.msra.mxu0 0.0
    %1592 = vmatprep.subr.mxu0 0.0
    %1593 = vmatpush1.xpose.msra.mxu0 0.0
    %1594 = vmatprep.subr.mxu0 0.0
    %1595 = vmatpush1.xpose.msra.mxu0 0.0
    %1596 = vmatprep.subr.mxu0 0.0
    %1597 = vmatpush1.xpose.msra.mxu0 0.0
    %1598 = vmatprep.mubr.f32.mxu0 0.0
    %1599 = vmatmul.mubr.f32.gmra.mrb[0].mxu0 %v1532
    %v1600 = vpop.f32.mrb[0].mxu0
    %v1601 = vadd.f32 0.0, %v1600
    %v1602 = vpop.f32.mrb[0].mxu0
    %1603 = vdwg.mxu0
    %v1604 = vsel %vm426, %v1601, -inf
    %1605 = vmax.xlane.f32.xlu0 %v1604
    %v1606 = vpop.xlane.xlu0 %1605
    %v1607 = vsub.f32 %v1601, %v1606
    %v1608 = vmul.f32 %v1607, 1.442695
    %v1609 = vpow.pop %v1608
    %v1610 = vsel %vm426, %v1609, 0.0
    %1611 = vadd.xlane.f32.xlu0 %v1610
    %v1612 = vpop.xlane.xlu0 %1611
    %v1613 = vrcp.pop %v1612
    %v1614 = vmul.f32 %v1609, %v1613
    %v1616 = vsel %vm426, %v1614, 0
    %1618 = vmatprep.subr.mxu0 0.0
    %1619 = vmatpush1.msra.mxu0 %v1450
    %1620 = vmatprep.subr.mxu0 0.0
    %1621 = vmatpush1.msra.mxu0 %v1452
    %1622 = vmatprep.subr.mxu0 0.0
    %1623 = vmatpush1.msra.mxu0 0.0
    %1624 = vmatprep.subr.mxu0 0.0
    %1625 = vmatpush1.msra.mxu0 0.0
    %1626 = vmatprep.subr.mxu0 0.0
    %1627 = vmatpush1.msra.mxu0 0.0
    %1628 = vmatprep.subr.mxu0 0.0
    %1629 = vmatpush1.msra.mxu0 0.0
    %1630 = vmatprep.subr.mxu0 0.0
    %1631 = vmatpush1.msra.mxu0 0.0
    %1632 = vmatprep.subr.mxu0 0.0
    %1633 = vmatpush1.msra.mxu0 0.0
    %1634 = vmatprep.subr.mxu0 0.0
    %1635 = vmatpush1.msra.mxu0 0.0
    %1636 = vmatprep.subr.mxu0 0.0
    %1637 = vmatpush1.msra.mxu0 0.0
    %1638 = vmatprep.subr.mxu0 0.0
    %1639 = vmatpush1.msra.mxu0 0.0
    %1640 = vmatprep.subr.mxu0 0.0
    %1641 = vmatpush1.msra.mxu0 0.0
    %1642 = vmatprep.subr.mxu0 0.0
    %1643 = vmatpush1.msra.mxu0 0.0
    %1644 = vmatprep.subr.mxu0 0.0
    %1645 = vmatpush1.msra.mxu0 0.0
    %1646 = vmatprep.subr.mxu0 0.0
    %1647 = vmatpush1.msra.mxu0 0.0
    %1648 = vmatprep.subr.mxu0 0.0
    %1649 = vmatpush1.msra.mxu0 0.0
    %1650 = vmatprep.subr.mxu0 0.0
    %1651 = vmatpush1.msra.mxu0 0.0
    %1652 = vmatprep.subr.mxu0 0.0
    %1653 = vmatpush1.msra.mxu0 0.0
    %1654 = vmatprep.subr.mxu0 0.0
    %1655 = vmatpush1.msra.mxu0 0.0
    %1656 = vmatprep.subr.mxu0 0.0
    %1657 = vmatpush1.msra.mxu0 0.0
    %1658 = vmatprep.subr.mxu0 0.0
    %1659 = vmatpush1.msra.mxu0 0.0
    %1660 = vmatprep.subr.mxu0 0.0
    %1661 = vmatpush1.msra.mxu0 0.0
    %1662 = vmatprep.subr.mxu0 0.0
    %1663 = vmatpush1.msra.mxu0 0.0
    %1664 = vmatprep.subr.mxu0 0.0
    %1665 = vmatpush1.msra.mxu0 0.0
    %1666 = vmatprep.subr.mxu0 0.0
    %1667 = vmatpush1.msra.mxu0 0.0
    %1668 = vmatprep.subr.mxu0 0.0
    %1669 = vmatpush1.msra.mxu0 0.0
    %1670 = vmatprep.subr.mxu0 0.0
    %1671 = vmatpush1.msra.mxu0 0.0
    %1672 = vmatprep.subr.mxu0 0.0
    %1673 = vmatpush1.msra.mxu0 0.0
    %1674 = vmatprep.subr.mxu0 0.0
    %1675 = vmatpush1.msra.mxu0 0.0
    %1676 = vmatprep.subr.mxu0 0.0
    %1677 = vmatpush1.msra.mxu0 0.0
    %1678 = vmatprep.subr.mxu0 0.0
    %1679 = vmatpush1.msra.mxu0 0.0
    %1680 = vmatprep.subr.mxu0 0.0
    %1681 = vmatpush1.msra.mxu0 0.0
    %1682 = vmatprep.mubr.f32.mxu0 0.0
    %1683 = vmatmul.mubr.f32.gmra.mrb[0].mxu0 %v1616
    %v1684 = vpop.f32.mrb[0].mxu0
    %v1685 = vadd.f32 0.0, %v1684
    %v1686 = vpop.f32.mrb[0].mxu0
    %1687 = vdwg.mxu0
    %v1688 = vmul.f32 %v1685, %v62
    %v1689 = vadd.f32 %v1529, %v1688
    %v1690 = vld [vmem:[%s8] sm:$0xff]
    %v1691 = vld [vmem:[%s8 + $0x8] sm:$0xff]
    %v1692 = vld [vmem:[%s8 + $0x10] sm:$0xff]
    %v1693 = vld [vmem:[%s8 + $0x18] sm:$0xff]
    %v1695 = vsel %vm89, %v678, 0
    %v1698 = vsel %vm89, %v1015, 0
    %v1701 = vsel %vm89, %v1352, 0
    %v1704 = vsel %vm89, %v1689, 0
    %1706 = vmatprep.subr.mxu0 0.0
    %1707 = vmatpush1.msra.mxu0 %v1690
    %1708 = vmatprep.subr.mxu0 0.0
    %1709 = vmatpush1.msra.mxu0 %v1691
    %1710 = vmatprep.subr.mxu0 0.0
    %1711 = vmatpush1.msra.mxu0 %v1692
    %1712 = vmatprep.subr.mxu0 0.0
    %1713 = vmatpush1.msra.mxu0 %v1693
    %1714 = vmatprep.subr.mxu0 0.0
    %1715 = vmatpush1.msra.mxu0 0.0
    %1716 = vmatprep.subr.mxu0 0.0
    %1717 = vmatpush1.msra.mxu0 0.0
    %1718 = vmatprep.subr.mxu0 0.0
    %1719 = vmatpush1.msra.mxu0 0.0
    %1720 = vmatprep.subr.mxu0 0.0
    %1721 = vmatpush1.msra.mxu0 0.0
    %1722 = vmatprep.subr.mxu0 0.0
    %1723 = vmatpush1.msra.mxu0 0.0
    %1724 = vmatprep.subr.mxu0 0.0
    %1725 = vmatpush1.msra.mxu0 0.0
    %1726 = vmatprep.subr.mxu0 0.0
    %1727 = vmatpush1.msra.mxu0 0.0
    %1728 = vmatprep.subr.mxu0 0.0
    %1729 = vmatpush1.msra.mxu0 0.0
    %1730 = vmatprep.subr.mxu0 0.0
    %1731 = vmatpush1.msra.mxu0 0.0
    %1732 = vmatprep.subr.mxu0 0.0
    %1733 = vmatpush1.msra.mxu0 0.0
    %1734 = vmatprep.subr.mxu0 0.0
    %1735 = vmatpush1.msra.mxu0 0.0
    %1736 = vmatprep.subr.mxu0 0.0
    %1737 = vmatpush1.msra.mxu0 0.0
    %1738 = vmatprep.subr.mxu0 0.0
    %1739 = vmatpush1.msra.mxu0 0.0
    %1740 = vmatprep.subr.mxu0 0.0
    %1741 = vmatpush1.msra.mxu0 0.0
    %1742 = vmatprep.subr.mxu0 0.0
    %1743 = vmatpush1.msra.mxu0 0.0
    %1744 = vmatprep.subr.mxu0 0.0
    %1745 = vmatpush1.msra.mxu0 0.0
    %1746 = vmatprep.subr.mxu0 0.0
    %1747 = vmatpush1.msra.mxu0 0.0
    %1748 = vmatprep.subr.mxu0 0.0
    %1749 = vmatpush1.msra.mxu0 0.0
    %1750 = vmatprep.subr.mxu0 0.0
    %1751 = vmatpush1.msra.mxu0 0.0
    %1752 = vmatprep.subr.mxu0 0.0
    %1753 = vmatpush1.msra.mxu0 0.0
    %1754 = vmatprep.subr.mxu0 0.0
    %1755 = vmatpush1.msra.mxu0 0.0
    %1756 = vmatprep.subr.mxu0 0.0
    %1757 = vmatpush1.msra.mxu0 0.0
    %1758 = vmatprep.subr.mxu0 0.0
    %1759 = vmatpush1.msra.mxu0 0.0
    %1760 = vmatprep.subr.mxu0 0.0
    %1761 = vmatpush1.msra.mxu0 0.0
    %1762 = vmatprep.subr.mxu0 0.0
    %1763 = vmatpush1.msra.mxu0 0.0
    %1764 = vmatprep.subr.mxu0 0.0
    %1765 = vmatpush1.msra.mxu0 0.0
    %1766 = vmatprep.subr.mxu0 0.0
    %1767 = vmatpush1.msra.mxu0 0.0
    %1768 = vmatprep.subr.mxu0 0.0
    %1769 = vmatpush1.msra.mxu0 0.0
    %1770 = vmatprep.mubr.f32.mxu0 0.0
    %1771 = vmatmul.mubr.f32.gmra.mrb[0].mxu0 %v1695
    %v1772 = vpop.f32.mrb[0].mxu0
    %v1773 = vadd.f32 0.0, %v1772
    %v1774 = vpop.f32.mrb[0].mxu0
    %1775 = vmatprep.mubr.f32.mxu0 0.0
    %1776 = vmatmul.mubr.f32.gmra.mrb[0].mxu0 %v1698
    %v1777 = vpop.f32.mrb[0].mxu0
    %v1778 = vadd.f32 0.0, %v1777
    %v1779 = vpop.f32.mrb[0].mxu0
    %1780 = vmatprep.mubr.f32.mxu0 0.0
    %1781 = vmatmul.mubr.f32.gmra.mrb[0].mxu0 %v1701
    %v1782 = vpop.f32.mrb[0].mxu0
    %v1783 = vadd.f32 0.0, %v1782
    %v1784 = vpop.f32.mrb[0].mxu0
    %1785 = vmatprep.mubr.f32.mxu0 0.0
    %1786 = vmatmul.mubr.f32.gmra.mrb[0].mxu0 %v1704
    %v1787 = vpop.f32.mrb[0].mxu0
    %v1788 = vadd.f32 0.0, %v1787
    %v1789 = vpop.f32.mrb[0].mxu0
    %1790 = vdwg.mxu0
    %v1791 = vadd.f32 %v86, %v1773
    %v1792 = vadd.f32 %v86, %v1778
    %v1793 = vadd.f32 %v86, %v1783
    %v1794 = vadd.f32 %v86, %v1788
    %v1795 = vld [vmem:[%s9] sm:$0x1]
    %v1796 = vld [vmem:[%s10] sm:$0x1]
    %v1797 = vsel %vm89, %v1791, 0.0
    %1798 = vadd.xlane.f32.xlu0 %v1797
    %v1799 = vpop.xlane.xlu0 %1798
    %v1800 = vsel %vm89, %v1792, 0.0
    %1801 = vadd.xlane.f32.xlu0 %v1800
    %v1802 = vpop.xlane.xlu0 %1801
    %v1803 = vsel %vm89, %v1793, 0.0
    %1804 = vadd.xlane.f32.xlu0 %v1803
    %v1805 = vpop.xlane.xlu0 %1804
    %v1806 = vsel %vm89, %v1794, 0.0
    %1807 = vadd.xlane.f32.xlu0 %v1806
    %v1808 = vpop.xlane.xlu0 %1807
    %v1809 = vmul.f32 %v1799, %v102
    %v1810 = vmul.f32 %v1802, %v102
    %v1811 = vmul.f32 %v1805, %v102
    %v1812 = vmul.f32 %v1808, %v102
    %v1813 = vsub.f32 %v1791, %v1809
    %v1814 = vsub.f32 %v1792, %v1810
    %v1815 = vsub.f32 %v1793, %v1811
    %v1816 = vsub.f32 %v1794, %v1812
    %v1817 = vmul.f32 %v1813, %v1813
    %v1818 = vmul.f32 %v1814, %v1814
    %v1819 = vmul.f32 %v1815, %v1815
    %v1820 = vmul.f32 %v1816, %v1816
    %v1821 = vsel %vm89, %v1817, 0.0
    %1822 = vadd.xlane.f32.xlu0 %v1821
    %v1823 = vpop.xlane.xlu0 %1822
    %v1824 = vsel %vm89, %v1818, 0.0
    %1825 = vadd.xlane.f32.xlu0 %v1824
    %v1826 = vpop.xlane.xlu0 %1825
    %v1827 = vsel %vm89, %v1819, 0.0
    %1828 = vadd.xlane.f32.xlu0 %v1827
    %v1829 = vpop.xlane.xlu0 %1828
    %v1830 = vsel %vm89, %v1820, 0.0
    %1831 = vadd.xlane.f32.xlu0 %v1830
    %v1832 = vpop.xlane.xlu0 %1831
    %v1833 = vmul.f32 %v1823, %v102
    %v1834 = vmul.f32 %v1826, %v102
    %v1835 = vmul.f32 %v1829, %v102
    %v1836 = vmul.f32 %v1832, %v102
    %v1837 = vadd.f32 %v1833, 1e-05
    %v1838 = vadd.f32 %v1834, 1e-05
    %v1839 = vadd.f32 %v1835, 1e-05
    %v1840 = vadd.f32 %v1836, 1e-05
    %v1841 = vrsqrt.pop %v1837
    %v1842 = vrsqrt.pop %v1838
    %v1843 = vrsqrt.pop %v1839
    %v1844 = vrsqrt.pop %v1840
    %v1845 = vmul.f32 %v1813, %v1841
    %v1846 = vmul.f32 %v1814, %v1842
    %v1847 = vmul.f32 %v1815, %v1843
    %v1848 = vmul.f32 %v1816, %v1844
    %v1850 = vlaneseq
    %v1851 = vshrl.u32 %v1850, 7
    %v1852 = vsub.s32 0, %v1851
    %v1853 = vrot.slane %v1795, %v1852
    %v1855 = vmul.f32 %v1845, %v1853
    %v1856 = vmul.f32 %v1846, %v1853
    %v1857 = vmul.f32 %v1847, %v1853
    %v1858 = vmul.f32 %v1848, %v1853
    %v1860 = vlaneseq
    %v1861 = vshrl.u32 %v1860, 7
    %v1862 = vsub.s32 0, %v1861
    %v1863 = vrot.slane %v1796, %v1862
    %v1865 = vadd.f32 %v1855, %v1863
    %v1866 = vadd.f32 %v1856, %v1863
    %v1867 = vadd.f32 %v1857, %v1863
    %v1868 = vadd.f32 %v1858, %v1863
    %v1869 = vld [vmem:[%s11] sm:$0xff]
    %v1870 = vld [vmem:[%s11 + $0x8] sm:$0xff]
    %v1871 = vld [vmem:[%s11 + $0x10] sm:$0xff]
    %v1872 = vld [vmem:[%s11 + $0x18] sm:$0xff]
    %v1874 = vsel %vm89, %v1865, 0
    %v1877 = vsel %vm89, %v1866, 0
    %v1880 = vsel %vm89, %v1867, 0
    %v1883 = vsel %vm89, %v1868, 0
    %1885 = vmatprep.subr.mxu0 0.0
    %1886 = vmatpush1.msra.mxu0 %v1869
    %1887 = vmatprep.subr.mxu0 0.0
    %1888 = vmatpush1.msra.mxu0 %v1870
    %1889 = vmatprep.subr.mxu0 0.0
    %1890 = vmatpush1.msra.mxu0 %v1871
    %1891 = vmatprep.subr.mxu0 0.0
    %1892 = vmatpush1.msra.mxu0 %v1872
    %1893 = vmatprep.subr.mxu0 0.0
    %1894 = vmatpush1.msra.mxu0 0.0
    %1895 = vmatprep.subr.mxu0 0.0
    %1896 = vmatpush1.msra.mxu0 0.0
    %1897 = vmatprep.subr.mxu0 0.0
    %1898 = vmatpush1.msra.mxu0 0.0
    %1899 = vmatprep.subr.mxu0 0.0
    %1900 = vmatpush1.msra.mxu0 0.0
    %1901 = vmatprep.subr.mxu0 0.0
    %1902 = vmatpush1.msra.mxu0 0.0
    %1903 = vmatprep.subr.mxu0 0.0
    %1904 = vmatpush1.msra.mxu0 0.0
    %1905 = vmatprep.subr.mxu0 0.0
    %1906 = vmatpush1.msra.mxu0 0.0
    %1907 = vmatprep.subr.mxu0 0.0
    %1908 = vmatpush1.msra.mxu0 0.0
    %1909 = vmatprep.subr.mxu0 0.0
    %1910 = vmatpush1.msra.mxu0 0.0
    %1911 = vmatprep.subr.mxu0 0.0
    %1912 = vmatpush1.msra.mxu0 0.0
    %1913 = vmatprep.subr.mxu0 0.0
    %1914 = vmatpush1.msra.mxu0 0.0
    %1915 = vmatprep.subr.mxu0 0.0
    %1916 = vmatpush1.msra.mxu0 0.0
    %1917 = vmatprep.subr.mxu0 0.0
    %1918 = vmatpush1.msra.mxu0 0.0
    %1919 = vmatprep.subr.mxu0 0.0
    %1920 = vmatpush1.msra.mxu0 0.0
    %1921 = vmatprep.subr.mxu0 0.0
    %1922 = vmatpush1.msra.mxu0 0.0
    %1923 = vmatprep.subr.mxu0 0.0
    %1924 = vmatpush1.msra.mxu0 0.0
    %1925 = vmatprep.subr.mxu0 0.0
    %1926 = vmatpush1.msra.mxu0 0.0
    %1927 = vmatprep.subr.mxu0 0.0
    %1928 = vmatpush1.msra.mxu0 0.0
    %1929 = vmatprep.subr.mxu0 0.0
    %1930 = vmatpush1.msra.mxu0 0.0
    %1931 = vmatprep.subr.mxu0 0.0
    %1932 = vmatpush1.msra.mxu0 0.0
    %1933 = vmatprep.subr.mxu0 0.0
    %1934 = vmatpush1.msra.mxu0 0.0
    %1935 = vmatprep.subr.mxu0 0.0
    %1936 = vmatpush1.msra.mxu0 0.0
    %1937 = vmatprep.subr.mxu0 0.0
    %1938 = vmatpush1.msra.mxu0 0.0
    %1939 = vmatprep.subr.mxu0 0.0
    %1940 = vmatpush1.msra.mxu0 0.0
    %1941 = vmatprep.subr.mxu0 0.0
    %1942 = vmatpush1.msra.mxu0 0.0
    %1943 = vmatprep.subr.mxu0 0.0
    %1944 = vmatpush1.msra.mxu0 0.0
    %1945 = vmatprep.subr.mxu0 0.0
    %1946 = vmatpush1.msra.mxu0 0.0
    %1947 = vmatprep.subr.mxu0 0.0
    %1948 = vmatpush1.msra.mxu0 0.0
    %1949 = vmatprep.mubr.f32.mxu0 0.0
    %1950 = vmatmul.mubr.f32.gmra.mrb[0].mxu0 %v1874
    %v1951 = vpop.f32.mrb[0].mxu0
    %v1952 = vadd.f32 0.0, %v1951
    %v1953 = vpop.f32.mrb[0].mxu0
    %1954 = vmatprep.mubr.f32.mxu0 0.0
    %1955 = vmatmul.mubr.f32.gmra.mrb[0].mxu0 %v1877
    %v1956 = vpop.f32.mrb[0].mxu0
    %v1957 = vadd.f32 0.0, %v1956
    %v1958 = vpop.f32.mrb[0].mxu0
    %1959 = vmatprep.mubr.f32.mxu0 0.0
    %1960 = vmatmul.mubr.f32.gmra.mrb[0].mxu0 %v1880
    %v1961 = vpop.f32.mrb[0].mxu0
    %v1962 = vadd.f32 0.0, %v1961
    %v1963 = vpop.f32.mrb[0].mxu0
    %1964 = vmatprep.mubr.f32.mxu0 0.0
    %1965 = vmatmul.mubr.f32.gmra.mrb[0].mxu0 %v1883
    %v1966 = vpop.f32.mrb[0].mxu0
    %v1967 = vadd.f32 0.0, %v1966
    %v1968 = vpop.f32.mrb[0].mxu0
    %1969 = vdwg.mxu0
    %v1970 = vmul.f32 %v1952, 0.5
    %v1971 = vmul.f32 %v1957, 0.5
    %v1972 = vmul.f32 %v1962, 0.5
    %v1973 = vmul.f32 %v1967, 0.5
    %v1974 = vmul.f32 %v1952, 0.70710677
    %v1975 = vmul.f32 %v1957, 0.70710677
    %v1976 = vmul.f32 %v1962, 0.70710677
    %v1977 = vmul.f32 %v1967, 0.70710677
    %v1978 = verf.f32.pop %v1974
    %v1979 = verf.f32.pop %v1975
    %v1980 = verf.f32.pop %v1976
    %v1981 = verf.f32.pop %v1977
    %v1982 = vadd.f32 %v1978, 1.0
    %v1983 = vadd.f32 %v1979, 1.0
    %v1984 = vadd.f32 %v1980, 1.0
    %v1985 = vadd.f32 %v1981, 1.0
    %v1986 = vmul.f32 %v1970, %v1982
    %v1987 = vmul.f32 %v1971, %v1983
    %v1988 = vmul.f32 %v1972, %v1984
    %v1989 = vmul.f32 %v1973, %v1985
    %v1990 = vld [vmem:[%s12] sm:$0xff]
    %v1991 = vld [vmem:[%s12 + $0x8] sm:$0xff]
    %v1992 = vld [vmem:[%s12 + $0x10] sm:$0xff]
    %v1993 = vld [vmem:[%s12 + $0x18] sm:$0xff]
    %v1994 = vld [vmem:[%s12 + $0x20] sm:$0xff]
    %v1995 = vld [vmem:[%s12 + $0x28] sm:$0xff]
    %v1996 = vld [vmem:[%s12 + $0x30] sm:$0xff]
    %v1997 = vld [vmem:[%s12 + $0x38] sm:$0xff]
    %v1998 = vld [vmem:[%s12 + $0x40] sm:$0xff]
    %v1999 = vld [vmem:[%s12 + $0x48] sm:$0xff]
    %v2000 = vld [vmem:[%s12 + $0x50] sm:$0xff]
    %v2001 = vld [vmem:[%s12 + $0x58] sm:$0xff]
    %v2002 = vld [vmem:[%s12 + $0x60] sm:$0xff]
    %v2003 = vld [vmem:[%s12 + $0x68] sm:$0xff]
    %v2004 = vld [vmem:[%s12 + $0x70] sm:$0xff]
    %v2005 = vld [vmem:[%s12 + $0x78] sm:$0xff]
    %2006 = vmatprep.subr.mxu0 0.0
    %2007 = vmatpush1.msra.mxu0 %v1990
    %2008 = vmatprep.subr.mxu0 0.0
    %2009 = vmatpush1.msra.mxu0 %v1991
    %2010 = vmatprep.subr.mxu0 0.0
    %2011 = vmatpush1.msra.mxu0 %v1992
    %2012 = vmatprep.subr.mxu0 0.0
    %2013 = vmatpush1.msra.mxu0 %v1993
    %2014 = vmatprep.subr.mxu0 0.0
    %2015 = vmatpush1.msra.mxu0 %v1994
    %2016 = vmatprep.subr.mxu0 0.0
    %2017 = vmatpush1.msra.mxu0 %v1995
    %2018 = vmatprep.subr.mxu0 0.0
    %2019 = vmatpush1.msra.mxu0 %v1996
    %2020 = vmatprep.subr.mxu0 0.0
    %2021 = vmatpush1.msra.mxu0 %v1997
    %2022 = vmatprep.subr.mxu0 0.0
    %2023 = vmatpush1.msra.mxu0 %v1998
    %2024 = vmatprep.subr.mxu0 0.0
    %2025 = vmatpush1.msra.mxu0 %v1999
    %2026 = vmatprep.subr.mxu0 0.0
    %2027 = vmatpush1.msra.mxu0 %v2000
    %2028 = vmatprep.subr.mxu0 0.0
    %2029 = vmatpush1.msra.mxu0 %v2001
    %2030 = vmatprep.subr.mxu0 0.0
    %2031 = vmatpush1.msra.mxu0 %v2002
    %2032 = vmatprep.subr.mxu0 0.0
    %2033 = vmatpush1.msra.mxu0 %v2003
    %2034 = vmatprep.subr.mxu0 0.0
    %2035 = vmatpush1.msra.mxu0 %v2004
    %2036 = vmatprep.subr.mxu0 0.0
    %2037 = vmatpush1.msra.mxu0 %v2005
    %2038 = vmatprep.subr.mxu0 0.0
    %2039 = vmatpush1.msra.mxu0 0.0
    %2040 = vmatprep.subr.mxu0 0.0
    %2041 = vmatpush1.msra.mxu0 0.0
    %2042 = vmatprep.subr.mxu0 0.0
    %2043 = vmatpush1.msra.mxu0 0.0
    %2044 = vmatprep.subr.mxu0 0.0
    %2045 = vmatpush1.msra.mxu0 0.0
    %2046 = vmatprep.subr.mxu0 0.0
    %2047 = vmatpush1.msra.mxu0 0.0
    %2048 = vmatprep.subr.mxu0 0.0
    %2049 = vmatpush1.msra.mxu0 0.0
    %2050 = vmatprep.subr.mxu0 0.0
    %2051 = vmatpush1.msra.mxu0 0.0
    %2052 = vmatprep.subr.mxu0 0.0
    %2053 = vmatpush1.msra.mxu0 0.0
    %2054 = vmatprep.subr.mxu0 0.0
    %2055 = vmatpush1.msra.mxu0 0.0
    %2056 = vmatprep.subr.mxu0 0.0
    %2057 = vmatpush1.msra.mxu0 0.0
    %2058 = vmatprep.subr.mxu0 0.0
    %2059 = vmatpush1.msra.mxu0 0.0
    %2060 = vmatprep.subr.mxu0 0.0
    %2061 = vmatpush1.msra.mxu0 0.0
    %2062 = vmatprep.subr.mxu0 0.0
    %2063 = vmatpush1.msra.mxu0 0.0
    %2064 = vmatprep.subr.mxu0 0.0
    %2065 = vmatpush1.msra.mxu0 0.0
    %2066 = vmatprep.subr.mxu0 0.0
    %2067 = vmatpush1.msra.mxu0 0.0
    %2068 = vmatprep.subr.mxu0 0.0
    %2069 = vmatpush1.msra.mxu0 0.0
    %2070 = vmatprep.mubr.f32.mxu0 0.0
    %2071 = vmatmul.mubr.f32.gmra.mrb[0].mxu0 %v1986
    %v2072 = vpop.f32.mrb[0].mxu0
    %v2073 = vadd.f32 0.0, %v2072
    %v2074 = vpop.f32.mrb[0].mxu0
    %2075 = vmatprep.mubr.f32.mxu0 0.0
    %2076 = vmatmul.mubr.f32.gmra.mrb[0].mxu0 %v1987
    %v2077 = vpop.f32.mrb[0].mxu0
    %v2078 = vadd.f32 0.0, %v2077
    %v2079 = vpop.f32.mrb[0].mxu0
    %2080 = vmatprep.mubr.f32.mxu0 0.0
    %2081 = vmatmul.mubr.f32.gmra.mrb[0].mxu0 %v1988
    %v2082 = vpop.f32.mrb[0].mxu0
    %v2083 = vadd.f32 0.0, %v2082
    %v2084 = vpop.f32.mrb[0].mxu0
    %2085 = vmatprep.mubr.f32.mxu0 0.0
    %2086 = vmatmul.mubr.f32.gmra.mrb[0].mxu0 %v1989
    %v2087 = vpop.f32.mrb[0].mxu0
    %v2088 = vadd.f32 0.0, %v2087
    %v2089 = vpop.f32.mrb[0].mxu0
    %2090 = vdwg.mxu0
    %v2091 = vadd.f32 %v1791, %v2073
    %v2092 = vadd.f32 %v1792, %v2078
    %v2093 = vadd.f32 %v1793, %v2083
    %v2094 = vadd.f32 %v1794, %v2088
    %s2095 = scalar_lea.vmem %s3, 1
    %v2096 = vld [vmem:[%s2095] sm:$0x1]
    %s2097 = scalar_lea.vmem %s4, 1
    %v2098 = vld [vmem:[%s2097] sm:$0x1]
    %v2100 = vlaneseq
    %v2101 = vshrl.u32 %v2100, 7
    %v2102 = vsub.s32 0, %v2101
    %v2103 = vrot.slane %v2096, %v2102
    %v2105 = vmul.f32 %v139, %v2103
    %v2106 = vmul.f32 %v140, %v2103
    %v2107 = vmul.f32 %v141, %v2103
    %v2108 = vmul.f32 %v142, %v2103
    %v2110 = vlaneseq
    %v2111 = vshrl.u32 %v2110, 7
    %v2112 = vsub.s32 0, %v2111
    %v2113 = vrot.slane %v2098, %v2112
    %v2115 = vadd.f32 %v2105, %v2113
    %v2116 = vadd.f32 %v2106, %v2113
    %v2117 = vadd.f32 %v2107, %v2113
    %v2118 = vadd.f32 %v2108, %v2113
    %s2119 = scalar_lea.vmem %s5, 1
    %v2120 = vld [vmem:[%s2119] sm:$0x1]
    %s2121 = scalar_lea.vmem %s6, 1
    %v2122 = vld [vmem:[%s2121] sm:$0x1]
    %v2123 = vsel %vm89, %v2091, 0.0
    %2124 = vadd.xlane.f32.xlu0 %v2123
    %v2125 = vpop.xlane.xlu0 %2124
    %v2126 = vsel %vm89, %v2092, 0.0
    %2127 = vadd.xlane.f32.xlu0 %v2126
    %v2128 = vpop.xlane.xlu0 %2127
    %v2129 = vsel %vm89, %v2093, 0.0
    %2130 = vadd.xlane.f32.xlu0 %v2129
    %v2131 = vpop.xlane.xlu0 %2130
    %v2132 = vsel %vm89, %v2094, 0.0
    %2133 = vadd.xlane.f32.xlu0 %v2132
    %v2134 = vpop.xlane.xlu0 %2133
    %v2135 = vmul.f32 %v2125, %v102
    %v2136 = vmul.f32 %v2128, %v102
    %v2137 = vmul.f32 %v2131, %v102
    %v2138 = vmul.f32 %v2134, %v102
    %v2139 = vsub.f32 %v2091, %v2135
    %v2140 = vsub.f32 %v2092, %v2136
    %v2141 = vsub.f32 %v2093, %v2137
    %v2142 = vsub.f32 %v2094, %v2138
    %v2143 = vmul.f32 %v2139, %v2139
    %v2144 = vmul.f32 %v2140, %v2140
    %v2145 = vmul.f32 %v2141, %v2141
    %v2146 = vmul.f32 %v2142, %v2142
    %v2147 = vsel %vm89, %v2143, 0.0
    %2148 = vadd.xlane.f32.xlu0 %v2147
    %v2149 = vpop.xlane.xlu0 %2148
    %v2150 = vsel %vm89, %v2144, 0.0
    %2151 = vadd.xlane.f32.xlu0 %v2150
    %v2152 = vpop.xlane.xlu0 %2151
    %v2153 = vsel %vm89, %v2145, 0.0
    %2154 = vadd.xlane.f32.xlu0 %v2153
    %v2155 = vpop.xlane.xlu0 %2154
    %v2156 = vsel %vm89, %v2146, 0.0
    %2157 = vadd.xlane.f32.xlu0 %v2156
    %v2158 = vpop.xlane.xlu0 %2157
    %v2159 = vmul.f32 %v2149, %v102
    %v2160 = vmul.f32 %v2152, %v102
    %v2161 = vmul.f32 %v2155, %v102
    %v2162 = vmul.f32 %v2158, %v102
    %v2163 = vadd.f32 %v2159, 1e-05
    %v2164 = vadd.f32 %v2160, 1e-05
    %v2165 = vadd.f32 %v2161, 1e-05
    %v2166 = vadd.f32 %v2162, 1e-05
    %v2167 = vrsqrt.pop %v2163
    %v2168 = vrsqrt.pop %v2164
    %v2169 = vrsqrt.pop %v2165
    %v2170 = vrsqrt.pop %v2166
    %v2171 = vmul.f32 %v2139, %v2167
    %v2172 = vmul.f32 %v2140, %v2168
    %v2173 = vmul.f32 %v2141, %v2169
    %v2174 = vmul.f32 %v2142, %v2170
    %v2176 = vlaneseq
    %v2177 = vshrl.u32 %v2176, 7
    %v2178 = vsub.s32 0, %v2177
    %v2179 = vrot.slane %v2120, %v2178
    %v2181 = vmul.f32 %v2171, %v2179
    %v2182 = vmul.f32 %v2172, %v2179
    %v2183 = vmul.f32 %v2173, %v2179
    %v2184 = vmul.f32 %v2174, %v2179
    %v2186 = vlaneseq
    %v2187 = vshrl.u32 %v2186, 7
    %v2188 = vsub.s32 0, %v2187
    %v2189 = vrot.slane %v2122, %v2188
    %v2191 = vadd.f32 %v2181, %v2189
    %v2192 = vadd.f32 %v2182, %v2189
    %v2193 = vadd.f32 %v2183, %v2189
    %v2194 = vadd.f32 %v2184, %v2189
    %2195 = vst.msk [vmem:[#allocation2] sm:$0xff] %vm89, %v2115
    %2196 = vst.msk [vmem:[#allocation2 + $0x8] sm:$0xff] %vm89, %v2191
    %2197 = vst.msk [vmem:[#allocation2 + $0x10] sm:$0xff] %vm89, %v2116
    %2198 = vst.msk [vmem:[#allocation2 + $0x18] sm:$0xff] %vm89, %v2192
    %2199 = vst.msk [vmem:[#allocation2 + $0x20] sm:$0xff] %vm89, %v2117
    %2200 = vst.msk [vmem:[#allocation2 + $0x28] sm:$0xff] %vm89, %v2193
    %2201 = vst.msk [vmem:[#allocation2 + $0x30] sm:$0xff] %vm89, %v2118
    %2202 = vst.msk [vmem:[#allocation2 + $0x38] sm:$0xff] %vm89, %v2194
    %v2203 = vld [vmem:[#allocation2] sm:$0xff]
    %v2204 = vld [vmem:[#allocation2 + $0x8] sm:$0xff]
    %v2205 = vld [vmem:[#allocation2 + $0x10] sm:$0xff]
    %v2206 = vld [vmem:[#allocation2 + $0x18] sm:$0xff]
    %v2207 = vld [vmem:[#allocation2 + $0x20] sm:$0xff]
    %v2208 = vld [vmem:[#allocation2 + $0x28] sm:$0xff]
    %v2209 = vld [vmem:[#allocation2 + $0x30] sm:$0xff]
    %v2210 = vld [vmem:[#allocation2 + $0x38] sm:$0xff]
    %s2211 = scalar_lea.vmem %s7, 32
    %v2212 = vld [vmem:[%s2211] sm:$0xff]
    %v2213 = vld [vmem:[%s2211 + $0x8] sm:$0xff]
    %v2214 = vld [vmem:[%s2211 + $0x10] sm:$0xff]
    %v2215 = vld [vmem:[%s2211 + $0x18] sm:$0xff]
    %v2217 = vsel %vm89, %v2203, 0
    %v2220 = vsel %vm89, %v2204, 0
    %v2223 = vsel %vm89, %v2205, 0
    %v2226 = vsel %vm89, %v2206, 0
    %v2229 = vsel %vm89, %v2207, 0
    %v2232 = vsel %vm89, %v2208, 0
    %v2235 = vsel %vm89, %v2209, 0
    %v2238 = vsel %vm89, %v2210, 0
    %2240 = vmatprep.subr.mxu0 0.0
    %2241 = vmatpush1.msra.mxu0 %v2212
    %2242 = vmatprep.subr.mxu0 0.0
    %2243 = vmatpush1.msra.mxu0 %v2213
    %2244 = vmatprep.subr.mxu0 0.0
    %2245 = vmatpush1.msra.mxu0 %v2214
    %2246 = vmatprep.subr.mxu0 0.0
    %2247 = vmatpush1.msra.mxu0 %v2215
    %2248 = vmatprep.subr.mxu0 0.0
    %2249 = vmatpush1.msra.mxu0 0.0
    %2250 = vmatprep.subr.mxu0 0.0
    %2251 = vmatpush1.msra.mxu0 0.0
    %2252 = vmatprep.subr.mxu0 0.0
    %2253 = vmatpush1.msra.mxu0 0.0
    %2254 = vmatprep.subr.mxu0 0.0
    %2255 = vmatpush1.msra.mxu0 0.0
    %2256 = vmatprep.subr.mxu0 0.0
    %2257 = vmatpush1.msra.mxu0 0.0
    %2258 = vmatprep.subr.mxu0 0.0
    %2259 = vmatpush1.msra.mxu0 0.0
    %2260 = vmatprep.subr.mxu0 0.0
    %2261 = vmatpush1.msra.mxu0 0.0
    %2262 = vmatprep.subr.mxu0 0.0
    %2263 = vmatpush1.msra.mxu0 0.0
    %2264 = vmatprep.subr.mxu0 0.0
    %2265 = vmatpush1.msra.mxu0 0.0
    %2266 = vmatprep.subr.mxu0 0.0
    %2267 = vmatpush1.msra.mxu0 0.0
    %2268 = vmatprep.subr.mxu0 0.0
    %2269 = vmatpush1.msra.mxu0 0.0
    %2270 = vmatprep.subr.mxu0 0.0
    %2271 = vmatpush1.msra.mxu0 0.0
    %2272 = vmatprep.subr.mxu0 0.0
    %2273 = vmatpush1.msra.mxu0 0.0
    %2274 = vmatprep.subr.mxu0 0.0
    %2275 = vmatpush1.msra.mxu0 0.0
    %2276 = vmatprep.subr.mxu0 0.0
    %2277 = vmatpush1.msra.mxu0 0.0
    %2278 = vmatprep.subr.mxu0 0.0
    %2279 = vmatpush1.msra.mxu0 0.0
    %2280 = vmatprep.subr.mxu0 0.0
    %2281 = vmatpush1.msra.mxu0 0.0
    %2282 = vmatprep.subr.mxu0 0.0
    %2283 = vmatpush1.msra.mxu0 0.0
    %2284 = vmatprep.subr.mxu0 0.0
    %2285 = vmatpush1.msra.mxu0 0.0
    %2286 = vmatprep.subr.mxu0 0.0
    %2287 = vmatpush1.msra.mxu0 0.0
    %2288 = vmatprep.subr.mxu0 0.0
    %2289 = vmatpush1.msra.mxu0 0.0
    %2290 = vmatprep.subr.mxu0 0.0
    %2291 = vmatpush1.msra.mxu0 0.0
    %2292 = vmatprep.subr.mxu0 0.0
    %2293 = vmatpush1.msra.mxu0 0.0
    %2294 = vmatprep.subr.mxu0 0.0
    %2295 = vmatpush1.msra.mxu0 0.0
    %2296 = vmatprep.subr.mxu0 0.0
    %2297 = vmatpush1.msra.mxu0 0.0
    %2298 = vmatprep.subr.mxu0 0.0
    %2299 = vmatpush1.msra.mxu0 0.0
    %2300 = vmatprep.subr.mxu0 0.0
    %2301 = vmatpush1.msra.mxu0 0.0
    %2302 = vmatprep.subr.mxu0 0.0
    %2303 = vmatpush1.msra.mxu0 0.0
    %2304 = vmatprep.mubr.f32.mxu0 0.0
    %2305 = vmatmul.mubr.f32.gmra.mrb[0].mxu0 %v2217
    %v2306 = vpop.f32.mrb[0].mxu0
    %v2307 = vadd.f32 0.0, %v2306
    %v2308 = vpop.f32.mrb[0].mxu0
    %2309 = vmatprep.mubr.f32.mxu0 0.0
    %2310 = vmatmul.mubr.f32.gmra.mrb[0].mxu0 %v2220
    %v2311 = vpop.f32.mrb[0].mxu0
    %v2312 = vadd.f32 0.0, %v2311
    %v2313 = vpop.f32.mrb[0].mxu0
    %2314 = vmatprep.mubr.f32.mxu0 0.0
    %2315 = vmatmul.mubr.f32.gmra.mrb[0].mxu0 %v2223
    %v2316 = vpop.f32.mrb[0].mxu0
    %v2317 = vadd.f32 0.0, %v2316
    %v2318 = vpop.f32.mrb[0].mxu0
    %2319 = vmatprep.mubr.f32.mxu0 0.0
    %2320 = vmatmul.mubr.f32.gmra.mrb[0].mxu0 %v2226
    %v2321 = vpop.f32.mrb[0].mxu0
    %v2322 = vadd.f32 0.0, %v2321
    %v2323 = vpop.f32.mrb[0].mxu0
    %2324 = vmatprep.mubr.f32.mxu0 0.0
    %2325 = vmatmul.mubr.f32.gmra.mrb[0].mxu0 %v2229
    %v2326 = vpop.f32.mrb[0].mxu0
    %v2327 = vadd.f32 0.0, %v2326
    %v2328 = vpop.f32.mrb[0].mxu0
    %2329 = vmatprep.mubr.f32.mxu0 0.0
    %2330 = vmatmul.mubr.f32.gmra.mrb[0].mxu0 %v2232
    %v2331 = vpop.f32.mrb[0].mxu0
    %v2332 = vadd.f32 0.0, %v2331
    %v2333 = vpop.f32.mrb[0].mxu0
    %2334 = vmatprep.mubr.f32.mxu0 0.0
    %2335 = vmatmul.mubr.f32.gmra.mrb[0].mxu0 %v2235
    %v2336 = vpop.f32.mrb[0].mxu0
    %v2337 = vadd.f32 0.0, %v2336
    %v2338 = vpop.f32.mrb[0].mxu0
    %2339 = vmatprep.mubr.f32.mxu0 0.0
    %2340 = vmatmul.mubr.f32.gmra.mrb[0].mxu0 %v2238
    %v2341 = vpop.f32.mrb[0].mxu0
    %v2342 = vadd.f32 0.0, %v2341
    %v2343 = vpop.f32.mrb[0].mxu0
    %2344 = vdwg.mxu0
    %v2345 = vmul.f32 %v2312, 0.25
    %v2346 = vmul.f32 %v2345, %v57
    %2349 = vrot.lane.b32.xlu0 %v2307, 96
    %v2350 = vpop.permute.xlu0 %2349
    %2351 = vrot.lane.b32.xlu0 %v2312, 96
    %v2352 = vpop.permute.xlu0 %2351
    %v2354 = vsel %vm89, %v2346, 0
    %v2356 = vsel %vm89, %v2350, 0
    %v2358 = vsel %vm89, %v2352, 0
    %2360 = vmatprep.subr.mxu0 0.0
    %2361 = vmatpush1.xpose.msra.mxu0 %v2356
    %2362 = vmatprep.subr.mxu0 0.0
    %2363 = vmatpush1.xpose.msra.mxu0 %v2358
    %2364 = vmatprep.subr.mxu0 0.0
    %2365 = vmatpush1.xpose.msra.mxu0 0.0
    %2366 = vmatprep.subr.mxu0 0.0
    %2367 = vmatpush1.xpose.msra.mxu0 0.0
    %2368 = vmatprep.subr.mxu0 0.0
    %2369 = vmatpush1.xpose.msra.mxu0 0.0
    %2370 = vmatprep.subr.mxu0 0.0
    %2371 = vmatpush1.xpose.msra.mxu0 0.0
    %2372 = vmatprep.subr.mxu0 0.0
    %2373 = vmatpush1.xpose.msra.mxu0 0.0
    %2374 = vmatprep.subr.mxu0 0.0
    %2375 = vmatpush1.xpose.msra.mxu0 0.0
    %2376 = vmatprep.subr.mxu0 0.0
    %2377 = vmatpush1.xpose.msra.mxu0 0.0
    %2378 = vmatprep.subr.mxu0 0.0
    %2379 = vmatpush1.xpose.msra.mxu0 0.0
    %2380 = vmatprep.subr.mxu0 0.0
    %2381 = vmatpush1.xpose.msra.mxu0 0.0
    %2382 = vmatprep.subr.mxu0 0.0
    %2383 = vmatpush1.xpose.msra.mxu0 0.0
    %2384 = vmatprep.subr.mxu0 0.0
    %2385 = vmatpush1.xpose.msra.mxu0 0.0
    %2386 = vmatprep.subr.mxu0 0.0
    %2387 = vmatpush1.xpose.msra.mxu0 0.0
    %2388 = vmatprep.subr.mxu0 0.0
    %2389 = vmatpush1.xpose.msra.mxu0 0.0
    %2390 = vmatprep.subr.mxu0 0.0
    %2391 = vmatpush1.xpose.msra.mxu0 0.0
    %2392 = vmatprep.subr.mxu0 0.0
    %2393 = vmatpush1.xpose.msra.mxu0 0.0
    %2394 = vmatprep.subr.mxu0 0.0
    %2395 = vmatpush1.xpose.msra.mxu0 0.0
    %2396 = vmatprep.subr.mxu0 0.0
    %2397 = vmatpush1.xpose.msra.mxu0 0.0
    %2398 = vmatprep.subr.mxu0 0.0
    %2399 = vmatpush1.xpose.msra.mxu0 0.0
    %2400 = vmatprep.subr.mxu0 0.0
    %2401 = vmatpush1.xpose.msra.mxu0 0.0
    %2402 = vmatprep.subr.mxu0 0.0
    %2403 = vmatpush1.xpose.msra.mxu0 0.0
    %2404 = vmatprep.subr.mxu0 0.0
    %2405 = vmatpush1.xpose.msra.mxu0 0.0
    %2406 = vmatprep.subr.mxu0 0.0
    %2407 = vmatpush1.xpose.msra.mxu0 0.0
    %2408 = vmatprep.subr.mxu0 0.0
    %2409 = vmatpush1.xpose.msra.mxu0 0.0
    %2410 = vmatprep.subr.mxu0 0.0
    %2411 = vmatpush1.xpose.msra.mxu0 0.0
    %2412 = vmatprep.subr.mxu0 0.0
    %2413 = vmatpush1.xpose.msra.mxu0 0.0
    %2414 = vmatprep.subr.mxu0 0.0
    %2415 = vmatpush1.xpose.msra.mxu0 0.0
    %2416 = vmatprep.subr.mxu0 0.0
    %2417 = vmatpush1.xpose.msra.mxu0 0.0
    %2418 = vmatprep.subr.mxu0 0.0
    %2419 = vmatpush1.xpose.msra.mxu0 0.0
    %2420 = vmatprep.subr.mxu0 0.0
    %2421 = vmatpush1.xpose.msra.mxu0 0.0
    %2422 = vmatprep.subr.mxu0 0.0
    %2423 = vmatpush1.xpose.msra.mxu0 0.0
    %2424 = vmatprep.mubr.f32.mxu0 0.0
    %2425 = vmatmul.mubr.f32.gmra.mrb[0].mxu0 %v2354
    %v2426 = vpop.f32.mrb[0].mxu0
    %v2427 = vadd.f32 0.0, %v2426
    %v2428 = vpop.f32.mrb[0].mxu0
    %2429 = vdwg.mxu0
    %v2430 = vsel %vm426, %v2427, -inf
    %2431 = vmax.xlane.f32.xlu0 %v2430
    %v2432 = vpop.xlane.xlu0 %2431
    %v2433 = vsub.f32 %v2427, %v2432
    %v2434 = vmul.f32 %v2433, 1.442695
    %v2435 = vpow.pop %v2434
    %v2436 = vsel %vm426, %v2435, 0.0
    %2437 = vadd.xlane.f32.xlu0 %v2436
    %v2438 = vpop.xlane.xlu0 %2437
    %v2439 = vrcp.pop %v2438
    %v2440 = vmul.f32 %v2435, %v2439
    %2441 = vrot.lane.b32.xlu0 %v2307, 64
    %v2442 = vpop.permute.xlu0 %2441
    %2443 = vrot.lane.b32.xlu0 %v2312, 64
    %v2444 = vpop.permute.xlu0 %2443
    %v2448 = vsel %vm426, %v2440, 0
    %2450 = vmatprep.subr.mxu0 0.0
    %2451 = vmatpush1.msra.mxu0 %v2442
    %2452 = vmatprep.subr.mxu0 0.0
    %2453 = vmatpush1.msra.mxu0 %v2444
    %2454 = vmatprep.subr.mxu0 0.0
    %2455 = vmatpush1.msra.mxu0 0.0
    %2456 = vmatprep.subr.mxu0 0.0
    %2457 = vmatpush1.msra.mxu0 0.0
    %2458 = vmatprep.subr.mxu0 0.0
    %2459 = vmatpush1.msra.mxu0 0.0
    %2460 = vmatprep.subr.mxu0 0.0
    %2461 = vmatpush1.msra.mxu0 0.0
    %2462 = vmatprep.subr.mxu0 0.0
    %2463 = vmatpush1.msra.mxu0 0.0
    %2464 = vmatprep.subr.mxu0 0.0
    %2465 = vmatpush1.msra.mxu0 0.0
    %2466 = vmatprep.subr.mxu0 0.0
    %2467 = vmatpush1.msra.mxu0 0.0
    %2468 = vmatprep.subr.mxu0 0.0
    %2469 = vmatpush1.msra.mxu0 0.0
    %2470 = vmatprep.subr.mxu0 0.0
    %2471 = vmatpush1.msra.mxu0 0.0
    %2472 = vmatprep.subr.mxu0 0.0
    %2473 = vmatpush1.msra.mxu0 0.0
    %2474 = vmatprep.subr.mxu0 0.0
    %2475 = vmatpush1.msra.mxu0 0.0
    %2476 = vmatprep.subr.mxu0 0.0
    %2477 = vmatpush1.msra.mxu0 0.0
    %2478 = vmatprep.subr.mxu0 0.0
    %2479 = vmatpush1.msra.mxu0 0.0
    %2480 = vmatprep.subr.mxu0 0.0
    %2481 = vmatpush1.msra.mxu0 0.0
    %2482 = vmatprep.subr.mxu0 0.0
    %2483 = vmatpush1.msra.mxu0 0.0
    %2484 = vmatprep.subr.mxu0 0.0
    %2485 = vmatpush1.msra.mxu0 0.0
    %2486 = vmatprep.subr.mxu0 0.0
    %2487 = vmatpush1.msra.mxu0 0.0
    %2488 = vmatprep.subr.mxu0 0.0
    %2489 = vmatpush1.msra.mxu0 0.0
    %2490 = vmatprep.subr.mxu0 0.0
    %2491 = vmatpush1.msra.mxu0 0.0
    %2492 = vmatprep.subr.mxu0 0.0
    %2493 = vmatpush1.msra.mxu0 0.0
    %2494 = vmatprep.subr.mxu0 0.0
    %2495 = vmatpush1.msra.mxu0 0.0
    %2496 = vmatprep.subr.mxu0 0.0
    %2497 = vmatpush1.msra.mxu0 0.0
    %2498 = vmatprep.subr.mxu0 0.0
    %2499 = vmatpush1.msra.mxu0 0.0
    %2500 = vmatprep.subr.mxu0 0.0
    %2501 = vmatpush1.msra.mxu0 0.0
    %2502 = vmatprep.subr.mxu0 0.0
    %2503 = vmatpush1.msra.mxu0 0.0
    %2504 = vmatprep.subr.mxu0 0.0
    %2505 = vmatpush1.msra.mxu0 0.0
    %2506 = vmatprep.subr.mxu0 0.0
    %2507 = vmatpush1.msra.mxu0 0.0
    %2508 = vmatprep.subr.mxu0 0.0
    %2509 = vmatpush1.msra.mxu0 0.0
    %2510 = vmatprep.subr.mxu0 0.0
    %2511 = vmatpush1.msra.mxu0 0.0
    %2512 = vmatprep.subr.mxu0 0.0
    %2513 = vmatpush1.msra.mxu0 0.0
    %2514 = vmatprep.mubr.f32.mxu0 0.0
    %2515 = vmatmul.mubr.f32.gmra.mrb[0].mxu0 %v2448
    %v2516 = vpop.f32.mrb[0].mxu0
    %v2517 = vadd.f32 0.0, %v2516
    %v2518 = vpop.f32.mrb[0].mxu0
    %2519 = vdwg.mxu0
    %v2520 = vmul.f32 %v2517, %v57
    %v2521 = vadd.f32 %v2520, 0.0
    %v2522 = vmul.f32 %v2345, %v62
    %v2524 = vsel %vm89, %v2522, 0
    %2526 = vmatprep.subr.mxu0 0.0
    %2527 = vmatpush1.xpose.msra.mxu0 %v2356
    %2528 = vmatprep.subr.mxu0 0.0
    %2529 = vmatpush1.xpose.msra.mxu0 %v2358
    %2530 = vmatprep.subr.mxu0 0.0
    %2531 = vmatpush1.xpose.msra.mxu0 0.0
    %2532 = vmatprep.subr.mxu0 0.0
    %2533 = vmatpush1.xpose.msra.mxu0 0.0
    %2534 = vmatprep.subr.mxu0 0.0
    %2535 = vmatpush1.xpose.msra.mxu0 0.0
    %2536 = vmatprep.subr.mxu0 0.0
    %2537 = vmatpush1.xpose.msra.mxu0 0.0
    %2538 = vmatprep.subr.mxu0 0.0
    %2539 = vmatpush1.xpose.msra.mxu0 0.0
    %2540 = vmatprep.subr.mxu0 0.0
    %2541 = vmatpush1.xpose.msra.mxu0 0.0
    %2542 = vmatprep.subr.mxu0 0.0
    %2543 = vmatpush1.xpose.msra.mxu0 0.0
    %2544 = vmatprep.subr.mxu0 0.0
    %2545 = vmatpush1.xpose.msra.mxu0 0.0
    %2546 = vmatprep.subr.mxu0 0.0
    %2547 = vmatpush1.xpose.msra.mxu0 0.0
    %2548 = vmatprep.subr.mxu0 0.0
    %2549 = vmatpush1.xpose.msra.mxu0 0.0
    %2550 = vmatprep.subr.mxu0 0.0
    %2551 = vmatpush1.xpose.msra.mxu0 0.0
    %2552 = vmatprep.subr.mxu0 0.0
    %2553 = vmatpush1.xpose.msra.mxu0 0.0
    %2554 = vmatprep.subr.mxu0 0.0
    %2555 = vmatpush1.xpose.msra.mxu0 0.0
    %2556 = vmatprep.subr.mxu0 0.0
    %2557 = vmatpush1.xpose.msra.mxu0 0.0
    %2558 = vmatprep.subr.mxu0 0.0
    %2559 = vmatpush1.xpose.msra.mxu0 0.0
    %2560 = vmatprep.subr.mxu0 0.0
    %2561 = vmatpush1.xpose.msra.mxu0 0.0
    %2562 = vmatprep.subr.mxu0 0.0
    %2563 = vmatpush1.xpose.msra.mxu0 0.0
    %2564 = vmatprep.subr.mxu0 0.0
    %2565 = vmatpush1.xpose.msra.mxu0 0.0
    %2566 = vmatprep.subr.mxu0 0.0
    %2567 = vmatpush1.xpose.msra.mxu0 0.0
    %2568 = vmatprep.subr.mxu0 0.0
    %2569 = vmatpush1.xpose.msra.mxu0 0.0
    %2570 = vmatprep.subr.mxu0 0.0
    %2571 = vmatpush1.xpose.msra.mxu0 0.0
    %2572 = vmatprep.subr.mxu0 0.0
    %2573 = vmatpush1.xpose.msra.mxu0 0.0
    %2574 = vmatprep.subr.mxu0 0.0
    %2575 = vmatpush1.xpose.msra.mxu0 0.0
    %2576 = vmatprep.subr.mxu0 0.0
    %2577 = vmatpush1.xpose.msra.mxu0 0.0
    %2578 = vmatprep.subr.mxu0 0.0
    %2579 = vmatpush1.xpose.msra.mxu0 0.0
    %2580 = vmatprep.subr.mxu0 0.0
    %2581 = vmatpush1.xpose.msra.mxu0 0.0
    %2582 = vmatprep.subr.mxu0 0.0
    %2583 = vmatpush1.xpose.msra.mxu0 0.0
    %2584 = vmatprep.subr.mxu0 0.0
    %2585 = vmatpush1.xpose.msra.mxu0 0.0
    %2586 = vmatprep.subr.mxu0 0.0
    %2587 = vmatpush1.xpose.msra.mxu0 0.0
    %2588 = vmatprep.subr.mxu0 0.0
    %2589 = vmatpush1.xpose.msra.mxu0 0.0
    %2590 = vmatprep.mubr.f32.mxu0 0.0
    %2591 = vmatmul.mubr.f32.gmra.mrb[0].mxu0 %v2524
    %v2592 = vpop.f32.mrb[0].mxu0
    %v2593 = vadd.f32 0.0, %v2592
    %v2594 = vpop.f32.mrb[0].mxu0
    %2595 = vdwg.mxu0
    %v2596 = vsel %vm426, %v2593, -inf
    %2597 = vmax.xlane.f32.xlu0 %v2596
    %v2598 = vpop.xlane.xlu0 %2597
    %v2599 = vsub.f32 %v2593, %v2598
    %v2600 = vmul.f32 %v2599, 1.442695
    %v2601 = vpow.pop %v2600
    %v2602 = vsel %vm426, %v2601, 0.0
    %2603 = vadd.xlane.f32.xlu0 %v2602
    %v2604 = vpop.xlane.xlu0 %2603
    %v2605 = vrcp.pop %v2604
    %v2606 = vmul.f32 %v2601, %v2605
    %v2608 = vsel %vm426, %v2606, 0
    %2610 = vmatprep.subr.mxu0 0.0
    %2611 = vmatpush1.msra.mxu0 %v2442
    %2612 = vmatprep.subr.mxu0 0.0
    %2613 = vmatpush1.msra.mxu0 %v2444
    %2614 = vmatprep.subr.mxu0 0.0
    %2615 = vmatpush1.msra.mxu0 0.0
    %2616 = vmatprep.subr.mxu0 0.0
    %2617 = vmatpush1.msra.mxu0 0.0
    %2618 = vmatprep.subr.mxu0 0.0
    %2619 = vmatpush1.msra.mxu0 0.0
    %2620 = vmatprep.subr.mxu0 0.0
    %2621 = vmatpush1.msra.mxu0 0.0
    %2622 = vmatprep.subr.mxu0 0.0
    %2623 = vmatpush1.msra.mxu0 0.0
    %2624 = vmatprep.subr.mxu0 0.0
    %2625 = vmatpush1.msra.mxu0 0.0
    %2626 = vmatprep.subr.mxu0 0.0
    %2627 = vmatpush1.msra.mxu0 0.0
    %2628 = vmatprep.subr.mxu0 0.0
    %2629 = vmatpush1.msra.mxu0 0.0
    %2630 = vmatprep.subr.mxu0 0.0
    %2631 = vmatpush1.msra.mxu0 0.0
    %2632 = vmatprep.subr.mxu0 0.0
    %2633 = vmatpush1.msra.mxu0 0.0
    %2634 = vmatprep.subr.mxu0 0.0
    %2635 = vmatpush1.msra.mxu0 0.0
    %2636 = vmatprep.subr.mxu0 0.0
    %2637 = vmatpush1.msra.mxu0 0.0
    %2638 = vmatprep.subr.mxu0 0.0
    %2639 = vmatpush1.msra.mxu0 0.0
    %2640 = vmatprep.subr.mxu0 0.0
    %2641 = vmatpush1.msra.mxu0 0.0
    %2642 = vmatprep.subr.mxu0 0.0
    %2643 = vmatpush1.msra.mxu0 0.0
    %2644 = vmatprep.subr.mxu0 0.0
    %2645 = vmatpush1.msra.mxu0 0.0
    %2646 = vmatprep.subr.mxu0 0.0
    %2647 = vmatpush1.msra.mxu0 0.0
    %2648 = vmatprep.subr.mxu0 0.0
    %2649 = vmatpush1.msra.mxu0 0.0
    %2650 = vmatprep.subr.mxu0 0.0
    %2651 = vmatpush1.msra.mxu0 0.0
    %2652 = vmatprep.subr.mxu0 0.0
    %2653 = vmatpush1.msra.mxu0 0.0
    %2654 = vmatprep.subr.mxu0 0.0
    %2655 = vmatpush1.msra.mxu0 0.0
    %2656 = vmatprep.subr.mxu0 0.0
    %2657 = vmatpush1.msra.mxu0 0.0
    %2658 = vmatprep.subr.mxu0 0.0
    %2659 = vmatpush1.msra.mxu0 0.0
    %2660 = vmatprep.subr.mxu0 0.0
    %2661 = vmatpush1.msra.mxu0 0.0
    %2662 = vmatprep.subr.mxu0 0.0
    %2663 = vmatpush1.msra.mxu0 0.0
    %2664 = vmatprep.subr.mxu0 0.0
    %2665 = vmatpush1.msra.mxu0 0.0
    %2666 = vmatprep.subr.mxu0 0.0
    %2667 = vmatpush1.msra.mxu0 0.0
    %2668 = vmatprep.subr.mxu0 0.0
    %2669 = vmatpush1.msra.mxu0 0.0
    %2670 = vmatprep.subr.mxu0 0.0
    %2671 = vmatpush1.msra.mxu0 0.0
    %2672 = vmatprep.subr.mxu0 0.0
    %2673 = vmatpush1.msra.mxu0 0.0
    %2674 = vmatprep.mubr.f32.mxu0 0.0
    %2675 = vmatmul.mubr.f32.gmra.mrb[0].mxu0 %v2608
    %v2676 = vpop.f32.mrb[0].mxu0
    %v2677 = vadd.f32 0.0, %v2676
    %v2678 = vpop.f32.mrb[0].mxu0
    %2679 = vdwg.mxu0
    %v2680 = vmul.f32 %v2677, %v62
    %v2681 = vadd.f32 %v2521, %v2680
    %v2682 = vmul.f32 %v2322, 0.25
    %v2683 = vmul.f32 %v2682, %v57
    %2686 = vrot.lane.b32.xlu0 %v2317, 96
    %v2687 = vpop.permute.xlu0 %2686
    %2688 = vrot.lane.b32.xlu0 %v2322, 96
    %v2689 = vpop.permute.xlu0 %2688
    %v2691 = vsel %vm89, %v2683, 0
    %v2693 = vsel %vm89, %v2687, 0
    %v2695 = vsel %vm89, %v2689, 0
    %2697 = vmatprep.subr.mxu0 0.0
    %2698 = vmatpush1.xpose.msra.mxu0 %v2693
    %2699 = vmatprep.subr.mxu0 0.0
    %2700 = vmatpush1.xpose.msra.mxu0 %v2695
    %2701 = vmatprep.subr.mxu0 0.0
    %2702 = vmatpush1.xpose.msra.mxu0 0.0
    %2703 = vmatprep.subr.mxu0 0.0
    %2704 = vmatpush1.xpose.msra.mxu0 0.0
    %2705 = vmatprep.subr.mxu0 0.0
    %2706 = vmatpush1.xpose.msra.mxu0 0.0
    %2707 = vmatprep.subr.mxu0 0.0
    %2708 = vmatpush1.xpose.msra.mxu0 0.0
    %2709 = vmatprep.subr.mxu0 0.0
    %2710 = vmatpush1.xpose.msra.mxu0 0.0
    %2711 = vmatprep.subr.mxu0 0.0
    %2712 = vmatpush1.xpose.msra.mxu0 0.0
    %2713 = vmatprep.subr.mxu0 0.0
    %2714 = vmatpush1.xpose.msra.mxu0 0.0
    %2715 = vmatprep.subr.mxu0 0.0
    %2716 = vmatpush1.xpose.msra.mxu0 0.0
    %2717 = vmatprep.subr.mxu0 0.0
    %2718 = vmatpush1.xpose.msra.mxu0 0.0
    %2719 = vmatprep.subr.mxu0 0.0
    %2720 = vmatpush1.xpose.msra.mxu0 0.0
    %2721 = vmatprep.subr.mxu0 0.0
    %2722 = vmatpush1.xpose.msra.mxu0 0.0
    %2723 = vmatprep.subr.mxu0 0.0
    %2724 = vmatpush1.xpose.msra.mxu0 0.0
    %2725 = vmatprep.subr.mxu0 0.0
    %2726 = vmatpush1.xpose.msra.mxu0 0.0
    %2727 = vmatprep.subr.mxu0 0.0
    %2728 = vmatpush1.xpose.msra.mxu0 0.0
    %2729 = vmatprep.subr.mxu0 0.0
    %2730 = vmatpush1.xpose.msra.mxu0 0.0
    %2731 = vmatprep.subr.mxu0 0.0
    %2732 = vmatpush1.xpose.msra.mxu0 0.0
    %2733 = vmatprep.subr.mxu0 0.0
    %2734 = vmatpush1.xpose.msra.mxu0 0.0
    %2735 = vmatprep.subr.mxu0 0.0
    %2736 = vmatpush1.xpose.msra.mxu0 0.0
    %2737 = vmatprep.subr.mxu0 0.0
    %2738 = vmatpush1.xpose.msra.mxu0 0.0
    %2739 = vmatprep.subr.mxu0 0.0
    %2740 = vmatpush1.xpose.msra.mxu0 0.0
    %2741 = vmatprep.subr.mxu0 0.0
    %2742 = vmatpush1.xpose.msra.mxu0 0.0
    %2743 = vmatprep.subr.mxu0 0.0
    %2744 = vmatpush1.xpose.msra.mxu0 0.0
    %2745 = vmatprep.subr.mxu0 0.0
    %2746 = vmatpush1.xpose.msra.mxu0 0.0
    %2747 = vmatprep.subr.mxu0 0.0
    %2748 = vmatpush1.xpose.msra.mxu0 0.0
    %2749 = vmatprep.subr.mxu0 0.0
    %2750 = vmatpush1.xpose.msra.mxu0 0.0
    %2751 = vmatprep.subr.mxu0 0.0
    %2752 = vmatpush1.xpose.msra.mxu0 0.0
    %2753 = vmatprep.subr.mxu0 0.0
    %2754 = vmatpush1.xpose.msra.mxu0 0.0
    %2755 = vmatprep.subr.mxu0 0.0
    %2756 = vmatpush1.xpose.msra.mxu0 0.0
    %2757 = vmatprep.subr.mxu0 0.0
    %2758 = vmatpush1.xpose.msra.mxu0 0.0
    %2759 = vmatprep.subr.mxu0 0.0
    %2760 = vmatpush1.xpose.msra.mxu0 0.0
    %2761 = vmatprep.mubr.f32.mxu0 0.0
    %2762 = vmatmul.mubr.f32.gmra.mrb[0].mxu0 %v2691
    %v2763 = vpop.f32.mrb[0].mxu0
    %v2764 = vadd.f32 0.0, %v2763
    %v2765 = vpop.f32.mrb[0].mxu0
    %2766 = vdwg.mxu0
    %v2767 = vsel %vm426, %v2764, -inf
    %2768 = vmax.xlane.f32.xlu0 %v2767
    %v2769 = vpop.xlane.xlu0 %2768
    %v2770 = vsub.f32 %v2764, %v2769
    %v2771 = vmul.f32 %v2770, 1.442695
    %v2772 = vpow.pop %v2771
    %v2773 = vsel %vm426, %v2772, 0.0
    %2774 = vadd.xlane.f32.xlu0 %v2773
    %v2775 = vpop.xlane.xlu0 %2774
    %v2776 = vrcp.pop %v2775
    %v2777 = vmul.f32 %v2772, %v2776
    %2778 = vrot.lane.b32.xlu0 %v2317, 64
    %v2779 = vpop.permute.xlu0 %2778
    %2780 = vrot.lane.b32.xlu0 %v2322, 64
    %v2781 = vpop.permute.xlu0 %2780
    %v2785 = vsel %vm426, %v2777, 0
    %2787 = vmatprep.subr.mxu0 0.0
    %2788 = vmatpush1.msra.mxu0 %v2779
    %2789 = vmatprep.subr.mxu0 0.0
    %2790 = vmatpush1.msra.mxu0 %v2781
    %2791 = vmatprep.subr.mxu0 0.0
    %2792 = vmatpush1.msra.mxu0 0.0
    %2793 = vmatprep.subr.mxu0 0.0
    %2794 = vmatpush1.msra.mxu0 0.0
    %2795 = vmatprep.subr.mxu0 0.0
    %2796 = vmatpush1.msra.mxu0 0.0
    %2797 = vmatprep.subr.mxu0 0.0
    %2798 = vmatpush1.msra.mxu0 0.0
    %2799 = vmatprep.subr.mxu0 0.0
    %2800 = vmatpush1.msra.mxu0 0.0
    %2801 = vmatprep.subr.mxu0 0.0
    %2802 = vmatpush1.msra.mxu0 0.0
    %2803 = vmatprep.subr.mxu0 0.0
    %2804 = vmatpush1.msra.mxu0 0.0
    %2805 = vmatprep.subr.mxu0 0.0
    %2806 = vmatpush1.msra.mxu0 0.0
    %2807 = vmatprep.subr.mxu0 0.0
    %2808 = vmatpush1.msra.mxu0 0.0
    %2809 = vmatprep.subr.mxu0 0.0
    %2810 = vmatpush1.msra.mxu0 0.0
    %2811 = vmatprep.subr.mxu0 0.0
    %2812 = vmatpush1.msra.mxu0 0.0
    %2813 = vmatprep.subr.mxu0 0.0
    %2814 = vmatpush1.msra.mxu0 0.0
    %2815 = vmatprep.subr.mxu0 0.0
    %2816 = vmatpush1.msra.mxu0 0.0
    %2817 = vmatprep.subr.mxu0 0.0
    %2818 = vmatpush1.msra.mxu0 0.0
    %2819 = vmatprep.subr.mxu0 0.0
    %2820 = vmatpush1.msra.mxu0 0.0
    %2821 = vmatprep.subr.mxu0 0.0
    %2822 = vmatpush1.msra.mxu0 0.0
    %2823 = vmatprep.subr.mxu0 0.0
    %2824 = vmatpush1.msra.mxu0 0.0
    %2825 = vmatprep.subr.mxu0 0.0
    %2826 = vmatpush1.msra.mxu0 0.0
    %2827 = vmatprep.subr.mxu0 0.0
    %2828 = vmatpush1.msra.mxu0 0.0
    %2829 = vmatprep.subr.mxu0 0.0
    %2830 = vmatpush1.msra.mxu0 0.0
    %2831 = vmatprep.subr.mxu0 0.0
    %2832 = vmatpush1.msra.mxu0 0.0
    %2833 = vmatprep.subr.mxu0 0.0
    %2834 = vmatpush1.msra.mxu0 0.0
    %2835 = vmatprep.subr.mxu0 0.0
    %2836 = vmatpush1.msra.mxu0 0.0
    %2837 = vmatprep.subr.mxu0 0.0
    %2838 = vmatpush1.msra.mxu0 0.0
    %2839 = vmatprep.subr.mxu0 0.0
    %2840 = vmatpush1.msra.mxu0 0.0
    %2841 = vmatprep.subr.mxu0 0.0
    %2842 = vmatpush1.msra.mxu0 0.0
    %2843 = vmatprep.subr.mxu0 0.0
    %2844 = vmatpush1.msra.mxu0 0.0
    %2845 = vmatprep.subr.mxu0 0.0
    %2846 = vmatpush1.msra.mxu0 0.0
    %2847 = vmatprep.subr.mxu0 0.0
    %2848 = vmatpush1.msra.mxu0 0.0
    %2849 = vmatprep.subr.mxu0 0.0
    %2850 = vmatpush1.msra.mxu0 0.0
    %2851 = vmatprep.mubr.f32.mxu0 0.0
    %2852 = vmatmul.mubr.f32.gmra.mrb[0].mxu0 %v2785
    %v2853 = vpop.f32.mrb[0].mxu0
    %v2854 = vadd.f32 0.0, %v2853
    %v2855 = vpop.f32.mrb[0].mxu0
    %2856 = vdwg.mxu0
    %v2857 = vmul.f32 %v2854, %v57
    %v2858 = vadd.f32 %v2857, 0.0
    %v2859 = vmul.f32 %v2682, %v62
    %v2861 = vsel %vm89, %v2859, 0
    %2863 = vmatprep.subr.mxu0 0.0
    %2864 = vmatpush1.xpose.msra.mxu0 %v2693
    %2865 = vmatprep.subr.mxu0 0.0
    %2866 = vmatpush1.xpose.msra.mxu0 %v2695
    %2867 = vmatprep.subr.mxu0 0.0
    %2868 = vmatpush1.xpose.msra.mxu0 0.0
    %2869 = vmatprep.subr.mxu0 0.0
    %2870 = vmatpush1.xpose.msra.mxu0 0.0
    %2871 = vmatprep.subr.mxu0 0.0
    %2872 = vmatpush1.xpose.msra.mxu0 0.0
    %2873 = vmatprep.subr.mxu0 0.0
    %2874 = vmatpush1.xpose.msra.mxu0 0.0
    %2875 = vmatprep.subr.mxu0 0.0
    %2876 = vmatpush1.xpose.msra.mxu0 0.0
    %2877 = vmatprep.subr.mxu0 0.0
    %2878 = vmatpush1.xpose.msra.mxu0 0.0
    %2879 = vmatprep.subr.mxu0 0.0
    %2880 = vmatpush1.xpose.msra.mxu0 0.0
    %2881 = vmatprep.subr.mxu0 0.0
    %2882 = vmatpush1.xpose.msra.mxu0 0.0
    %2883 = vmatprep.subr.mxu0 0.0
    %2884 = vmatpush1.xpose.msra.mxu0 0.0
    %2885 = vmatprep.subr.mxu0 0.0
    %2886 = vmatpush1.xpose.msra.mxu0 0.0
    %2887 = vmatprep.subr.mxu0 0.0
    %2888 = vmatpush1.xpose.msra.mxu0 0.0
    %2889 = vmatprep.subr.mxu0 0.0
    %2890 = vmatpush1.xpose.msra.mxu0 0.0
    %2891 = vmatprep.subr.mxu0 0.0
    %2892 = vmatpush1.xpose.msra.mxu0 0.0
    %2893 = vmatprep.subr.mxu0 0.0
    %2894 = vmatpush1.xpose.msra.mxu0 0.0
    %2895 = vmatprep.subr.mxu0 0.0
    %2896 = vmatpush1.xpose.msra.mxu0 0.0
    %2897 = vmatprep.subr.mxu0 0.0
    %2898 = vmatpush1.xpose.msra.mxu0 0.0
    %2899 = vmatprep.subr.mxu0 0.0
    %2900 = vmatpush1.xpose.msra.mxu0 0.0
    %2901 = vmatprep.subr.mxu0 0.0
    %2902 = vmatpush1.xpose.msra.mxu0 0.0
    %2903 = vmatprep.subr.mxu0 0.0
    %2904 = vmatpush1.xpose.msra.mxu0 0.0
    %2905 = vmatprep.subr.mxu0 0.0
    %2906 = vmatpush1.xpose.msra.mxu0 0.0
    %2907 = vmatprep.subr.mxu0 0.0
    %2908 = vmatpush1.xpose.msra.mxu0 0.0
    %2909 = vmatprep.subr.mxu0 0.0
    %2910 = vmatpush1.xpose.msra.mxu0 0.0
    %2911 = vmatprep.subr.mxu0 0.0
    %2912 = vmatpush1.xpose.msra.mxu0 0.0
    %2913 = vmatprep.subr.mxu0 0.0
    %2914 = vmatpush1.xpose.msra.mxu0 0.0
    %2915 = vmatprep.subr.mxu0 0.0
    %2916 = vmatpush1.xpose.msra.mxu0 0.0
    %2917 = vmatprep.subr.mxu0 0.0
    %2918 = vmatpush1.xpose.msra.mxu0 0.0
    %2919 = vmatprep.subr.mxu0 0.0
    %2920 = vmatpush1.xpose.msra.mxu0 0.0
    %2921 = vmatprep.subr.mxu0 0.0
    %2922 = vmatpush1.xpose.msra.mxu0 0.0
    %2923 = vmatprep.subr.mxu0 0.0
    %2924 = vmatpush1.xpose.msra.mxu0 0.0
    %2925 = vmatprep.subr.mxu0 0.0
    %2926 = vmatpush1.xpose.msra.mxu0 0.0
    %2927 = vmatprep.mubr.f32.mxu0 0.0
    %2928 = vmatmul.mubr.f32.gmra.mrb[0].mxu0 %v2861
    %v2929 = vpop.f32.mrb[0].mxu0
    %v2930 = vadd.f32 0.0, %v2929
    %v2931 = vpop.f32.mrb[0].mxu0
    %2932 = vdwg.mxu0
    %v2933 = vsel %vm426, %v2930, -inf
    %2934 = vmax.xlane.f32.xlu0 %v2933
    %v2935 = vpop.xlane.xlu0 %2934
    %v2936 = vsub.f32 %v2930, %v2935
    %v2937 = vmul.f32 %v2936, 1.442695
    %v2938 = vpow.pop %v2937
    %v2939 = vsel %vm426, %v2938, 0.0
    %2940 = vadd.xlane.f32.xlu0 %v2939
    %v2941 = vpop.xlane.xlu0 %2940
    %v2942 = vrcp.pop %v2941
    %v2943 = vmul.f32 %v2938, %v2942
    %v2945 = vsel %vm426, %v2943, 0
    %2947 = vmatprep.subr.mxu0 0.0
    %2948 = vmatpush1.msra.mxu0 %v2779
    %2949 = vmatprep.subr.mxu0 0.0
    %2950 = vmatpush1.msra.mxu0 %v2781
    %2951 = vmatprep.subr.mxu0 0.0
    %2952 = vmatpush1.msra.mxu0 0.0
    %2953 = vmatprep.subr.mxu0 0.0
    %2954 = vmatpush1.msra.mxu0 0.0
    %2955 = vmatprep.subr.mxu0 0.0
    %2956 = vmatpush1.msra.mxu0 0.0
    %2957 = vmatprep.subr.mxu0 0.0
    %2958 = vmatpush1.msra.mxu0 0.0
    %2959 = vmatprep.subr.mxu0 0.0
    %2960 = vmatpush1.msra.mxu0 0.0
    %2961 = vmatprep.subr.mxu0 0.0
    %2962 = vmatpush1.msra.mxu0 0.0
    %2963 = vmatprep.subr.mxu0 0.0
    %2964 = vmatpush1.msra.mxu0 0.0
    %2965 = vmatprep.subr.mxu0 0.0
    %2966 = vmatpush1.msra.mxu0 0.0
    %2967 = vmatprep.subr.mxu0 0.0
    %2968 = vmatpush1.msra.mxu0 0.0
    %2969 = vmatprep.subr.mxu0 0.0
    %2970 = vmatpush1.msra.mxu0 0.0
    %2971 = vmatprep.subr.mxu0 0.0
    %2972 = vmatpush1.msra.mxu0 0.0
    %2973 = vmatprep.subr.mxu0 0.0
    %2974 = vmatpush1.msra.mxu0 0.0
    %2975 = vmatprep.subr.mxu0 0.0
    %2976 = vmatpush1.msra.mxu0 0.0
    %2977 = vmatprep.subr.mxu0 0.0
    %2978 = vmatpush1.msra.mxu0 0.0
    %2979 = vmatprep.subr.mxu0 0.0
    %2980 = vmatpush1.msra.mxu0 0.0
    %2981 = vmatprep.subr.mxu0 0.0
    %2982 = vmatpush1.msra.mxu0 0.0
    %2983 = vmatprep.subr.mxu0 0.0
    %2984 = vmatpush1.msra.mxu0 0.0
    %2985 = vmatprep.subr.mxu0 0.0
    %2986 = vmatpush1.msra.mxu0 0.0
    %2987 = vmatprep.subr.mxu0 0.0
    %2988 = vmatpush1.msra.mxu0 0.0
    %2989 = vmatprep.subr.mxu0 0.0
    %2990 = vmatpush1.msra.mxu0 0.0
    %2991 = vmatprep.subr.mxu0 0.0
    %2992 = vmatpush1.msra.mxu0 0.0
    %2993 = vmatprep.subr.mxu0 0.0
    %2994 = vmatpush1.msra.mxu0 0.0
    %2995 = vmatprep.subr.mxu0 0.0
    %2996 = vmatpush1.msra.mxu0 0.0
    %2997 = vmatprep.subr.mxu0 0.0
    %2998 = vmatpush1.msra.mxu0 0.0
    %2999 = vmatprep.subr.mxu0 0.0
    %3000 = vmatpush1.msra.mxu0 0.0
    %3001 = vmatprep.subr.mxu0 0.0
    %3002 = vmatpush1.msra.mxu0 0.0
    %3003 = vmatprep.subr.mxu0 0.0
    %3004 = vmatpush1.msra.mxu0 0.0
    %3005 = vmatprep.subr.mxu0 0.0
    %3006 = vmatpush1.msra.mxu0 0.0
    %3007 = vmatprep.subr.mxu0 0.0
    %3008 = vmatpush1.msra.mxu0 0.0
    %3009 = vmatprep.subr.mxu0 0.0
    %3010 = vmatpush1.msra.mxu0 0.0
    %3011 = vmatprep.mubr.f32.mxu0 0.0
    %3012 = vmatmul.mubr.f32.gmra.mrb[0].mxu0 %v2945
    %v3013 = vpop.f32.mrb[0].mxu0
    %v3014 = vadd.f32 0.0, %v3013
    %v3015 = vpop.f32.mrb[0].mxu0
    %3016 = vdwg.mxu0
    %v3017 = vmul.f32 %v3014, %v62
    %v3018 = vadd.f32 %v2858, %v3017
    %v3019 = vmul.f32 %v2332, 0.25
    %v3020 = vmul.f32 %v3019, %v57
    %3023 = vrot.lane.b32.xlu0 %v2327, 96
    %v3024 = vpop.permute.xlu0 %3023
    %3025 = vrot.lane.b32.xlu0 %v2332, 96
    %v3026 = vpop.permute.xlu0 %3025
    %v3028 = vsel %vm89, %v3020, 0
    %v3030 = vsel %vm89, %v3024, 0
    %v3032 = vsel %vm89, %v3026, 0
    %3034 = vmatprep.subr.mxu0 0.0
    %3035 = vmatpush1.xpose.msra.mxu0 %v3030
    %3036 = vmatprep.subr.mxu0 0.0
    %3037 = vmatpush1.xpose.msra.mxu0 %v3032
    %3038 = vmatprep.subr.mxu0 0.0
    %3039 = vmatpush1.xpose.msra.mxu0 0.0
    %3040 = vmatprep.subr.mxu0 0.0
    %3041 = vmatpush1.xpose.msra.mxu0 0.0
    %3042 = vmatprep.subr.mxu0 0.0
    %3043 = vmatpush1.xpose.msra.mxu0 0.0
    %3044 = vmatprep.subr.mxu0 0.0
    %3045 = vmatpush1.xpose.msra.mxu0 0.0
    %3046 = vmatprep.subr.mxu0 0.0
    %3047 = vmatpush1.xpose.msra.mxu0 0.0
    %3048 = vmatprep.subr.mxu0 0.0
    %3049 = vmatpush1.xpose.msra.mxu0 0.0
    %3050 = vmatprep.subr.mxu0 0.0
    %3051 = vmatpush1.xpose.msra.mxu0 0.0
    %3052 = vmatprep.subr.mxu0 0.0
    %3053 = vmatpush1.xpose.msra.mxu0 0.0
    %3054 = vmatprep.subr.mxu0 0.0
    %3055 = vmatpush1.xpose.msra.mxu0 0.0
    %3056 = vmatprep.subr.mxu0 0.0
    %3057 = vmatpush1.xpose.msra.mxu0 0.0
    %3058 = vmatprep.subr.mxu0 0.0
    %3059 = vmatpush1.xpose.msra.mxu0 0.0
    %3060 = vmatprep.subr.mxu0 0.0
    %3061 = vmatpush1.xpose.msra.mxu0 0.0
    %3062 = vmatprep.subr.mxu0 0.0
    %3063 = vmatpush1.xpose.msra.mxu0 0.0
    %3064 = vmatprep.subr.mxu0 0.0
    %3065 = vmatpush1.xpose.msra.mxu0 0.0
    %3066 = vmatprep.subr.mxu0 0.0
    %3067 = vmatpush1.xpose.msra.mxu0 0.0
    %3068 = vmatprep.subr.mxu0 0.0
    %3069 = vmatpush1.xpose.msra.mxu0 0.0
    %3070 = vmatprep.subr.mxu0 0.0
    %3071 = vmatpush1.xpose.msra.mxu0 0.0
    %3072 = vmatprep.subr.mxu0 0.0
    %3073 = vmatpush1.xpose.msra.mxu0 0.0
    %3074 = vmatprep.subr.mxu0 0.0
    %3075 = vmatpush1.xpose.msra.mxu0 0.0
    %3076 = vmatprep.subr.mxu0 0.0
    %3077 = vmatpush1.xpose.msra.mxu0 0.0
    %3078 = vmatprep.subr.mxu0 0.0
    %3079 = vmatpush1.xpose.msra.mxu0 0.0
    %3080 = vmatprep.subr.mxu0 0.0
    %3081 = vmatpush1.xpose.msra.mxu0 0.0
    %3082 = vmatprep.subr.mxu0 0.0
    %3083 = vmatpush1.xpose.msra.mxu0 0.0
    %3084 = vmatprep.subr.mxu0 0.0
    %3085 = vmatpush1.xpose.msra.mxu0 0.0
    %3086 = vmatprep.subr.mxu0 0.0
    %3087 = vmatpush1.xpose.msra.mxu0 0.0
    %3088 = vmatprep.subr.mxu0 0.0
    %3089 = vmatpush1.xpose.msra.mxu0 0.0
    %3090 = vmatprep.subr.mxu0 0.0
    %3091 = vmatpush1.xpose.msra.mxu0 0.0
    %3092 = vmatprep.subr.mxu0 0.0
    %3093 = vmatpush1.xpose.msra.mxu0 0.0
    %3094 = vmatprep.subr.mxu0 0.0
    %3095 = vmatpush1.xpose.msra.mxu0 0.0
    %3096 = vmatprep.subr.mxu0 0.0
    %3097 = vmatpush1.xpose.msra.mxu0 0.0
    %3098 = vmatprep.mubr.f32.mxu0 0.0
    %3099 = vmatmul.mubr.f32.gmra.mrb[0].mxu0 %v3028
    %v3100 = vpop.f32.mrb[0].mxu0
    %v3101 = vadd.f32 0.0, %v3100
    %v3102 = vpop.f32.mrb[0].mxu0
    %3103 = vdwg.mxu0
    %v3104 = vsel %vm426, %v3101, -inf
    %3105 = vmax.xlane.f32.xlu0 %v3104
    %v3106 = vpop.xlane.xlu0 %3105
    %v3107 = vsub.f32 %v3101, %v3106
    %v3108 = vmul.f32 %v3107, 1.442695
    %v3109 = vpow.pop %v3108
    %v3110 = vsel %vm426, %v3109, 0.0
    %3111 = vadd.xlane.f32.xlu0 %v3110
    %v3112 = vpop.xlane.xlu0 %3111
    %v3113 = vrcp.pop %v3112
    %v3114 = vmul.f32 %v3109, %v3113
    %3115 = vrot.lane.b32.xlu0 %v2327, 64
    %v3116 = vpop.permute.xlu0 %3115
    %3117 = vrot.lane.b32.xlu0 %v2332, 64
    %v3118 = vpop.permute.xlu0 %3117
    %v3122 = vsel %vm426, %v3114, 0
    %3124 = vmatprep.subr.mxu0 0.0
    %3125 = vmatpush1.msra.mxu0 %v3116
    %3126 = vmatprep.subr.mxu0 0.0
    %3127 = vmatpush1.msra.mxu0 %v3118
    %3128 = vmatprep.subr.mxu0 0.0
    %3129 = vmatpush1.msra.mxu0 0.0
    %3130 = vmatprep.subr.mxu0 0.0
    %3131 = vmatpush1.msra.mxu0 0.0
    %3132 = vmatprep.subr.mxu0 0.0
    %3133 = vmatpush1.msra.mxu0 0.0
    %3134 = vmatprep.subr.mxu0 0.0
    %3135 = vmatpush1.msra.mxu0 0.0
    %3136 = vmatprep.subr.mxu0 0.0
    %3137 = vmatpush1.msra.mxu0 0.0
    %3138 = vmatprep.subr.mxu0 0.0
    %3139 = vmatpush1.msra.mxu0 0.0
    %3140 = vmatprep.subr.mxu0 0.0
    %3141 = vmatpush1.msra.mxu0 0.0
    %3142 = vmatprep.subr.mxu0 0.0
    %3143 = vmatpush1.msra.mxu0 0.0
    %3144 = vmatprep.subr.mxu0 0.0
    %3145 = vmatpush1.msra.mxu0 0.0
    %3146 = vmatprep.subr.mxu0 0.0
    %3147 = vmatpush1.msra.mxu0 0.0
    %3148 = vmatprep.subr.mxu0 0.0
    %3149 = vmatpush1.msra.mxu0 0.0
    %3150 = vmatprep.subr.mxu0 0.0
    %3151 = vmatpush1.msra.mxu0 0.0
    %3152 = vmatprep.subr.mxu0 0.0
    %3153 = vmatpush1.msra.mxu0 0.0
    %3154 = vmatprep.subr.mxu0 0.0
    %3155 = vmatpush1.msra.mxu0 0.0
    %3156 = vmatprep.subr.mxu0 0.0
    %3157 = vmatpush1.msra.mxu0 0.0
    %3158 = vmatprep.subr.mxu0 0.0
    %3159 = vmatpush1.msra.mxu0 0.0
    %3160 = vmatprep.subr.mxu0 0.0
    %3161 = vmatpush1.msra.mxu0 0.0
    %3162 = vmatprep.subr.mxu0 0.0
    %3163 = vmatpush1.msra.mxu0 0.0
    %3164 = vmatprep.subr.mxu0 0.0
    %3165 = vmatpush1.msra.mxu0 0.0
    %3166 = vmatprep.subr.mxu0 0.0
    %3167 = vmatpush1.msra.mxu0 0.0
    %3168 = vmatprep.subr.mxu0 0.0
    %3169 = vmatpush1.msra.mxu0 0.0
    %3170 = vmatprep.subr.mxu0 0.0
    %3171 = vmatpush1.msra.mxu0 0.0
    %3172 = vmatprep.subr.mxu0 0.0
    %3173 = vmatpush1.msra.mxu0 0.0
    %3174 = vmatprep.subr.mxu0 0.0
    %3175 = vmatpush1.msra.mxu0 0.0
    %3176 = vmatprep.subr.mxu0 0.0
    %3177 = vmatpush1.msra.mxu0 0.0
    %3178 = vmatprep.subr.mxu0 0.0
    %3179 = vmatpush1.msra.mxu0 0.0
    %3180 = vmatprep.subr.mxu0 0.0
    %3181 = vmatpush1.msra.mxu0 0.0
    %3182 = vmatprep.subr.mxu0 0.0
    %3183 = vmatpush1.msra.mxu0 0.0
    %3184 = vmatprep.subr.mxu0 0.0
    %3185 = vmatpush1.msra.mxu0 0.0
    %3186 = vmatprep.subr.mxu0 0.0
    %3187 = vmatpush1.msra.mxu0 0.0
    %3188 = vmatprep.mubr.f32.mxu0 0.0
    %3189 = vmatmul.mubr.f32.gmra.mrb[0].mxu0 %v3122
    %v3190 = vpop.f32.mrb[0].mxu0
    %v3191 = vadd.f32 0.0, %v3190
    %v3192 = vpop.f32.mrb[0].mxu0
    %3193 = vdwg.mxu0
    %v3194 = vmul.f32 %v3191, %v57
    %v3195 = vadd.f32 %v3194, 0.0
    %v3196 = vmul.f32 %v3019, %v62
    %v3198 = vsel %vm89, %v3196, 0
    %3200 = vmatprep.subr.mxu0 0.0
    %3201 = vmatpush1.xpose.msra.mxu0 %v3030
    %3202 = vmatprep.subr.mxu0 0.0
    %3203 = vmatpush1.xpose.msra.mxu0 %v3032
    %3204 = vmatprep.subr.mxu0 0.0
    %3205 = vmatpush1.xpose.msra.mxu0 0.0
    %3206 = vmatprep.subr.mxu0 0.0
    %3207 = vmatpush1.xpose.msra.mxu0 0.0
    %3208 = vmatprep.subr.mxu0 0.0
    %3209 = vmatpush1.xpose.msra.mxu0 0.0
    %3210 = vmatprep.subr.mxu0 0.0
    %3211 = vmatpush1.xpose.msra.mxu0 0.0
    %3212 = vmatprep.subr.mxu0 0.0
    %3213 = vmatpush1.xpose.msra.mxu0 0.0
    %3214 = vmatprep.subr.mxu0 0.0
    %3215 = vmatpush1.xpose.msra.mxu0 0.0
    %3216 = vmatprep.subr.mxu0 0.0
    %3217 = vmatpush1.xpose.msra.mxu0 0.0
    %3218 = vmatprep.subr.mxu0 0.0
    %3219 = vmatpush1.xpose.msra.mxu0 0.0
    %3220 = vmatprep.subr.mxu0 0.0
    %3221 = vmatpush1.xpose.msra.mxu0 0.0
    %3222 = vmatprep.subr.mxu0 0.0
    %3223 = vmatpush1.xpose.msra.mxu0 0.0
    %3224 = vmatprep.subr.mxu0 0.0
    %3225 = vmatpush1.xpose.msra.mxu0 0.0
    %3226 = vmatprep.subr.mxu0 0.0
    %3227 = vmatpush1.xpose.msra.mxu0 0.0
    %3228 = vmatprep.subr.mxu0 0.0
    %3229 = vmatpush1.xpose.msra.mxu0 0.0
    %3230 = vmatprep.subr.mxu0 0.0
    %3231 = vmatpush1.xpose.msra.mxu0 0.0
    %3232 = vmatprep.subr.mxu0 0.0
    %3233 = vmatpush1.xpose.msra.mxu0 0.0
    %3234 = vmatprep.subr.mxu0 0.0
    %3235 = vmatpush1.xpose.msra.mxu0 0.0
    %3236 = vmatprep.subr.mxu0 0.0
    %3237 = vmatpush1.xpose.msra.mxu0 0.0
    %3238 = vmatprep.subr.mxu0 0.0
    %3239 = vmatpush1.xpose.msra.mxu0 0.0
    %3240 = vmatprep.subr.mxu0 0.0
    %3241 = vmatpush1.xpose.msra.mxu0 0.0
    %3242 = vmatprep.subr.mxu0 0.0
    %3243 = vmatpush1.xpose.msra.mxu0 0.0
    %3244 = vmatprep.subr.mxu0 0.0
    %3245 = vmatpush1.xpose.msra.mxu0 0.0
    %3246 = vmatprep.subr.mxu0 0.0
    %3247 = vmatpush1.xpose.msra.mxu0 0.0
    %3248 = vmatprep.subr.mxu0 0.0
    %3249 = vmatpush1.xpose.msra.mxu0 0.0
    %3250 = vmatprep.subr.mxu0 0.0
    %3251 = vmatpush1.xpose.msra.mxu0 0.0
    %3252 = vmatprep.subr.mxu0 0.0
    %3253 = vmatpush1.xpose.msra.mxu0 0.0
    %3254 = vmatprep.subr.mxu0 0.0
    %3255 = vmatpush1.xpose.msra.mxu0 0.0
    %3256 = vmatprep.subr.mxu0 0.0
    %3257 = vmatpush1.xpose.msra.mxu0 0.0
    %3258 = vmatprep.subr.mxu0 0.0
    %3259 = vmatpush1.xpose.msra.mxu0 0.0
    %3260 = vmatprep.subr.mxu0 0.0
    %3261 = vmatpush1.xpose.msra.mxu0 0.0
    %3262 = vmatprep.subr.mxu0 0.0
    %3263 = vmatpush1.xpose.msra.mxu0 0.0
    %3264 = vmatprep.mubr.f32.mxu0 0.0
    %3265 = vmatmul.mubr.f32.gmra.mrb[0].mxu0 %v3198
    %v3266 = vpop.f32.mrb[0].mxu0
    %v3267 = vadd.f32 0.0, %v3266
    %v3268 = vpop.f32.mrb[0].mxu0
    %3269 = vdwg.mxu0
    %v3270 = vsel %vm426, %v3267, -inf
    %3271 = vmax.xlane.f32.xlu0 %v3270
    %v3272 = vpop.xlane.xlu0 %3271
    %v3273 = vsub.f32 %v3267, %v3272
    %v3274 = vmul.f32 %v3273, 1.442695
    %v3275 = vpow.pop %v3274
    %v3276 = vsel %vm426, %v3275, 0.0
    %3277 = vadd.xlane.f32.xlu0 %v3276
    %v3278 = vpop.xlane.xlu0 %3277
    %v3279 = vrcp.pop %v3278
    %v3280 = vmul.f32 %v3275, %v3279
    %v3282 = vsel %vm426, %v3280, 0
    %3284 = vmatprep.subr.mxu0 0.0
    %3285 = vmatpush1.msra.mxu0 %v3116
    %3286 = vmatprep.subr.mxu0 0.0
    %3287 = vmatpush1.msra.mxu0 %v3118
    %3288 = vmatprep.subr.mxu0 0.0
    %3289 = vmatpush1.msra.mxu0 0.0
    %3290 = vmatprep.subr.mxu0 0.0
    %3291 = vmatpush1.msra.mxu0 0.0
    %3292 = vmatprep.subr.mxu0 0.0
    %3293 = vmatpush1.msra.mxu0 0.0
    %3294 = vmatprep.subr.mxu0 0.0
    %3295 = vmatpush1.msra.mxu0 0.0
    %3296 = vmatprep.subr.mxu0 0.0
    %3297 = vmatpush1.msra.mxu0 0.0
    %3298 = vmatprep.subr.mxu0 0.0
    %3299 = vmatpush1.msra.mxu0 0.0
    %3300 = vmatprep.subr.mxu0 0.0
    %3301 = vmatpush1.msra.mxu0 0.0
    %3302 = vmatprep.subr.mxu0 0.0
    %3303 = vmatpush1.msra.mxu0 0.0
    %3304 = vmatprep.subr.mxu0 0.0
    %3305 = vmatpush1.msra.mxu0 0.0
    %3306 = vmatprep.subr.mxu0 0.0
    %3307 = vmatpush1.msra.mxu0 0.0
    %3308 = vmatprep.subr.mxu0 0.0
    %3309 = vmatpush1.msra.mxu0 0.0
    %3310 = vmatprep.subr.mxu0 0.0
    %3311 = vmatpush1.msra.mxu0 0.0
    %3312 = vmatprep.subr.mxu0 0.0
    %3313 = vmatpush1.msra.mxu0 0.0
    %3314 = vmatprep.subr.mxu0 0.0
    %3315 = vmatpush1.msra.mxu0 0.0
    %3316 = vmatprep.subr.mxu0 0.0
    %3317 = vmatpush1.msra.mxu0 0.0
    %3318 = vmatprep.subr.mxu0 0.0
    %3319 = vmatpush1.msra.mxu0 0.0
    %3320 = vmatprep.subr.mxu0 0.0
    %3321 = vmatpush1.msra.mxu0 0.0
    %3322 = vmatprep.subr.mxu0 0.0
    %3323 = vmatpush1.msra.mxu0 0.0
    %3324 = vmatprep.subr.mxu0 0.0
    %3325 = vmatpush1.msra.mxu0 0.0
    %3326 = vmatprep.subr.mxu0 0.0
    %3327 = vmatpush1.msra.mxu0 0.0
    %3328 = vmatprep.subr.mxu0 0.0
    %3329 = vmatpush1.msra.mxu0 0.0
    %3330 = vmatprep.subr.mxu0 0.0
    %3331 = vmatpush1.msra.mxu0 0.0
    %3332 = vmatprep.subr.mxu0 0.0
    %3333 = vmatpush1.msra.mxu0 0.0
    %3334 = vmatprep.subr.mxu0 0.0
    %3335 = vmatpush1.msra.mxu0 0.0
    %3336 = vmatprep.subr.mxu0 0.0
    %3337 = vmatpush1.msra.mxu0 0.0
    %3338 = vmatprep.subr.mxu0 0.0
    %3339 = vmatpush1.msra.mxu0 0.0
    %3340 = vmatprep.subr.mxu0 0.0
    %3341 = vmatpush1.msra.mxu0 0.0
    %3342 = vmatprep.subr.mxu0 0.0
    %3343 = vmatpush1.msra.mxu0 0.0
    %3344 = vmatprep.subr.mxu0 0.0
    %3345 = vmatpush1.msra.mxu0 0.0
    %3346 = vmatprep.subr.mxu0 0.0
    %3347 = vmatpush1.msra.mxu0 0.0
    %3348 = vmatprep.mubr.f32.mxu0 0.0
    %3349 = vmatmul.mubr.f32.gmra.mrb[0].mxu0 %v3282
    %v3350 = vpop.f32.mrb[0].mxu0
    %v3351 = vadd.f32 0.0, %v3350
    %v3352 = vpop.f32.mrb[0].mxu0
    %3353 = vdwg.mxu0
    %v3354 = vmul.f32 %v3351, %v62
    %v3355 = vadd.f32 %v3195, %v3354
    %v3356 = vmul.f32 %v2342, 0.25
    %v3357 = vmul.f32 %v3356, %v57
    %3360 = vrot.lane.b32.xlu0 %v2337, 96
    %v3361 = vpop.permute.xlu0 %3360
    %3362 = vrot.lane.b32.xlu0 %v2342, 96
    %v3363 = vpop.permute.xlu0 %3362
    %v3365 = vsel %vm89, %v3357, 0
    %v3367 = vsel %vm89, %v3361, 0
    %v3369 = vsel %vm89, %v3363, 0
    %3371 = vmatprep.subr.mxu0 0.0
    %3372 = vmatpush1.xpose.msra.mxu0 %v3367
    %3373 = vmatprep.subr.mxu0 0.0
    %3374 = vmatpush1.xpose.msra.mxu0 %v3369
    %3375 = vmatprep.subr.mxu0 0.0
    %3376 = vmatpush1.xpose.msra.mxu0 0.0
    %3377 = vmatprep.subr.mxu0 0.0
    %3378 = vmatpush1.xpose.msra.mxu0 0.0
    %3379 = vmatprep.subr.mxu0 0.0
    %3380 = vmatpush1.xpose.msra.mxu0 0.0
    %3381 = vmatprep.subr.mxu0 0.0
    %3382 = vmatpush1.xpose.msra.mxu0 0.0
    %3383 = vmatprep.subr.mxu0 0.0
    %3384 = vmatpush1.xpose.msra.mxu0 0.0
    %3385 = vmatprep.subr.mxu0 0.0
    %3386 = vmatpush1.xpose.msra.mxu0 0.0
    %3387 = vmatprep.subr.mxu0 0.0
    %3388 = vmatpush1.xpose.msra.mxu0 0.0
    %3389 = vmatprep.subr.mxu0 0.0
    %3390 = vmatpush1.xpose.msra.mxu0 0.0
    %3391 = vmatprep.subr.mxu0 0.0
    %3392 = vmatpush1.xpose.msra.mxu0 0.0
    %3393 = vmatprep.subr.mxu0 0.0
    %3394 = vmatpush1.xpose.msra.mxu0 0.0
    %3395 = vmatprep.subr.mxu0 0.0
    %3396 = vmatpush1.xpose.msra.mxu0 0.0
    %3397 = vmatprep.subr.mxu0 0.0
    %3398 = vmatpush1.xpose.msra.mxu0 0.0
    %3399 = vmatprep.subr.mxu0 0.0
    %3400 = vmatpush1.xpose.msra.mxu0 0.0
    %3401 = vmatprep.subr.mxu0 0.0
    %3402 = vmatpush1.xpose.msra.mxu0 0.0
    %3403 = vmatprep.subr.mxu0 0.0
    %3404 = vmatpush1.xpose.msra.mxu0 0.0
    %3405 = vmatprep.subr.mxu0 0.0
    %3406 = vmatpush1.xpose.msra.mxu0 0.0
    %3407 = vmatprep.subr.mxu0 0.0
    %3408 = vmatpush1.xpose.msra.mxu0 0.0
    %3409 = vmatprep.subr.mxu0 0.0
    %3410 = vmatpush1.xpose.msra.mxu0 0.0
    %3411 = vmatprep.subr.mxu0 0.0
    %3412 = vmatpush1.xpose.msra.mxu0 0.0
    %3413 = vmatprep.subr.mxu0 0.0
    %3414 = vmatpush1.xpose.msra.mxu0 0.0
    %3415 = vmatprep.subr.mxu0 0.0
    %3416 = vmatpush1.xpose.msra.mxu0 0.0
    %3417 = vmatprep.subr.mxu0 0.0
    %3418 = vmatpush1.xpose.msra.mxu0 0.0
    %3419 = vmatprep.subr.mxu0 0.0
    %3420 = vmatpush1.xpose.msra.mxu0 0.0
    %3421 = vmatprep.subr.mxu0 0.0
    %3422 = vmatpush1.xpose.msra.mxu0 0.0
    %3423 = vmatprep.subr.mxu0 0.0
    %3424 = vmatpush1.xpose.msra.mxu0 0.0
    %3425 = vmatprep.subr.mxu0 0.0
    %3426 = vmatpush1.xpose.msra.mxu0 0.0
    %3427 = vmatprep.subr.mxu0 0.0
    %3428 = vmatpush1.xpose.msra.mxu0 0.0
    %3429 = vmatprep.subr.mxu0 0.0
    %3430 = vmatpush1.xpose.msra.mxu0 0.0
    %3431 = vmatprep.subr.mxu0 0.0
    %3432 = vmatpush1.xpose.msra.mxu0 0.0
    %3433 = vmatprep.subr.mxu0 0.0
    %3434 = vmatpush1.xpose.msra.mxu0 0.0
    %3435 = vmatprep.mubr.f32.mxu0 0.0
    %3436 = vmatmul.mubr.f32.gmra.mrb[0].mxu0 %v3365
    %v3437 = vpop.f32.mrb[0].mxu0
    %v3438 = vadd.f32 0.0, %v3437
    %v3439 = vpop.f32.mrb[0].mxu0
    %3440 = vdwg.mxu0
    %v3441 = vsel %vm426, %v3438, -inf
    %3442 = vmax.xlane.f32.xlu0 %v3441
    %v3443 = vpop.xlane.xlu0 %3442
    %v3444 = vsub.f32 %v3438, %v3443
    %v3445 = vmul.f32 %v3444, 1.442695
    %v3446 = vpow.pop %v3445
    %v3447 = vsel %vm426, %v3446, 0.0
    %3448 = vadd.xlane.f32.xlu0 %v3447
    %v3449 = vpop.xlane.xlu0 %3448
    %v3450 = vrcp.pop %v3449
    %v3451 = vmul.f32 %v3446, %v3450
    %3452 = vrot.lane.b32.xlu0 %v2337, 64
    %v3453 = vpop.permute.xlu0 %3452
    %3454 = vrot.lane.b32.xlu0 %v2342, 64
    %v3455 = vpop.permute.xlu0 %3454
    %v3459 = vsel %vm426, %v3451, 0
    %3461 = vmatprep.subr.mxu0 0.0
    %3462 = vmatpush1.msra.mxu0 %v3453
    %3463 = vmatprep.subr.mxu0 0.0
    %3464 = vmatpush1.msra.mxu0 %v3455
    %3465 = vmatprep.subr.mxu0 0.0
    %3466 = vmatpush1.msra.mxu0 0.0
    %3467 = vmatprep.subr.mxu0 0.0
    %3468 = vmatpush1.msra.mxu0 0.0
    %3469 = vmatprep.subr.mxu0 0.0
    %3470 = vmatpush1.msra.mxu0 0.0
    %3471 = vmatprep.subr.mxu0 0.0
    %3472 = vmatpush1.msra.mxu0 0.0
    %3473 = vmatprep.subr.mxu0 0.0
    %3474 = vmatpush1.msra.mxu0 0.0
    %3475 = vmatprep.subr.mxu0 0.0
    %3476 = vmatpush1.msra.mxu0 0.0
    %3477 = vmatprep.subr.mxu0 0.0
    %3478 = vmatpush1.msra.mxu0 0.0
    %3479 = vmatprep.subr.mxu0 0.0
    %3480 = vmatpush1.msra.mxu0 0.0
    %3481 = vmatprep.subr.mxu0 0.0
    %3482 = vmatpush1.msra.mxu0 0.0
    %3483 = vmatprep.subr.mxu0 0.0
    %3484 = vmatpush1.msra.mxu0 0.0
    %3485 = vmatprep.subr.mxu0 0.0
    %3486 = vmatpush1.msra.mxu0 0.0
    %3487 = vmatprep.subr.mxu0 0.0
    %3488 = vmatpush1.msra.mxu0 0.0
    %3489 = vmatprep.subr.mxu0 0.0
    %3490 = vmatpush1.msra.mxu0 0.0
    %3491 = vmatprep.subr.mxu0 0.0
    %3492 = vmatpush1.msra.mxu0 0.0
    %3493 = vmatprep.subr.mxu0 0.0
    %3494 = vmatpush1.msra.mxu0 0.0
    %3495 = vmatprep.subr.mxu0 0.0
    %3496 = vmatpush1.msra.mxu0 0.0
    %3497 = vmatprep.subr.mxu0 0.0
    %3498 = vmatpush1.msra.mxu0 0.0
    %3499 = vmatprep.subr.mxu0 0.0
    %3500 = vmatpush1.msra.mxu0 0.0
    %3501 = vmatprep.subr.mxu0 0.0
    %3502 = vmatpush1.msra.mxu0 0.0
    %3503 = vmatprep.subr.mxu0 0.0
    %3504 = vmatpush1.msra.mxu0 0.0
    %3505 = vmatprep.subr.mxu0 0.0
    %3506 = vmatpush1.msra.mxu0 0.0
    %3507 = vmatprep.subr.mxu0 0.0
    %3508 = vmatpush1.msra.mxu0 0.0
    %3509 = vmatprep.subr.mxu0 0.0
    %3510 = vmatpush1.msra.mxu0 0.0
    %3511 = vmatprep.subr.mxu0 0.0
    %3512 = vmatpush1.msra.mxu0 0.0
    %3513 = vmatprep.subr.mxu0 0.0
    %3514 = vmatpush1.msra.mxu0 0.0
    %3515 = vmatprep.subr.mxu0 0.0
    %3516 = vmatpush1.msra.mxu0 0.0
    %3517 = vmatprep.subr.mxu0 0.0
    %3518 = vmatpush1.msra.mxu0 0.0
    %3519 = vmatprep.subr.mxu0 0.0
    %3520 = vmatpush1.msra.mxu0 0.0
    %3521 = vmatprep.subr.mxu0 0.0
    %3522 = vmatpush1.msra.mxu0 0.0
    %3523 = vmatprep.subr.mxu0 0.0
    %3524 = vmatpush1.msra.mxu0 0.0
    %3525 = vmatprep.mubr.f32.mxu0 0.0
    %3526 = vmatmul.mubr.f32.gmra.mrb[0].mxu0 %v3459
    %v3527 = vpop.f32.mrb[0].mxu0
    %v3528 = vadd.f32 0.0, %v3527
    %v3529 = vpop.f32.mrb[0].mxu0
    %3530 = vdwg.mxu0
    %v3531 = vmul.f32 %v3528, %v57
    %v3532 = vadd.f32 %v3531, 0.0
    %v3533 = vmul.f32 %v3356, %v62
    %v3535 = vsel %vm89, %v3533, 0
    %3537 = vmatprep.subr.mxu0 0.0
    %3538 = vmatpush1.xpose.msra.mxu0 %v3367
    %3539 = vmatprep.subr.mxu0 0.0
    %3540 = vmatpush1.xpose.msra.mxu0 %v3369
    %3541 = vmatprep.subr.mxu0 0.0
    %3542 = vmatpush1.xpose.msra.mxu0 0.0
    %3543 = vmatprep.subr.mxu0 0.0
    %3544 = vmatpush1.xpose.msra.mxu0 0.0
    %3545 = vmatprep.subr.mxu0 0.0
    %3546 = vmatpush1.xpose.msra.mxu0 0.0
    %3547 = vmatprep.subr.mxu0 0.0
    %3548 = vmatpush1.xpose.msra.mxu0 0.0
    %3549 = vmatprep.subr.mxu0 0.0
    %3550 = vmatpush1.xpose.msra.mxu0 0.0
    %3551 = vmatprep.subr.mxu0 0.0
    %3552 = vmatpush1.xpose.msra.mxu0 0.0
    %3553 = vmatprep.subr.mxu0 0.0
    %3554 = vmatpush1.xpose.msra.mxu0 0.0
    %3555 = vmatprep.subr.mxu0 0.0
    %3556 = vmatpush1.xpose.msra.mxu0 0.0
    %3557 = vmatprep.subr.mxu0 0.0
    %3558 = vmatpush1.xpose.msra.mxu0 0.0
    %3559 = vmatprep.subr.mxu0 0.0
    %3560 = vmatpush1.xpose.msra.mxu0 0.0
    %3561 = vmatprep.subr.mxu0 0.0
    %3562 = vmatpush1.xpose.msra.mxu0 0.0
    %3563 = vmatprep.subr.mxu0 0.0
    %3564 = vmatpush1.xpose.msra.mxu0 0.0
    %3565 = vmatprep.subr.mxu0 0.0
    %3566 = vmatpush1.xpose.msra.mxu0 0.0
    %3567 = vmatprep.subr.mxu0 0.0
    %3568 = vmatpush1.xpose.msra.mxu0 0.0
    %3569 = vmatprep.subr.mxu0 0.0
    %3570 = vmatpush1.xpose.msra.mxu0 0.0
    %3571 = vmatprep.subr.mxu0 0.0
    %3572 = vmatpush1.xpose.msra.mxu0 0.0
    %3573 = vmatprep.subr.mxu0 0.0
    %3574 = vmatpush1.xpose.msra.mxu0 0.0
    %3575 = vmatprep.subr.mxu0 0.0
    %3576 = vmatpush1.xpose.msra.mxu0 0.0
    %3577 = vmatprep.subr.mxu0 0.0
    %3578 = vmatpush1.xpose.msra.mxu0 0.0
    %3579 = vmatprep.subr.mxu0 0.0
    %3580 = vmatpush1.xpose.msra.mxu0 0.0
    %3581 = vmatprep.subr.mxu0 0.0
    %3582 = vmatpush1.xpose.msra.mxu0 0.0
    %3583 = vmatprep.subr.mxu0 0.0
    %3584 = vmatpush1.xpose.msra.mxu0 0.0
    %3585 = vmatprep.subr.mxu0 0.0
    %3586 = vmatpush1.xpose.msra.mxu0 0.0
    %3587 = vmatprep.subr.mxu0 0.0
    %3588 = vmatpush1.xpose.msra.mxu0 0.0
    %3589 = vmatprep.subr.mxu0 0.0
    %3590 = vmatpush1.xpose.msra.mxu0 0.0
    %3591 = vmatprep.subr.mxu0 0.0
    %3592 = vmatpush1.xpose.msra.mxu0 0.0
    %3593 = vmatprep.subr.mxu0 0.0
    %3594 = vmatpush1.xpose.msra.mxu0 0.0
    %3595 = vmatprep.subr.mxu0 0.0
    %3596 = vmatpush1.xpose.msra.mxu0 0.0
    %3597 = vmatprep.subr.mxu0 0.0
    %3598 = vmatpush1.xpose.msra.mxu0 0.0
    %3599 = vmatprep.subr.mxu0 0.0
    %3600 = vmatpush1.xpose.msra.mxu0 0.0
    %3601 = vmatprep.mubr.f32.mxu0 0.0
    %3602 = vmatmul.mubr.f32.gmra.mrb[0].mxu0 %v3535
    %v3603 = vpop.f32.mrb[0].mxu0
    %v3604 = vadd.f32 0.0, %v3603
    %v3605 = vpop.f32.mrb[0].mxu0
    %3606 = vdwg.mxu0
    %v3607 = vsel %vm426, %v3604, -inf
    %3608 = vmax.xlane.f32.xlu0 %v3607
    %v3609 = vpop.xlane.xlu0 %3608
    %v3610 = vsub.f32 %v3604, %v3609
    %v3611 = vmul.f32 %v3610, 1.442695
    %v3612 = vpow.pop %v3611
    %v3613 = vsel %vm426, %v3612, 0.0
    %3614 = vadd.xlane.f32.xlu0 %v3613
    %v3615 = vpop.xlane.xlu0 %3614
    %v3616 = vrcp.pop %v3615
    %v3617 = vmul.f32 %v3612, %v3616
    %v3619 = vsel %vm426, %v3617, 0
    %3621 = vmatprep.subr.mxu0 0.0
    %3622 = vmatpush1.msra.mxu0 %v3453
    %3623 = vmatprep.subr.mxu0 0.0
    %3624 = vmatpush1.msra.mxu0 %v3455
    %3625 = vmatprep.subr.mxu0 0.0
    %3626 = vmatpush1.msra.mxu0 0.0
    %3627 = vmatprep.subr.mxu0 0.0
    %3628 = vmatpush1.msra.mxu0 0.0
    %3629 = vmatprep.subr.mxu0 0.0
    %3630 = vmatpush1.msra.mxu0 0.0
    %3631 = vmatprep.subr.mxu0 0.0
    %3632 = vmatpush1.msra.mxu0 0.0
    %3633 = vmatprep.subr.mxu0 0.0
    %3634 = vmatpush1.msra.mxu0 0.0
    %3635 = vmatprep.subr.mxu0 0.0
    %3636 = vmatpush1.msra.mxu0 0.0
    %3637 = vmatprep.subr.mxu0 0.0
    %3638 = vmatpush1.msra.mxu0 0.0
    %3639 = vmatprep.subr.mxu0 0.0
    %3640 = vmatpush1.msra.mxu0 0.0
    %3641 = vmatprep.subr.mxu0 0.0
    %3642 = vmatpush1.msra.mxu0 0.0
    %3643 = vmatprep.subr.mxu0 0.0
    %3644 = vmatpush1.msra.mxu0 0.0
    %3645 = vmatprep.subr.mxu0 0.0
    %3646 = vmatpush1.msra.mxu0 0.0
    %3647 = vmatprep.subr.mxu0 0.0
    %3648 = vmatpush1.msra.mxu0 0.0
    %3649 = vmatprep.subr.mxu0 0.0
    %3650 = vmatpush1.msra.mxu0 0.0
    %3651 = vmatprep.subr.mxu0 0.0
    %3652 = vmatpush1.msra.mxu0 0.0
    %3653 = vmatprep.subr.mxu0 0.0
    %3654 = vmatpush1.msra.mxu0 0.0
    %3655 = vmatprep.subr.mxu0 0.0
    %3656 = vmatpush1.msra.mxu0 0.0
    %3657 = vmatprep.subr.mxu0 0.0
    %3658 = vmatpush1.msra.mxu0 0.0
    %3659 = vmatprep.subr.mxu0 0.0
    %3660 = vmatpush1.msra.mxu0 0.0
    %3661 = vmatprep.subr.mxu0 0.0
    %3662 = vmatpush1.msra.mxu0 0.0
    %3663 = vmatprep.subr.mxu0 0.0
    %3664 = vmatpush1.msra.mxu0 0.0
    %3665 = vmatprep.subr.mxu0 0.0
    %3666 = vmatpush1.msra.mxu0 0.0
    %3667 = vmatprep.subr.mxu0 0.0
    %3668 = vmatpush1.msra.mxu0 0.0
    %3669 = vmatprep.subr.mxu0 0.0
    %3670 = vmatpush1.msra.mxu0 0.0
    %3671 = vmatprep.subr.mxu0 0.0
    %3672 = vmatpush1.msra.mxu0 0.0
    %3673 = vmatprep.subr.mxu0 0.0
    %3674 = vmatpush1.msra.mxu0 0.0
    %3675 = vmatprep.subr.mxu0 0.0
    %3676 = vmatpush1.msra.mxu0 0.0
    %3677 = vmatprep.subr.mxu0 0.0
    %3678 = vmatpush1.msra.mxu0 0.0
    %3679 = vmatprep.subr.mxu0 0.0
    %3680 = vmatpush1.msra.mxu0 0.0
    %3681 = vmatprep.subr.mxu0 0.0
    %3682 = vmatpush1.msra.mxu0 0.0
    %3683 = vmatprep.subr.mxu0 0.0
    %3684 = vmatpush1.msra.mxu0 0.0
    %3685 = vmatprep.mubr.f32.mxu0 0.0
    %3686 = vmatmul.mubr.f32.gmra.mrb[0].mxu0 %v3619
    %v3687 = vpop.f32.mrb[0].mxu0
    %v3688 = vadd.f32 0.0, %v3687
    %v3689 = vpop.f32.mrb[0].mxu0
    %3690 = vdwg.mxu0
    %v3691 = vmul.f32 %v3688, %v62
    %v3692 = vadd.f32 %v3532, %v3691
    %s3693 = scalar_lea.vmem %s8, 32
    %v3694 = vld [vmem:[%s3693] sm:$0xff]
    %v3695 = vld [vmem:[%s3693 + $0x8] sm:$0xff]
    %v3696 = vld [vmem:[%s3693 + $0x10] sm:$0xff]
    %v3697 = vld [vmem:[%s3693 + $0x18] sm:$0xff]
    %v3699 = vsel %vm89, %v2681, 0
    %v3702 = vsel %vm89, %v3018, 0
    %v3705 = vsel %vm89, %v3355, 0
    %v3708 = vsel %vm89, %v3692, 0
    %3710 = vmatprep.subr.mxu0 0.0
    %3711 = vmatpush1.msra.mxu0 %v3694
    %3712 = vmatprep.subr.mxu0 0.0
    %3713 = vmatpush1.msra.mxu0 %v3695
    %3714 = vmatprep.subr.mxu0 0.0
    %3715 = vmatpush1.msra.mxu0 %v3696
    %3716 = vmatprep.subr.mxu0 0.0
    %3717 = vmatpush1.msra.mxu0 %v3697
    %3718 = vmatprep.subr.mxu0 0.0
    %3719 = vmatpush1.msra.mxu0 0.0
    %3720 = vmatprep.subr.mxu0 0.0
    %3721 = vmatpush1.msra.mxu0 0.0
    %3722 = vmatprep.subr.mxu0 0.0
    %3723 = vmatpush1.msra.mxu0 0.0
    %3724 = vmatprep.subr.mxu0 0.0
    %3725 = vmatpush1.msra.mxu0 0.0
    %3726 = vmatprep.subr.mxu0 0.0
    %3727 = vmatpush1.msra.mxu0 0.0
    %3728 = vmatprep.subr.mxu0 0.0
    %3729 = vmatpush1.msra.mxu0 0.0
    %3730 = vmatprep.subr.mxu0 0.0
    %3731 = vmatpush1.msra.mxu0 0.0
    %3732 = vmatprep.subr.mxu0 0.0
    %3733 = vmatpush1.msra.mxu0 0.0
    %3734 = vmatprep.subr.mxu0 0.0
    %3735 = vmatpush1.msra.mxu0 0.0
    %3736 = vmatprep.subr.mxu0 0.0
    %3737 = vmatpush1.msra.mxu0 0.0
    %3738 = vmatprep.subr.mxu0 0.0
    %3739 = vmatpush1.msra.mxu0 0.0
    %3740 = vmatprep.subr.mxu0 0.0
    %3741 = vmatpush1.msra.mxu0 0.0
    %3742 = vmatprep.subr.mxu0 0.0
    %3743 = vmatpush1.msra.mxu0 0.0
    %3744 = vmatprep.subr.mxu0 0.0
    %3745 = vmatpush1.msra.mxu0 0.0
    %3746 = vmatprep.subr.mxu0 0.0
    %3747 = vmatpush1.msra.mxu0 0.0
    %3748 = vmatprep.subr.mxu0 0.0
    %3749 = vmatpush1.msra.mxu0 0.0
    %3750 = vmatprep.subr.mxu0 0.0
    %3751 = vmatpush1.msra.mxu0 0.0
    %3752 = vmatprep.subr.mxu0 0.0
    %3753 = vmatpush1.msra.mxu0 0.0
    %3754 = vmatprep.subr.mxu0 0.0
    %3755 = vmatpush1.msra.mxu0 0.0
    %3756 = vmatprep.subr.mxu0 0.0
    %3757 = vmatpush1.msra.mxu0 0.0
    %3758 = vmatprep.subr.mxu0 0.0
    %3759 = vmatpush1.msra.mxu0 0.0
    %3760 = vmatprep.subr.mxu0 0.0
    %3761 = vmatpush1.msra.mxu0 0.0
    %3762 = vmatprep.subr.mxu0 0.0
    %3763 = vmatpush1.msra.mxu0 0.0
    %3764 = vmatprep.subr.mxu0 0.0
    %3765 = vmatpush1.msra.mxu0 0.0
    %3766 = vmatprep.subr.mxu0 0.0
    %3767 = vmatpush1.msra.mxu0 0.0
    %3768 = vmatprep.subr.mxu0 0.0
    %3769 = vmatpush1.msra.mxu0 0.0
    %3770 = vmatprep.subr.mxu0 0.0
    %3771 = vmatpush1.msra.mxu0 0.0
    %3772 = vmatprep.subr.mxu0 0.0
    %3773 = vmatpush1.msra.mxu0 0.0
    %3774 = vmatprep.mubr.f32.mxu0 0.0
    %3775 = vmatmul.mubr.f32.gmra.mrb[0].mxu0 %v3699
    %v3776 = vpop.f32.mrb[0].mxu0
    %v3777 = vadd.f32 0.0, %v3776
    %v3778 = vpop.f32.mrb[0].mxu0
    %3779 = vmatprep.mubr.f32.mxu0 0.0
    %3780 = vmatmul.mubr.f32.gmra.mrb[0].mxu0 %v3702
    %v3781 = vpop.f32.mrb[0].mxu0
    %v3782 = vadd.f32 0.0, %v3781
    %v3783 = vpop.f32.mrb[0].mxu0
    %3784 = vmatprep.mubr.f32.mxu0 0.0
    %3785 = vmatmul.mubr.f32.gmra.mrb[0].mxu0 %v3705
    %v3786 = vpop.f32.mrb[0].mxu0
    %v3787 = vadd.f32 0.0, %v3786
    %v3788 = vpop.f32.mrb[0].mxu0
    %3789 = vmatprep.mubr.f32.mxu0 0.0
    %3790 = vmatmul.mubr.f32.gmra.mrb[0].mxu0 %v3708
    %v3791 = vpop.f32.mrb[0].mxu0
    %v3792 = vadd.f32 0.0, %v3791
    %v3793 = vpop.f32.mrb[0].mxu0
    %3794 = vdwg.mxu0
    %v3795 = vadd.f32 %v2091, %v3777
    %v3796 = vadd.f32 %v2092, %v3782
    %v3797 = vadd.f32 %v2093, %v3787
    %v3798 = vadd.f32 %v2094, %v3792
    %s3799 = scalar_lea.vmem %s9, 1
    %v3800 = vld [vmem:[%s3799] sm:$0x1]
    %s3801 = scalar_lea.vmem %s10, 1
    %v3802 = vld [vmem:[%s3801] sm:$0x1]
    %v3803 = vsel %vm89, %v3795, 0.0
    %3804 = vadd.xlane.f32.xlu0 %v3803
    %v3805 = vpop.xlane.xlu0 %3804
    %v3806 = vsel %vm89, %v3796, 0.0
    %3807 = vadd.xlane.f32.xlu0 %v3806
    %v3808 = vpop.xlane.xlu0 %3807
    %v3809 = vsel %vm89, %v3797, 0.0
    %3810 = vadd.xlane.f32.xlu0 %v3809
    %v3811 = vpop.xlane.xlu0 %3810
    %v3812 = vsel %vm89, %v3798, 0.0
    %3813 = vadd.xlane.f32.xlu0 %v3812
    %v3814 = vpop.xlane.xlu0 %3813
    %v3815 = vmul.f32 %v3805, %v102
    %v3816 = vmul.f32 %v3808, %v102
    %v3817 = vmul.f32 %v3811, %v102
    %v3818 = vmul.f32 %v3814, %v102
    %v3819 = vsub.f32 %v3795, %v3815
    %v3820 = vsub.f32 %v3796, %v3816
    %v3821 = vsub.f32 %v3797, %v3817
    %v3822 = vsub.f32 %v3798, %v3818
    %v3823 = vmul.f32 %v3819, %v3819
    %v3824 = vmul.f32 %v3820, %v3820
    %v3825 = vmul.f32 %v3821, %v3821
    %v3826 = vmul.f32 %v3822, %v3822
    %v3827 = vsel %vm89, %v3823, 0.0
    %3828 = vadd.xlane.f32.xlu0 %v3827
    %v3829 = vpop.xlane.xlu0 %3828
    %v3830 = vsel %vm89, %v3824, 0.0
    %3831 = vadd.xlane.f32.xlu0 %v3830
    %v3832 = vpop.xlane.xlu0 %3831
    %v3833 = vsel %vm89, %v3825, 0.0
    %3834 = vadd.xlane.f32.xlu0 %v3833
    %v3835 = vpop.xlane.xlu0 %3834
    %v3836 = vsel %vm89, %v3826, 0.0
    %3837 = vadd.xlane.f32.xlu0 %v3836
    %v3838 = vpop.xlane.xlu0 %3837
    %v3839 = vmul.f32 %v3829, %v102
    %v3840 = vmul.f32 %v3832, %v102
    %v3841 = vmul.f32 %v3835, %v102
    %v3842 = vmul.f32 %v3838, %v102
    %v3843 = vadd.f32 %v3839, 1e-05
    %v3844 = vadd.f32 %v3840, 1e-05
    %v3845 = vadd.f32 %v3841, 1e-05
    %v3846 = vadd.f32 %v3842, 1e-05
    %v3847 = vrsqrt.pop %v3843
    %v3848 = vrsqrt.pop %v3844
    %v3849 = vrsqrt.pop %v3845
    %v3850 = vrsqrt.pop %v3846
    %v3851 = vmul.f32 %v3819, %v3847
    %v3852 = vmul.f32 %v3820, %v3848
    %v3853 = vmul.f32 %v3821, %v3849
    %v3854 = vmul.f32 %v3822, %v3850
    %v3856 = vlaneseq
    %v3857 = vshrl.u32 %v3856, 7
    %v3858 = vsub.s32 0, %v3857
    %v3859 = vrot.slane %v3800, %v3858
    %v3861 = vmul.f32 %v3851, %v3859
    %v3862 = vmul.f32 %v3852, %v3859
    %v3863 = vmul.f32 %v3853, %v3859
    %v3864 = vmul.f32 %v3854, %v3859
    %v3866 = vlaneseq
    %v3867 = vshrl.u32 %v3866, 7
    %v3868 = vsub.s32 0, %v3867
    %v3869 = vrot.slane %v3802, %v3868
    %v3871 = vadd.f32 %v3861, %v3869
    %v3872 = vadd.f32 %v3862, %v3869
    %v3873 = vadd.f32 %v3863, %v3869
    %v3874 = vadd.f32 %v3864, %v3869
    %s3875 = scalar_lea.vmem %s11, 32
    %v3876 = vld [vmem:[%s3875] sm:$0xff]
    %v3877 = vld [vmem:[%s3875 + $0x8] sm:$0xff]
    %v3878 = vld [vmem:[%s3875 + $0x10] sm:$0xff]
    %v3879 = vld [vmem:[%s3875 + $0x18] sm:$0xff]
    %v3881 = vsel %vm89, %v3871, 0
    %v3884 = vsel %vm89, %v3872, 0
    %v3887 = vsel %vm89, %v3873, 0
    %v3890 = vsel %vm89, %v3874, 0
    %3892 = vmatprep.subr.mxu0 0.0
    %3893 = vmatpush1.msra.mxu0 %v3876
    %3894 = vmatprep.subr.mxu0 0.0
    %3895 = vmatpush1.msra.mxu0 %v3877
    %3896 = vmatprep.subr.mxu0 0.0
    %3897 = vmatpush1.msra.mxu0 %v3878
    %3898 = vmatprep.subr.mxu0 0.0
    %3899 = vmatpush1.msra.mxu0 %v3879
    %3900 = vmatprep.subr.mxu0 0.0
    %3901 = vmatpush1.msra.mxu0 0.0
    %3902 = vmatprep.subr.mxu0 0.0
    %3903 = vmatpush1.msra.mxu0 0.0
    %3904 = vmatprep.subr.mxu0 0.0
    %3905 = vmatpush1.msra.mxu0 0.0
    %3906 = vmatprep.subr.mxu0 0.0
    %3907 = vmatpush1.msra.mxu0 0.0
    %3908 = vmatprep.subr.mxu0 0.0
    %3909 = vmatpush1.msra.mxu0 0.0
    %3910 = vmatprep.subr.mxu0 0.0
    %3911 = vmatpush1.msra.mxu0 0.0
    %3912 = vmatprep.subr.mxu0 0.0
    %3913 = vmatpush1.msra.mxu0 0.0
    %3914 = vmatprep.subr.mxu0 0.0
    %3915 = vmatpush1.msra.mxu0 0.0
    %3916 = vmatprep.subr.mxu0 0.0
    %3917 = vmatpush1.msra.mxu0 0.0
    %3918 = vmatprep.subr.mxu0 0.0
    %3919 = vmatpush1.msra.mxu0 0.0
    %3920 = vmatprep.subr.mxu0 0.0
    %3921 = vmatpush1.msra.mxu0 0.0
    %3922 = vmatprep.subr.mxu0 0.0
    %3923 = vmatpush1.msra.mxu0 0.0
    %3924 = vmatprep.subr.mxu0 0.0
    %3925 = vmatpush1.msra.mxu0 0.0
    %3926 = vmatprep.subr.mxu0 0.0
    %3927 = vmatpush1.msra.mxu0 0.0
    %3928 = vmatprep.subr.mxu0 0.0
    %3929 = vmatpush1.msra.mxu0 0.0
    %3930 = vmatprep.subr.mxu0 0.0
    %3931 = vmatpush1.msra.mxu0 0.0
    %3932 = vmatprep.subr.mxu0 0.0
    %3933 = vmatpush1.msra.mxu0 0.0
    %3934 = vmatprep.subr.mxu0 0.0
    %3935 = vmatpush1.msra.mxu0 0.0
    %3936 = vmatprep.subr.mxu0 0.0
    %3937 = vmatpush1.msra.mxu0 0.0
    %3938 = vmatprep.subr.mxu0 0.0
    %3939 = vmatpush1.msra.mxu0 0.0
    %3940 = vmatprep.subr.mxu0 0.0
    %3941 = vmatpush1.msra.mxu0 0.0
    %3942 = vmatprep.subr.mxu0 0.0
    %3943 = vmatpush1.msra.mxu0 0.0
    %3944 = vmatprep.subr.mxu0 0.0
    %3945 = vmatpush1.msra.mxu0 0.0
    %3946 = vmatprep.subr.mxu0 0.0
    %3947 = vmatpush1.msra.mxu0 0.0
    %3948 = vmatprep.subr.mxu0 0.0
    %3949 = vmatpush1.msra.mxu0 0.0
    %3950 = vmatprep.subr.mxu0 0.0
    %3951 = vmatpush1.msra.mxu0 0.0
    %3952 = vmatprep.subr.mxu0 0.0
    %3953 = vmatpush1.msra.mxu0 0.0
    %3954 = vmatprep.subr.mxu0 0.0
    %3955 = vmatpush1.msra.mxu0 0.0
    %3956 = vmatprep.mubr.f32.mxu0 0.0
    %3957 = vmatmul.mubr.f32.gmra.mrb[0].mxu0 %v3881
    %v3958 = vpop.f32.mrb[0].mxu0
    %v3959 = vadd.f32 0.0, %v3958
    %v3960 = vpop.f32.mrb[0].mxu0
    %3961 = vmatprep.mubr.f32.mxu0 0.0
    %3962 = vmatmul.mubr.f32.gmra.mrb[0].mxu0 %v3884
    %v3963 = vpop.f32.mrb[0].mxu0
    %v3964 = vadd.f32 0.0, %v3963
    %v3965 = vpop.f32.mrb[0].mxu0
    %3966 = vmatprep.mubr.f32.mxu0 0.0
    %3967 = vmatmul.mubr.f32.gmra.mrb[0].mxu0 %v3887
    %v3968 = vpop.f32.mrb[0].mxu0
    %v3969 = vadd.f32 0.0, %v3968
    %v3970 = vpop.f32.mrb[0].mxu0
    %3971 = vmatprep.mubr.f32.mxu0 0.0
    %3972 = vmatmul.mubr.f32.gmra.mrb[0].mxu0 %v3890
    %v3973 = vpop.f32.mrb[0].mxu0
    %v3974 = vadd.f32 0.0, %v3973
    %v3975 = vpop.f32.mrb[0].mxu0
    %3976 = vdwg.mxu0
    %v3977 = vmul.f32 %v3959, 0.5
    %v3978 = vmul.f32 %v3964, 0.5
    %v3979 = vmul.f32 %v3969, 0.5
    %v3980 = vmul.f32 %v3974, 0.5
    %v3981 = vmul.f32 %v3959, 0.70710677
    %v3982 = vmul.f32 %v3964, 0.70710677
    %v3983 = vmul.f32 %v3969, 0.70710677
    %v3984 = vmul.f32 %v3974, 0.70710677
    %v3985 = verf.f32.pop %v3981
    %v3986 = verf.f32.pop %v3982
    %v3987 = verf.f32.pop %v3983
    %v3988 = verf.f32.pop %v3984
    %v3989 = vadd.f32 %v3985, 1.0
    %v3990 = vadd.f32 %v3986, 1.0
    %v3991 = vadd.f32 %v3987, 1.0
    %v3992 = vadd.f32 %v3988, 1.0
    %v3993 = vmul.f32 %v3977, %v3989
    %v3994 = vmul.f32 %v3978, %v3990
    %v3995 = vmul.f32 %v3979, %v3991
    %v3996 = vmul.f32 %v3980, %v3992
    %s3997 = scalar_lea.vmem %s12, 128
    %v3998 = vld [vmem:[%s3997] sm:$0xff]
    %v3999 = vld [vmem:[%s3997 + $0x8] sm:$0xff]
    %v4000 = vld [vmem:[%s3997 + $0x10] sm:$0xff]
    %v4001 = vld [vmem:[%s3997 + $0x18] sm:$0xff]
    %v4002 = vld [vmem:[%s3997 + $0x20] sm:$0xff]
    %v4003 = vld [vmem:[%s3997 + $0x28] sm:$0xff]
    %v4004 = vld [vmem:[%s3997 + $0x30] sm:$0xff]
    %v4005 = vld [vmem:[%s3997 + $0x38] sm:$0xff]
    %v4006 = vld [vmem:[%s3997 + $0x40] sm:$0xff]
    %v4007 = vld [vmem:[%s3997 + $0x48] sm:$0xff]
    %v4008 = vld [vmem:[%s3997 + $0x50] sm:$0xff]
    %v4009 = vld [vmem:[%s3997 + $0x58] sm:$0xff]
    %v4010 = vld [vmem:[%s3997 + $0x60] sm:$0xff]
    %v4011 = vld [vmem:[%s3997 + $0x68] sm:$0xff]
    %v4012 = vld [vmem:[%s3997 + $0x70] sm:$0xff]
    %v4013 = vld [vmem:[%s3997 + $0x78] sm:$0xff]
    %4014 = vmatprep.subr.mxu0 0.0
    %4015 = vmatpush1.msra.mxu0 %v3998
    %4016 = vmatprep.subr.mxu0 0.0
    %4017 = vmatpush1.msra.mxu0 %v3999
    %4018 = vmatprep.subr.mxu0 0.0
    %4019 = vmatpush1.msra.mxu0 %v4000
    %4020 = vmatprep.subr.mxu0 0.0
    %4021 = vmatpush1.msra.mxu0 %v4001
    %4022 = vmatprep.subr.mxu0 0.0
    %4023 = vmatpush1.msra.mxu0 %v4002
    %4024 = vmatprep.subr.mxu0 0.0
    %4025 = vmatpush1.msra.mxu0 %v4003
    %4026 = vmatprep.subr.mxu0 0.0
    %4027 = vmatpush1.msra.mxu0 %v4004
    %4028 = vmatprep.subr.mxu0 0.0
    %4029 = vmatpush1.msra.mxu0 %v4005
    %4030 = vmatprep.subr.mxu0 0.0
    %4031 = vmatpush1.msra.mxu0 %v4006
    %4032 = vmatprep.subr.mxu0 0.0
    %4033 = vmatpush1.msra.mxu0 %v4007
    %4034 = vmatprep.subr.mxu0 0.0
    %4035 = vmatpush1.msra.mxu0 %v4008
    %4036 = vmatprep.subr.mxu0 0.0
    %4037 = vmatpush1.msra.mxu0 %v4009
    %4038 = vmatprep.subr.mxu0 0.0
    %4039 = vmatpush1.msra.mxu0 %v4010
    %4040 = vmatprep.subr.mxu0 0.0
    %4041 = vmatpush1.msra.mxu0 %v4011
    %4042 = vmatprep.subr.mxu0 0.0
    %4043 = vmatpush1.msra.mxu0 %v4012
    %4044 = vmatprep.subr.mxu0 0.0
    %4045 = vmatpush1.msra.mxu0 %v4013
    %4046 = vmatprep.subr.mxu0 0.0
    %4047 = vmatpush1.msra.mxu0 0.0
    %4048 = vmatprep.subr.mxu0 0.0
    %4049 = vmatpush1.msra.mxu0 0.0
    %4050 = vmatprep.subr.mxu0 0.0
    %4051 = vmatpush1.msra.mxu0 0.0
    %4052 = vmatprep.subr.mxu0 0.0
    %4053 = vmatpush1.msra.mxu0 0.0
    %4054 = vmatprep.subr.mxu0 0.0
    %4055 = vmatpush1.msra.mxu0 0.0
    %4056 = vmatprep.subr.mxu0 0.0
    %4057 = vmatpush1.msra.mxu0 0.0
    %4058 = vmatprep.subr.mxu0 0.0
    %4059 = vmatpush1.msra.mxu0 0.0
    %4060 = vmatprep.subr.mxu0 0.0
    %4061 = vmatpush1.msra.mxu0 0.0
    %4062 = vmatprep.subr.mxu0 0.0
    %4063 = vmatpush1.msra.mxu0 0.0
    %4064 = vmatprep.subr.mxu0 0.0
    %4065 = vmatpush1.msra.mxu0 0.0
    %4066 = vmatprep.subr.mxu0 0.0
    %4067 = vmatpush1.msra.mxu0 0.0
    %4068 = vmatprep.subr.mxu0 0.0
    %4069 = vmatpush1.msra.mxu0 0.0
    %4070 = vmatprep.subr.mxu0 0.0
    %4071 = vmatpush1.msra.mxu0 0.0
    %4072 = vmatprep.subr.mxu0 0.0
    %4073 = vmatpush1.msra.mxu0 0.0
    %4074 = vmatprep.subr.mxu0 0.0
    %4075 = vmatpush1.msra.mxu0 0.0
    %4076 = vmatprep.subr.mxu0 0.0
    %4077 = vmatpush1.msra.mxu0 0.0
    %4078 = vmatprep.mubr.f32.mxu0 0.0
    %4079 = vmatmul.mubr.f32.gmra.mrb[0].mxu0 %v3993
    %v4080 = vpop.f32.mrb[0].mxu0
    %v4081 = vadd.f32 0.0, %v4080
    %v4082 = vpop.f32.mrb[0].mxu0
    %4083 = vmatprep.mubr.f32.mxu0 0.0
    %4084 = vmatmul.mubr.f32.gmra.mrb[0].mxu0 %v3994
    %v4085 = vpop.f32.mrb[0].mxu0
    %v4086 = vadd.f32 0.0, %v4085
    %v4087 = vpop.f32.mrb[0].mxu0
    %4088 = vmatprep.mubr.f32.mxu0 0.0
    %4089 = vmatmul.mubr.f32.gmra.mrb[0].mxu0 %v3995
    %v4090 = vpop.f32.mrb[0].mxu0
    %v4091 = vadd.f32 0.0, %v4090
    %v4092 = vpop.f32.mrb[0].mxu0
    %4093 = vmatprep.mubr.f32.mxu0 0.0
    %4094 = vmatmul.mubr.f32.gmra.mrb[0].mxu0 %v3996
    %v4095 = vpop.f32.mrb[0].mxu0
    %v4096 = vadd.f32 0.0, %v4095
    %v4097 = vpop.f32.mrb[0].mxu0
    %4098 = vdwg.mxu0
    %v4099 = vadd.f32 %v3795, %v4081
    %v4100 = vadd.f32 %v3796, %v4086
    %v4101 = vadd.f32 %v3797, %v4091
    %v4102 = vadd.f32 %v3798, %v4096
    %v4103 = vld [vmem:[%s13] sm:$0x1]
    %v4104 = vld [vmem:[%s14] sm:$0x1]
    %v4105 = vsel %vm89, %v4099, 0.0
    %4106 = vadd.xlane.f32.xlu0 %v4105
    %v4107 = vpop.xlane.xlu0 %4106
    %v4108 = vsel %vm89, %v4100, 0.0
    %4109 = vadd.xlane.f32.xlu0 %v4108
    %v4110 = vpop.xlane.xlu0 %4109
    %v4111 = vsel %vm89, %v4101, 0.0
    %4112 = vadd.xlane.f32.xlu0 %v4111
    %v4113 = vpop.xlane.xlu0 %4112
    %v4114 = vsel %vm89, %v4102, 0.0
    %4115 = vadd.xlane.f32.xlu0 %v4114
    %v4116 = vpop.xlane.xlu0 %4115
    %v4117 = vmul.f32 %v4107, %v102
    %v4118 = vmul.f32 %v4110, %v102
    %v4119 = vmul.f32 %v4113, %v102
    %v4120 = vmul.f32 %v4116, %v102
    %v4121 = vsub.f32 %v4099, %v4117
    %v4122 = vsub.f32 %v4100, %v4118
    %v4123 = vsub.f32 %v4101, %v4119
    %v4124 = vsub.f32 %v4102, %v4120
    %v4125 = vmul.f32 %v4121, %v4121
    %v4126 = vmul.f32 %v4122, %v4122
    %v4127 = vmul.f32 %v4123, %v4123
    %v4128 = vmul.f32 %v4124, %v4124
    %v4129 = vsel %vm89, %v4125, 0.0
    %4130 = vadd.xlane.f32.xlu0 %v4129
    %v4131 = vpop.xlane.xlu0 %4130
    %v4132 = vsel %vm89, %v4126, 0.0
    %4133 = vadd.xlane.f32.xlu0 %v4132
    %v4134 = vpop.xlane.xlu0 %4133
    %v4135 = vsel %vm89, %v4127, 0.0
    %4136 = vadd.xlane.f32.xlu0 %v4135
    %v4137 = vpop.xlane.xlu0 %4136
    %v4138 = vsel %vm89, %v4128, 0.0
    %4139 = vadd.xlane.f32.xlu0 %v4138
    %v4140 = vpop.xlane.xlu0 %4139
    %v4141 = vmul.f32 %v4131, %v102
    %v4142 = vmul.f32 %v4134, %v102
    %v4143 = vmul.f32 %v4137, %v102
    %v4144 = vmul.f32 %v4140, %v102
    %v4145 = vadd.f32 %v4141, 1e-05
    %v4146 = vadd.f32 %v4142, 1e-05
    %v4147 = vadd.f32 %v4143, 1e-05
    %v4148 = vadd.f32 %v4144, 1e-05
    %v4149 = vrsqrt.pop %v4145
    %v4150 = vrsqrt.pop %v4146
    %v4151 = vrsqrt.pop %v4147
    %v4152 = vrsqrt.pop %v4148
    %v4153 = vmul.f32 %v4121, %v4149
    %v4154 = vmul.f32 %v4122, %v4150
    %v4155 = vmul.f32 %v4123, %v4151
    %v4156 = vmul.f32 %v4124, %v4152
    %v4158 = vlaneseq
    %v4159 = vshrl.u32 %v4158, 7
    %v4160 = vsub.s32 0, %v4159
    %v4161 = vrot.slane %v4103, %v4160
    %v4163 = vmul.f32 %v4153, %v4161
    %v4164 = vmul.f32 %v4154, %v4161
    %v4165 = vmul.f32 %v4155, %v4161
    %v4166 = vmul.f32 %v4156, %v4161
    %v4168 = vlaneseq
    %v4169 = vshrl.u32 %v4168, 7
    %v4170 = vsub.s32 0, %v4169
    %v4171 = vrot.slane %v4104, %v4170
    %v4173 = vadd.f32 %v4163, %v4171
    %v4174 = vadd.f32 %v4164, %v4171
    %v4175 = vadd.f32 %v4165, %v4171
    %v4176 = vadd.f32 %v4166, %v4171
    %4177 = vst.msk [vmem:[#allocation3] sm:$0xff] %vm89, %v4173
    %4178 = vst.msk [vmem:[#allocation3 + $0x8] sm:$0xff] %vm89, %v4174
    %4179 = vst.msk [vmem:[#allocation3 + $0x10] sm:$0xff] %vm89, %v4175
    %4180 = vst.msk [vmem:[#allocation3 + $0x18] sm:$0xff] %vm89, %v4176
    // Predicated region
    $region62: #{augmentation_resampler.1} parent=1 // pred_check
      _
    $region63: #{augmentation_resampler.1} parent=1 // pred_check_branch
      %4182 = sbr.rel (0) target = $region65
    $region64: #{augmentation_resampler.1} parent=1 // pred_region
      %s4184 = ssub.s32 512, 512
      %4185 = vsyncadd [#allocation4], %s4184
      %s4186 = sshll.u32 [#allocation3], 4
      %s4187 = int_to_ptr.vmem [resolvable:$true] %s4186
      %4192 = dma.vmem_to_hbm [thread:$0]  %s4187, 512, %s15, [#allocation4], 128, 128, 8
    $region65: #{augmentation_resampler.1} parent=1 // pred_fallthru
      _
    // Predicated region
    $region66: #{augmentation_resampler.1} parent=1 // pred_check
      _
    $region67: #{augmentation_resampler.1} parent=1 // pred_check_branch
      %4194 = sbr.rel (0) target = $region69
    $region68: #{augmentation_resampler.1} parent=1 // pred_region
      %4195 = dma.done [#allocation4], 512
    $region69: #{augmentation_resampler.1} parent=1 // pred_fallthru
      _
    %4196 = vsyncpa [#allocation4], 1

</llo_original>
